<compile_context>
chip_gen: v6e
topology: v6e:2x2x1
jax: 0.10.0
libtpu: 0.0.40
codegen_flags: <defaults>
</compile_context>

<pallas_src>
import functools

import jax
import jax.numpy as jnp
from jax import lax
from jax.experimental import pallas as pl
from jax.experimental.pallas import tpu as pltpu

NEG_SLOPE = 0.33


def _leaky(x):
    # 0 < slope < 1  =>  LeakyReLU(x) == max(x, slope * x).
    return jnp.maximum(x, NEG_SLOPE * x)


def _round_up(v, m):
    return ((v + m - 1) // m) * m


# -----------------------------------------------------------------------------
# Fused conv(3x3, valid) + bias + LeakyReLU + MaxPool2d(2) block.
# -----------------------------------------------------------------------------
def conv_pool_kernel(patches_ref, w_ref, b_ref, o_ref, *, ppad):
    # patches_ref: (1, K, 4*Ppad) bf16 -- 4 pool offsets concatenated on lanes
    # w_ref:       (Cout, K)      bf16
    # b_ref:       (Cout, 1)      f32
    # o_ref:       (1, Cout, Ppad) f32 (lane-dense, Ppad % 128 == 0)
    y = jnp.dot(w_ref[...], patches_ref[0],
                preferred_element_type=jnp.float32)            # (Cout, 4*Ppad)
    m = jnp.maximum(
        jnp.maximum(y[:, 0 * ppad:1 * ppad], y[:, 1 * ppad:2 * ppad]),
        jnp.maximum(y[:, 2 * ppad:3 * ppad], y[:, 3 * ppad:4 * ppad]))
    o_ref[0] = _leaky(m + b_ref[...]).astype(o_ref.dtype)


def make_pool_patches(x, ppad):
    # x: (N, C, H, W) f32 -> (N, C*9, 4*Ppad) bf16.  For each 2x2-pool offset
    # (a,b) the stride-2 3x3 im2col patches (lane index = pooled-pixel index,
    # zero padded to Ppad), concatenated on the lane axis.  All layout plumbing
    # happens here in XLA, not inside the kernel.
    n, c, h, w = x.shape
    hp, wp = (h - 2) // 2, (w - 2) // 2
    p = hp * wp
    groups = []
    for a in range(2):
        for b in range(2):
            pt = lax.conv_general_dilated_patches(
                x[:, :, a:, b:], filter_shape=(3, 3), window_strides=(2, 2),
                padding="VALID", dimension_numbers=("NCHW", "OIHW", "NCHW"))
            # (N, C*9, hp, wp); feature dim ordered (channel, kh, kw) which
            # matches w_conv.reshape(Cout, C*9).
            pt = pt.reshape(n, c * 9, p)
            groups.append(jnp.pad(pt, ((0, 0), (0, 0), (0, ppad - p))))
    return jnp.concatenate(groups, axis=-1).astype(jnp.bfloat16)


def conv_pool_block(x, w_conv, b_conv):
    # x: (N, C, H, W) f32 -> ((N, Cout, Ppad) f32, (Hp, Wp)); the true pooled
    # pixels live in [:, :, :Hp*Wp], the padded tail is finite filler.
    n, c, h, w = x.shape
    cout = w_conv.shape[0]
    hp, wp = (h - 2) // 2, (w - 2) // 2
    p = hp * wp
    ppad = _round_up(p, 128)
    k = c * 9

    patches = make_pool_patches(x, ppad)                       # (N, K, 4*Ppad) bf16
    w_flat = w_conv.reshape(cout, k).astype(jnp.bfloat16)      # (Cout, K)
    b_col = b_conv.reshape(cout, 1)                            # (Cout, 1) f32

    out = pl.pallas_call(
        functools.partial(conv_pool_kernel, ppad=ppad),
        out_shape=jax.ShapeDtypeStruct((n, cout, ppad), jnp.float32),
        grid=(n,),
        in_specs=[
            pl.BlockSpec((1, k, 4 * ppad), lambda i: (i, 0, 0)),
            pl.BlockSpec((cout, k), lambda i: (0, 0)),
            pl.BlockSpec((cout, 1), lambda i: (0, 0)),
        ],
        out_specs=pl.BlockSpec((1, cout, ppad), lambda i: (i, 0, 0)),
        compiler_params=pltpu.CompilerParams(
            dimension_semantics=("parallel",)),
    )(patches, w_flat, b_col)
    return out, (hp, wp)


# -----------------------------------------------------------------------------
# FC head: Linear(7056,256)+LeakyReLU (dual-TC split), then Linear(256,2)
# + log_softmax as a tiny follow-up kernel.
# -----------------------------------------------------------------------------
def fc1_kernel(feat_ref, w1t_ref, b1_ref, concept_ref, acc_ref):
    # Grid: (hidden-dim halves ["parallel"], K tiles ["arbitrary"]).
    k = pl.program_id(1)

    @pl.when(k == 0)
    def _():
        acc_ref[...] = jnp.zeros_like(acc_ref)

    acc_ref[...] += jnp.dot(feat_ref[...], w1t_ref[...],
                            preferred_element_type=jnp.float32)

    @pl.when(k == pl.num_programs(1) - 1)
    def _():
        concept_ref[...] = _leaky(acc_ref[...] + b1_ref[...]).astype(
            concept_ref.dtype)


def fc2_logsoftmax_kernel(c_ref, w2t_ref, b2_ref, logp_ref):
    z = jnp.dot(c_ref[...], w2t_ref[...],
                preferred_element_type=jnp.float32) + b2_ref[...]       # (N, 2)
    zmax = jnp.max(z, axis=-1, keepdims=True)
    lse = zmax + jnp.log(jnp.sum(jnp.exp(z - zmax), axis=-1, keepdims=True))
    logp_ref[...] = (z - lse).astype(logp_ref.dtype)


def fc_head(feat, w1t, b1_row, w2t, b2_row, *, tk=2048, th=128):
    # feat: (N, Kpad) bf16; w1t: (Kpad, 256) bf16; b1_row: (1, 256) f32;
    # w2t: (256, 2) f32; b2_row: (1, 2) f32.
    n, kdim = feat.shape
    hdim = w1t.shape[1]
    ncls = w2t.shape[1]
    assert kdim % tk == 0 and hdim % th == 0

    concept = pl.pallas_call(
        fc1_kernel,
        out_shape=jax.ShapeDtypeStruct((n, hdim), jnp.float32),
        grid=(hdim // th, kdim // tk),
        in_specs=[
            pl.BlockSpec((n, tk), lambda h, k: (0, k)),
            pl.BlockSpec((tk, th), lambda h, k: (k, h)),
            pl.BlockSpec((1, th), lambda h, k: (0, h)),
        ],
        out_specs=pl.BlockSpec((n, th), lambda h, k: (0, h)),
        scratch_shapes=[pltpu.VMEM((n, th), jnp.float32)],
        compiler_params=pltpu.CompilerParams(
            dimension_semantics=("parallel", "arbitrary")),
    )(feat, w1t, b1_row)

    logp = pl.pallas_call(
        fc2_logsoftmax_kernel,
        out_shape=jax.ShapeDtypeStruct((n, ncls), jnp.float32),
        grid=(1,),
        in_specs=[
            pl.BlockSpec((n, hdim), lambda i: (0, 0)),
            pl.BlockSpec((hdim, ncls), lambda i: (0, 0)),
            pl.BlockSpec((1, ncls), lambda i: (0, 0)),
        ],
        out_specs=pl.BlockSpec((n, ncls), lambda i: (0, 0)),
    )(concept, w2t, b2_row)
    return logp, concept


# -----------------------------------------------------------------------------
# Full CNNScore forward (Pallas) and a plain-JAX reference.
# -----------------------------------------------------------------------------
def cnn_score_forward(x, params):
    n = x.shape[0]

    # Conv block 1: (N,1,90,90) -> (N, 8, 2048)  [true pooled spatial 44x44].
    y1, (hp1, wp1) = conv_pool_block(x, params["w1"], params["b1"])
    y1_sp = y1[:, :, :hp1 * wp1].reshape(n, y1.shape[1], hp1, wp1)

    # Conv block 2: (N,8,44,44) -> (N, 16, 512)  [true pooled spatial 21x21].
    # TODO(synk): a further step is keeping the (8,44,44) intermediate in VMEM
    # and fusing both conv blocks into one pallas_call (saves one HBM round trip).
    y2, (hp2, wp2) = conv_pool_block(y1_sp, params["w2"], params["b2"])
    cout2, ppad2 = y2.shape[1], y2.shape[2]
    p2 = hp2 * wp2

    # Flatten straight from the padded lane-dense conv-2 output (no runtime pad).
    feat = y2.reshape(n, cout2 * ppad2).astype(jnp.bfloat16)            # (N, 8192)

    # Permute / zero-fill fw1 columns once to the padded feature layout; stream
    # fw1 and feat as bf16 (f32 accumulation happens in the kernel).
    hdim = params["fw1"].shape[0]
    w1p = jnp.pad(params["fw1"].reshape(hdim, cout2, p2),
                  ((0, 0), (0, 0), (0, ppad2 - p2)))                    # (256,16,512)
    w1t = w1p.reshape(hdim, cout2 * ppad2).T.astype(jnp.bfloat16)       # (8192,256)
    b1_row = params["fb1"].reshape(1, hdim)
    w2t = params["fw2"].T                                               # (256, 2)
    b2_row = params["fb2"].reshape(1, -1)

    return fc_head(feat, w1t, b1_row, w2t, b2_row)


def _maxpool2(y):
    n, c, h, w = y.shape
    return y.reshape(n, c, h // 2, 2, w // 2, 2).max(axis=(3, 5))


def _leaky_ref(x):
    return jnp.where(x >= 0, x, NEG_SLOPE * x)


def reference_forward(x, params):
    dn = ("NCHW", "OIHW", "NCHW")
    y = lax.conv_general_dilated(x, params["w1"], (1, 1), "VALID",
                                 dimension_numbers=dn)
    y = _maxpool2(_leaky_ref(y + params["b1"][None, :, None, None]))
    y = lax.conv_general_dilated(y, params["w2"], (1, 1), "VALID",
                                 dimension_numbers=dn)
    y = _maxpool2(_leaky_ref(y + params["b2"][None, :, None, None]))
    feat = y.reshape(y.shape[0], -1)
    concept = _leaky_ref(feat @ params["fw1"].T + params["fb1"])
    z = concept @ params["fw2"].T + params["fb2"]
    logp = jax.nn.log_softmax(z, axis=1)
    return logp, concept


if __name__ == "__main__":
    # fc1 expects 7056 = 16 * 21 * 21 features -> input spatial must be 90x90.
    N, H, W = 2, 90, 90
    key = jax.random.PRNGKey(0)
    ks = jax.random.split(key, 9)

    x = jax.random.normal(ks[0], (N, 1, H, W), dtype=jnp.float32)
    params = {
        "w1": jax.random.normal(ks[1], (8, 1, 3, 3), dtype=jnp.float32) * 0.3,
        "b1": jax.random.normal(ks[2], (8,), dtype=jnp.float32) * 0.1,
        "w2": jax.random.normal(ks[3], (16, 8, 3, 3), dtype=jnp.float32) * 0.1,
        "b2": jax.random.normal(ks[4], (16,), dtype=jnp.float32) * 0.1,
        "fw1": jax.random.normal(ks[5], (256, 7056), dtype=jnp.float32) * 0.01,
        "fb1": jax.random.normal(ks[6], (256,), dtype=jnp.float32) * 0.1,
        "fw2": jax.random.normal(ks[7], (2, 256), dtype=jnp.float32) * 0.05,
        "fb2": jax.random.normal(ks[8], (2,), dtype=jnp.float32) * 0.1,
    }

    logp, concept = jax.block_until_ready(jax.jit(cnn_score_forward)(x, params))
    ref_logp, ref_concept = reference_forward(x, params)

    assert logp.shape == (N, 2) and concept.shape == (N, 256)
    assert bool(jnp.all(jnp.isfinite(logp))) and bool(jnp.all(jnp.isfinite(concept)))
    # Tolerance covers bf16 streaming of activations/weights into the MXU (with
    # f32 accumulation) vs the f32 XLA reference path.
    assert jnp.allclose(concept, ref_concept, atol=5e-2, rtol=5e-2), "concept mismatch"
    assert jnp.allclose(logp, ref_logp, atol=5e-2, rtol=5e-2), "log_softmax mismatch"

    print("KERNEL_OK")
</pallas_src>

<mosaic_0001>
module attributes {stable_mosaic.version = 11 : i64} {
  func.func @conv_pool_kernel(%arg0: i32, %arg1: memref<1x9x8192xbf16, #tpu.memory_space<vmem>>, %arg2: memref<8x9xbf16, #tpu.memory_space<vmem>>, %arg3: memref<8x1xf32, #tpu.memory_space<vmem>>, %arg4: memref<1x8x2048xf32, #tpu.memory_space<vmem>>) attributes {dimension_semantics = [#tpu.dimension_semantics<parallel>], iteration_bounds = array<i64: 2>, scalar_prefetch = 0 : i64, scratch_operands = 0 : i64, tpu.core_type = #tpu.core_type<tc>, window_params = [{transform_indices = @transform_0, window_bounds = array<i64: 1, 9, 8192>}, {pipeline_mode = #tpu.pipeline_mode<synchronous>, transform_indices = @transform_1, window_bounds = array<i64: 8, 9>}, {pipeline_mode = #tpu.pipeline_mode<synchronous>, transform_indices = @transform_2, window_bounds = array<i64: 8, 1>}, {transform_indices = @transform_3, window_bounds = array<i64: 1, 8, 2048>}]} {
    %c0 = arith.constant 0 : index
    %c0_0 = arith.constant 0 : index
    %0 = vector.load %arg2[%c0, %c0_0] : memref<8x9xbf16, #tpu.memory_space<vmem>>, vector<8x9xbf16>
    %c0_1 = arith.constant 0 : index
    %c0_2 = arith.constant 0 : index
    %c0_3 = arith.constant 0 : index
    %1 = vector.load %arg1[%c0_1, %c0_2, %c0_3] : memref<1x9x8192xbf16, #tpu.memory_space<vmem>>, vector<1x9x8192xbf16>
    %2 = vector.shape_cast %1 : vector<1x9x8192xbf16> to vector<9x8192xbf16>
    %cst = arith.constant dense<0.000000e+00> : vector<8x8192xf32>
    %3 = tpu.matmul %0, %2, %cst {dimension_numbers = #tpu.dot_dimension_numbers<[1], [0], [0], [1], [0, 0, 1, 1], [], []>} : vector<8x9xbf16>, vector<9x8192xbf16>, vector<8x8192xf32> -> vector<8x8192xf32>
    %4 = vector.extract_strided_slice %3 {offsets = [0, 0], sizes = [8, 2048], strides = [1, 1]} : vector<8x8192xf32> to vector<8x2048xf32>
    %5 = vector.extract_strided_slice %3 {offsets = [0, 2048], sizes = [8, 2048], strides = [1, 1]} : vector<8x8192xf32> to vector<8x2048xf32>
    %6 = arith.maximumf %4, %5 : vector<8x2048xf32>
    %7 = vector.extract_strided_slice %3 {offsets = [0, 4096], sizes = [8, 2048], strides = [1, 1]} : vector<8x8192xf32> to vector<8x2048xf32>
    %8 = vector.extract_strided_slice %3 {offsets = [0, 6144], sizes = [8, 2048], strides = [1, 1]} : vector<8x8192xf32> to vector<8x2048xf32>
    %9 = arith.maximumf %7, %8 : vector<8x2048xf32>
    %10 = arith.maximumf %6, %9 : vector<8x2048xf32>
    %c0_4 = arith.constant 0 : index
    %c0_5 = arith.constant 0 : index
    %11 = vector.load %arg3[%c0_4, %c0_5] : memref<8x1xf32, #tpu.memory_space<vmem>>, vector<8x1xf32>
    %12 = vector.broadcast %11 : vector<8x1xf32> to vector<8x2048xf32>
    %13 = arith.addf %10, %12 : vector<8x2048xf32>
    %cst_6 = arith.constant 3.300000e-01 : f32
    %14 = vector.broadcast %cst_6 : f32 to vector<8x2048xf32>
    %15 = arith.mulf %14, %13 : vector<8x2048xf32>
    %16 = arith.maximumf %13, %15 : vector<8x2048xf32>
    %c0_7 = arith.constant 0 : index
    %c0_8 = arith.constant 0 : index
    %c0_9 = arith.constant 0 : index
    %17 = vector.load %arg4[%c0_7, %c0_8, %c0_9] : memref<1x8x2048xf32, #tpu.memory_space<vmem>>, vector<1x8x2048xf32>
    %18 = vector.shape_cast %17 : vector<1x8x2048xf32> to vector<8x2048xf32>
    %19 = vector.shape_cast %16 : vector<8x2048xf32> to vector<1x8x2048xf32>
    tpu.vector_store %arg4[%c0_7, %c0_8, %c0_9], %19 {strides = array<i32>} : memref<1x8x2048xf32, #tpu.memory_space<vmem>>, vector<1x8x2048xf32>,
    return
  }
  func.func @transform_0(%arg0: i32) -> (i32, i32, i32) {
    %c0_i32 = arith.constant 0 : i32
    %c0_i32_0 = arith.constant 0 : i32
    %c0_i32_1 = arith.constant 0 : i32
    return %arg0, %c0_i32, %c0_i32_0 : i32, i32, i32
  }
  func.func @transform_1(%arg0: i32) -> (i32, i32) {
    %c0_i32 = arith.constant 0 : i32
    %c0_i32_0 = arith.constant 0 : i32
    %c0_i32_1 = arith.constant 0 : i32
    return %c0_i32, %c0_i32_0 : i32, i32
  }
  func.func @transform_2(%arg0: i32) -> (i32, i32) {
    %c0_i32 = arith.constant 0 : i32
    %c0_i32_0 = arith.constant 0 : i32
    %c0_i32_1 = arith.constant 0 : i32
    return %c0_i32, %c0_i32_0 : i32, i32
  }
  func.func @transform_3(%arg0: i32) -> (i32, i32, i32) {
    %c0_i32 = arith.constant 0 : i32
    %c0_i32_0 = arith.constant 0 : i32
    %c0_i32_1 = arith.constant 0 : i32
    return %arg0, %c0_i32, %c0_i32_0 : i32, i32, i32
  }
}

module attributes {stable_mosaic.version = 11 : i64} {
  func.func @conv_pool_kernel(%arg0: i32, %arg1: memref<1x72x2048xbf16, #tpu.memory_space<vmem>>, %arg2: memref<16x72xbf16, #tpu.memory_space<vmem>>, %arg3: memref<16x1xf32, #tpu.memory_space<vmem>>, %arg4: memref<1x16x512xf32, #tpu.memory_space<vmem>>) attributes {dimension_semantics = [#tpu.dimension_semantics<parallel>], iteration_bounds = array<i64: 2>, scalar_prefetch = 0 : i64, scratch_operands = 0 : i64, tpu.core_type = #tpu.core_type<tc>, window_params = [{transform_indices = @transform_0, window_bounds = array<i64: 1, 72, 2048>}, {pipeline_mode = #tpu.pipeline_mode<synchronous>, transform_indices = @transform_1, window_bounds = array<i64: 16, 72>}, {pipeline_mode = #tpu.pipeline_mode<synchronous>, transform_indices = @transform_2, window_bounds = array<i64: 16, 1>}, {transform_indices = @transform_3, window_bounds = array<i64: 1, 16, 512>}]} {
    %c0 = arith.constant 0 : index
    %c0_0 = arith.constant 0 : index
    %0 = vector.load %arg2[%c0, %c0_0] : memref<16x72xbf16, #tpu.memory_space<vmem>>, vector<16x72xbf16>
    %c0_1 = arith.constant 0 : index
    %c0_2 = arith.constant 0 : index
    %c0_3 = arith.constant 0 : index
    %1 = vector.load %arg1[%c0_1, %c0_2, %c0_3] : memref<1x72x2048xbf16, #tpu.memory_space<vmem>>, vector<1x72x2048xbf16>
    %2 = vector.shape_cast %1 : vector<1x72x2048xbf16> to vector<72x2048xbf16>
    %cst = arith.constant dense<0.000000e+00> : vector<16x2048xf32>
    %3 = tpu.matmul %0, %2, %cst {dimension_numbers = #tpu.dot_dimension_numbers<[1], [0], [0], [1], [0, 0, 1, 1], [], []>} : vector<16x72xbf16>, vector<72x2048xbf16>, vector<16x2048xf32> -> vector<16x2048xf32>
    %4 = vector.extract_strided_slice %3 {offsets = [0, 0], sizes = [16, 512], strides = [1, 1]} : vector<16x2048xf32> to vector<16x512xf32>
    %5 = vector.extract_strided_slice %3 {offsets = [0, 512], sizes = [16, 512], strides = [1, 1]} : vector<16x2048xf32> to vector<16x512xf32>
    %6 = arith.maximumf %4, %5 : vector<16x512xf32>
    %7 = vector.extract_strided_slice %3 {offsets = [0, 1024], sizes = [16, 512], strides = [1, 1]} : vector<16x2048xf32> to vector<16x512xf32>
    %8 = vector.extract_strided_slice %3 {offsets = [0, 1536], sizes = [16, 512], strides = [1, 1]} : vector<16x2048xf32> to vector<16x512xf32>
    %9 = arith.maximumf %7, %8 : vector<16x512xf32>
    %10 = arith.maximumf %6, %9 : vector<16x512xf32>
    %c0_4 = arith.constant 0 : index
    %c0_5 = arith.constant 0 : index
    %11 = vector.load %arg3[%c0_4, %c0_5] : memref<16x1xf32, #tpu.memory_space<vmem>>, vector<16x1xf32>
    %12 = vector.broadcast %11 : vector<16x1xf32> to vector<16x512xf32>
    %13 = arith.addf %10, %12 : vector<16x512xf32>
    %cst_6 = arith.constant 3.300000e-01 : f32
    %14 = vector.broadcast %cst_6 : f32 to vector<16x512xf32>
    %15 = arith.mulf %14, %13 : vector<16x512xf32>
    %16 = arith.maximumf %13, %15 : vector<16x512xf32>
    %c0_7 = arith.constant 0 : index
    %c0_8 = arith.constant 0 : index
    %c0_9 = arith.constant 0 : index
    %17 = vector.load %arg4[%c0_7, %c0_8, %c0_9] : memref<1x16x512xf32, #tpu.memory_space<vmem>>, vector<1x16x512xf32>
    %18 = vector.shape_cast %17 : vector<1x16x512xf32> to vector<16x512xf32>
    %19 = vector.shape_cast %16 : vector<16x512xf32> to vector<1x16x512xf32>
    tpu.vector_store %arg4[%c0_7, %c0_8, %c0_9], %19 {strides = array<i32>} : memref<1x16x512xf32, #tpu.memory_space<vmem>>, vector<1x16x512xf32>,
    return
  }
  func.func @transform_0(%arg0: i32) -> (i32, i32, i32) {
    %c0_i32 = arith.constant 0 : i32
    %c0_i32_0 = arith.constant 0 : i32
    %c0_i32_1 = arith.constant 0 : i32
    return %arg0, %c0_i32, %c0_i32_0 : i32, i32, i32
  }
  func.func @transform_1(%arg0: i32) -> (i32, i32) {
    %c0_i32 = arith.constant 0 : i32
    %c0_i32_0 = arith.constant 0 : i32
    %c0_i32_1 = arith.constant 0 : i32
    return %c0_i32, %c0_i32_0 : i32, i32
  }
  func.func @transform_2(%arg0: i32) -> (i32, i32) {
    %c0_i32 = arith.constant 0 : i32
    %c0_i32_0 = arith.constant 0 : i32
    %c0_i32_1 = arith.constant 0 : i32
    return %c0_i32, %c0_i32_0 : i32, i32
  }
  func.func @transform_3(%arg0: i32) -> (i32, i32, i32) {
    %c0_i32 = arith.constant 0 : i32
    %c0_i32_0 = arith.constant 0 : i32
    %c0_i32_1 = arith.constant 0 : i32
    return %arg0, %c0_i32, %c0_i32_0 : i32, i32, i32
  }
}

module attributes {stable_mosaic.version = 11 : i64} {
  func.func @fc1_kernel(%arg0: i32, %arg1: i32, %arg2: memref<2x2048xbf16, #tpu.memory_space<vmem>>, %arg3: memref<2048x128xbf16, #tpu.memory_space<vmem>>, %arg4: memref<1x128xf32, #tpu.memory_space<vmem>>, %arg5: memref<2x128xf32, #tpu.memory_space<vmem>>, %arg6: memref<2x128xf32, #tpu.memory_space<vmem>>) attributes {dimension_semantics = [#tpu.dimension_semantics<parallel>, #tpu.dimension_semantics<arbitrary>], iteration_bounds = array<i64: 2, 4>, scalar_prefetch = 0 : i64, scratch_operands = 1 : i64, tpu.core_type = #tpu.core_type<tc>, window_params = [{transform_indices = @transform_0, window_bounds = array<i64: 2, 2048>}, {transform_indices = @transform_1, window_bounds = array<i64: 2048, 128>}, {transform_indices = @transform_2, window_bounds = array<i64: 1, 128>}, {transform_indices = @transform_3, window_bounds = array<i64: 2, 128>}]} {
    %c0_i32 = arith.constant 0 : i32
    %0 = arith.cmpi eq, %arg1, %c0_i32 : i32
    %1 = arith.extui %0 : i1 to i32
    %c0_i32_0 = arith.constant 0 : i32
    %2 = arith.cmpi ne, %1, %c0_i32_0 : i32
    scf.if %2 {
      %cst_9 = arith.constant 0.000000e+00 : f32
      %12 = vector.broadcast %cst_9 : f32 to vector<2x128xf32>
      %c0_10 = arith.constant 0 : index
      %c0_11 = arith.constant 0 : index
      %13 = vector.load %arg6[%c0_10, %c0_11] : memref<2x128xf32, #tpu.memory_space<vmem>>, vector<2x128xf32>
      tpu.vector_store %arg6[%c0_10, %c0_11], %12 {strides = array<i32>} : memref<2x128xf32, #tpu.memory_space<vmem>>, vector<2x128xf32>,
    } else {
    }
    %c0 = arith.constant 0 : index
    %c0_1 = arith.constant 0 : index
    %3 = vector.load %arg6[%c0, %c0_1] : memref<2x128xf32, #tpu.memory_space<vmem>>, vector<2x128xf32>
    %c0_2 = arith.constant 0 : index
    %c0_3 = arith.constant 0 : index
    %4 = vector.load %arg2[%c0_2, %c0_3] : memref<2x2048xbf16, #tpu.memory_space<vmem>>, vector<2x2048xbf16>
    %c0_4 = arith.constant 0 : index
    %c0_5 = arith.constant 0 : index
    %5 = vector.load %arg3[%c0_4, %c0_5] : memref<2048x128xbf16, #tpu.memory_space<vmem>>, vector<2048x128xbf16>
    %cst = arith.constant dense<0.000000e+00> : vector<2x128xf32>
    %6 = tpu.matmul %4, %5, %cst {dimension_numbers = #tpu.dot_dimension_numbers<[1], [0], [0], [1], [0, 0, 1, 1], [], []>} : vector<2x2048xbf16>, vector<2048x128xbf16>, vector<2x128xf32> -> vector<2x128xf32>
    %7 = arith.addf %3, %6 : vector<2x128xf32>
    %c0_6 = arith.constant 0 : index
    %c0_7 = arith.constant 0 : index
    %8 = vector.load %arg6[%c0_6, %c0_7] : memref<2x128xf32, #tpu.memory_space<vmem>>, vector<2x128xf32>
    tpu.vector_store %arg6[%c0_6, %c0_7], %7 {strides = array<i32>} : memref<2x128xf32, #tpu.memory_space<vmem>>, vector<2x128xf32>,
    %c3_i32 = arith.constant 3 : i32
    %9 = arith.cmpi eq, %arg1, %c3_i32 : i32
    %10 = arith.extui %9 : i1 to i32
    %c0_i32_8 = arith.constant 0 : i32
    %11 = arith.cmpi ne, %10, %c0_i32_8 : i32
    scf.if %11 {
      %c0_9 = arith.constant 0 : index
      %c0_10 = arith.constant 0 : index
      %12 = vector.load %arg6[%c0_9, %c0_10] : memref<2x128xf32, #tpu.memory_space<vmem>>, vector<2x128xf32>
      %c0_11 = arith.constant 0 : index
      %c0_12 = arith.constant 0 : index
      %13 = vector.load %arg4[%c0_11, %c0_12] : memref<1x128xf32, #tpu.memory_space<vmem>>, vector<1x128xf32>
      %14 = vector.broadcast %13 : vector<1x128xf32> to vector<2x128xf32>
      %15 = arith.addf %12, %14 : vector<2x128xf32>
      %cst_13 = arith.constant 3.300000e-01 : f32
      %16 = vector.broadcast %cst_13 : f32 to vector<2x128xf32>
      %17 = arith.mulf %16, %15 : vector<2x128xf32>
      %18 = arith.maximumf %15, %17 : vector<2x128xf32>
      %c0_14 = arith.constant 0 : index
      %c0_15 = arith.constant 0 : index
      %19 = vector.load %arg5[%c0_14, %c0_15] : memref<2x128xf32, #tpu.memory_space<vmem>>, vector<2x128xf32>
      tpu.vector_store %arg5[%c0_14, %c0_15], %18 {strides = array<i32>} : memref<2x128xf32, #tpu.memory_space<vmem>>, vector<2x128xf32>,
    } else {
    }
    return
  }
  func.func @transform_0(%arg0: i32, %arg1: i32) -> (i32, i32) {
    %c0_i32 = arith.constant 0 : i32
    %c0_i32_0 = arith.constant 0 : i32
    return %c0_i32, %arg1 : i32, i32
  }
  func.func @transform_1(%arg0: i32, %arg1: i32) -> (i32, i32) {
    %c0_i32 = arith.constant 0 : i32
    return %arg1, %arg0 : i32, i32
  }
  func.func @transform_2(%arg0: i32, %arg1: i32) -> (i32, i32) {
    %c0_i32 = arith.constant 0 : i32
    %c0_i32_0 = arith.constant 0 : i32
    return %c0_i32, %arg0 : i32, i32
  }
  func.func @transform_3(%arg0: i32, %arg1: i32) -> (i32, i32) {
    %c0_i32 = arith.constant 0 : i32
    %c0_i32_0 = arith.constant 0 : i32
    return %c0_i32, %arg0 : i32, i32
  }
}

module attributes {stable_mosaic.version = 11 : i64} {
  func.func @fc2_logsoftmax_kernel(%arg0: i32, %arg1: memref<2x256xf32, #tpu.memory_space<vmem>>, %arg2: memref<256x2xf32, #tpu.memory_space<vmem>>, %arg3: memref<1x2xf32, #tpu.memory_space<vmem>>, %arg4: memref<2x2xf32, #tpu.memory_space<vmem>>) attributes {dimension_semantics = [#tpu.dimension_semantics<arbitrary>], iteration_bounds = array<i64: 1>, scalar_prefetch = 0 : i64, scratch_operands = 0 : i64, tpu.core_type = #tpu.core_type<tc>, window_params = [{pipeline_mode = #tpu.pipeline_mode<synchronous>, transform_indices = @transform_0, window_bounds = array<i64: 2, 256>}, {pipeline_mode = #tpu.pipeline_mode<synchronous>, transform_indices = @transform_1, window_bounds = array<i64: 256, 2>}, {pipeline_mode = #tpu.pipeline_mode<synchronous>, transform_indices = @transform_2, window_bounds = array<i64: 1, 2>}, {pipeline_mode = #tpu.pipeline_mode<synchronous>, transform_indices = @transform_3, window_bounds = array<i64: 2, 2>}]} {
    %c0 = arith.constant 0 : index
    %c0_0 = arith.constant 0 : index
    %0 = vector.load %arg1[%c0, %c0_0] : memref<2x256xf32, #tpu.memory_space<vmem>>, vector<2x256xf32>
    %c0_1 = arith.constant 0 : index
    %c0_2 = arith.constant 0 : index
    %1 = vector.load %arg2[%c0_1, %c0_2] : memref<256x2xf32, #tpu.memory_space<vmem>>, vector<256x2xf32>
    %cst = arith.constant dense<0.000000e+00> : vector<2x2xf32>
    %2 = tpu.matmul %0, %1, %cst {dimension_numbers = #tpu.dot_dimension_numbers<[1], [0], [0], [1], [0, 0, 1, 1], [], []>} : vector<2x256xf32>, vector<256x2xf32>, vector<2x2xf32> -> vector<2x2xf32>
    %c0_3 = arith.constant 0 : index
    %c0_4 = arith.constant 0 : index
    %3 = vector.load %arg3[%c0_3, %c0_4] : memref<1x2xf32, #tpu.memory_space<vmem>>, vector<1x2xf32>
    %4 = vector.broadcast %3 : vector<1x2xf32> to vector<2x2xf32>
    %5 = arith.addf %2, %4 : vector<2x2xf32>
    %cst_5 = arith.constant dense<0xFF800000> : vector<2xf32>
    %6 = vector.multi_reduction <maximumf>, %5, %cst_5 [1] : vector<2x2xf32> to vector<2xf32>
    %7 = vector.shape_cast %6 : vector<2xf32> to vector<2x1xf32>
    %8 = vector.broadcast %7 : vector<2x1xf32> to vector<2x2xf32>
    %9 = arith.subf %5, %8 : vector<2x2xf32>
    %10 = math.exp %9 : vector<2x2xf32>
    %cst_6 = arith.constant dense<0.000000e+00> : vector<2xf32>
    %11 = vector.multi_reduction <add>, %10, %cst_6 [1] : vector<2x2xf32> to vector<2xf32>
    %12 = vector.shape_cast %11 : vector<2xf32> to vector<2x1xf32>
    %13 = math.log %12 : vector<2x1xf32>
    %14 = arith.addf %7, %13 : vector<2x1xf32>
    %15 = vector.broadcast %14 : vector<2x1xf32> to vector<2x2xf32>
    %16 = arith.subf %5, %15 : vector<2x2xf32>
    %c0_7 = arith.constant 0 : index
    %c0_8 = arith.constant 0 : index
    %17 = vector.load %arg4[%c0_7, %c0_8] : memref<2x2xf32, #tpu.memory_space<vmem>>, vector<2x2xf32>
    tpu.vector_store %arg4[%c0_7, %c0_8], %16 {strides = array<i32>} : memref<2x2xf32, #tpu.memory_space<vmem>>, vector<2x2xf32>,
    return
  }
  func.func @transform_0(%arg0: i32) -> (i32, i32) {
    %c0_i32 = arith.constant 0 : i32
    %c0_i32_0 = arith.constant 0 : i32
    %c0_i32_1 = arith.constant 0 : i32
    return %c0_i32, %c0_i32_0 : i32, i32
  }
  func.func @transform_1(%arg0: i32) -> (i32, i32) {
    %c0_i32 = arith.constant 0 : i32
    %c0_i32_0 = arith.constant 0 : i32
    %c0_i32_1 = arith.constant 0 : i32
    return %c0_i32, %c0_i32_0 : i32, i32
  }
  func.func @transform_2(%arg0: i32) -> (i32, i32) {
    %c0_i32 = arith.constant 0 : i32
    %c0_i32_0 = arith.constant 0 : i32
    %c0_i32_1 = arith.constant 0 : i32
    return %c0_i32, %c0_i32_0 : i32, i32
  }
  func.func @transform_3(%arg0: i32) -> (i32, i32) {
    %c0_i32 = arith.constant 0 : i32
    %c0_i32_0 = arith.constant 0 : i32
    %c0_i32_1 = arith.constant 0 : i32
    return %c0_i32, %c0_i32_0 : i32, i32
  }
}

</mosaic_0001>

<llo_original>
// kernel: cnn_score_forward.4
$region0: #{cnn_score_forward.4}
  #allocation0 [shape = 'u32[]', space=smem, size = 0x4, offset = 0x4, fixed_abs, tag = 'smem constant byte address 0x4 - core index']
  #allocation1 [shape = 'u32[144,128]{1,0:T(1,128)}', space=vmem, size = 0x12000, scoped, tag = 'internal scratch']
  %s0 = inlined_call_operand.vmem [shape: bf16[2,9,8192], index: 0, kind: input, shape index: {}]
  %s1 = inlined_call_operand.vmem [shape: bf16[8,9], index: 1, kind: input, shape index: {}]
  %s2 = inlined_call_operand.vmem [shape: f32[8,1], index: 2, kind: input, shape index: {}]
  %s3 = inlined_call_operand.vmem [shape: f32[2,8,2048], index: 3, kind: output, shape index: {}]
  %s4 = sld [smem:[#allocation0]]
  $region45: #{cnn_score_forward.4} parent=0
    _
  %s6 = ssub.s32 1, %s4
  %s7 = scalar_select 0, %s6, %s4
  loop: start=0, step=1, limit=4
  $region2: #{cnn_score_forward.4} parent=0 // loop_pre_header
    _
  $region3: #{cnn_score_forward.4} parent=0 // loop_header
    %s9 = sphi 0, %s13
    %p10 = scmp.ge.s32.totalorder %s9, 4
    %s19 = sphi 0, %s21
    %s22 = sphi 0, %s19
    %s23 = sphi 0, %s22
    %s39 = sphi 0, %s23
    %s43 = sphi 0, %s43
    %s45 = sphi 0, %s43
    %s46 = sphi 0, %s45
    %s60 = sphi 0, %s46
    %s64 = sphi 0, %s64
    %s66 = sphi 0, %s64
    %s67 = sphi 0, %s66
    %s81 = sphi 0, %s67
    %s87 = sphi 0, %s89
    %s90 = sphi 0, %s87
    %s91 = sphi 0, %s90
    %s107 = sphi 0, %s91
  $region4: #{cnn_score_forward.4} parent=0 // loop_header_branch
    %12 = sbr.rel (%p10) target = $region8
  $region5: #{cnn_score_forward.4} parent=0 // loop_body
    %s14 = ssub.s32 %s9, 1
    %s15 = ssub.s32 %s9, 2
    %s16 = sadd.s32 %s9, 1
    %s17 = ssub.s32 %s9, %s16
    %p18 = scmp.eq.s32.totalorder %s17, 0
    %s20 = sadd.s32 %s19, 1
    %s21 = scalar_select %p18, %s19, %s20
    %p24 = pneg %p18
    %p25 = scmp.eq.s32.totalorder %s9, 1
    %p26 = por %p24, %p25
    %p27 = scmp.ne.s32.totalorder %s19, %s22
    %p28 = scmp.eq.s32.totalorder %s9, 0
    %p29 = por %p27, %p28
    %p30 = scmp.ne.s32.totalorder %s19, %s22
    %p31 = scmp.eq.s32.totalorder %s14, 1
    %p32 = por %p30, %p31
    %p33 = scmp.ne.s32.totalorder %s22, %s23
    %p34 = scmp.eq.s32.totalorder %s14, 0
    %p35 = por %p33, %p34
    %p36 = scmp.ne.s32.totalorder %s22, %s23
    %p37 = scmp.eq.s32.totalorder %s15, 1
    %p38 = por %p36, %p37
    %p40 = scmp.ne.s32.totalorder %s23, %s39
    %p41 = scmp.eq.s32.totalorder %s15, 0
    %p42 = por %p40, %p41
    %s44 = sadd.s32 %s43, 1
    %p47 = scmp.eq.s32.totalorder %s9, 1
    %p48 = scmp.ne.s32.totalorder %s43, %s45
    %p49 = scmp.eq.s32.totalorder %s9, 0
    %p50 = por %p48, %p49
    %p51 = scmp.ne.s32.totalorder %s43, %s45
    %p52 = scmp.eq.s32.totalorder %s14, 1
    %p53 = por %p51, %p52
    %p54 = scmp.ne.s32.totalorder %s45, %s46
    %p55 = scmp.eq.s32.totalorder %s14, 0
    %p56 = por %p54, %p55
    %p57 = scmp.ne.s32.totalorder %s45, %s46
    %p58 = scmp.eq.s32.totalorder %s15, 1
    %p59 = por %p57, %p58
    %p61 = scmp.ne.s32.totalorder %s46, %s60
    %p62 = scmp.eq.s32.totalorder %s15, 0
    %p63 = por %p61, %p62
    %s65 = sadd.s32 %s64, 1
    %p68 = scmp.eq.s32.totalorder %s9, 1
    %p69 = scmp.ne.s32.totalorder %s64, %s66
    %p70 = scmp.eq.s32.totalorder %s9, 0
    %p71 = por %p69, %p70
    %p72 = scmp.ne.s32.totalorder %s64, %s66
    %p73 = scmp.eq.s32.totalorder %s14, 1
    %p74 = por %p72, %p73
    %p75 = scmp.ne.s32.totalorder %s66, %s67
    %p76 = scmp.eq.s32.totalorder %s14, 0
    %p77 = por %p75, %p76
    %p78 = scmp.ne.s32.totalorder %s66, %s67
    %p79 = scmp.eq.s32.totalorder %s15, 1
    %p80 = por %p78, %p79
    %p82 = scmp.ne.s32.totalorder %s67, %s81
    %p83 = scmp.eq.s32.totalorder %s15, 0
    %p84 = por %p82, %p83
    %s85 = ssub.s32 %s9, %s16
    %p86 = scmp.eq.s32.totalorder %s85, 0
    %s88 = sadd.s32 %s87, 1
    %s89 = scalar_select %p86, %s87, %s88
    %p92 = pneg %p86
    %p93 = scmp.eq.s32.totalorder %s9, 1
    %p94 = por %p92, %p93
    %p95 = scmp.ne.s32.totalorder %s87, %s90
    %p96 = scmp.eq.s32.totalorder %s9, 0
    %p97 = por %p95, %p96
    %p98 = scmp.ne.s32.totalorder %s87, %s90
    %p99 = scmp.eq.s32.totalorder %s14, 1
    %p100 = por %p98, %p99
    %p101 = scmp.ne.s32.totalorder %s90, %s91
    %p102 = scmp.eq.s32.totalorder %s14, 0
    %p103 = por %p101, %p102
    %p104 = scmp.ne.s32.totalorder %s90, %s91
    %p105 = scmp.eq.s32.totalorder %s15, 1
    %p106 = por %p104, %p105
    %p108 = scmp.ne.s32.totalorder %s91, %s107
    %p109 = scmp.eq.s32.totalorder %s15, 0
    %p110 = por %p108, %p109
    %p111 = scmp.le.s32.totalorder 1, %s9
    %p112 = scmp.lt.s32.totalorder %s9, 3
    %p113 = pnand %p111, %p112
    %p114 = pneg %p113
    // Predicated region
    $region9: #{cnn_score_forward.4} parent=5 // pred_check
      _
    $region10: #{cnn_score_forward.4} parent=5 // pred_check_branch
      %116 = sbr.rel (%p113) target = $region12
    $region11: #{cnn_score_forward.4} parent=5 // pred_region
      %s117 = ssub.s32 %s9, 1
      // Predicated region
      $region13: #{cnn_score_forward.4} parent=11 // pred_check
        %p118 = pneg %p56
      $region14: #{cnn_score_forward.4} parent=11 // pred_check_branch
        %120 = sbr.rel (%p118) target = $region16
      $region15: #{cnn_score_forward.4} parent=11 // pred_region
        _
      $region16: #{cnn_score_forward.4} parent=11 // pred_fallthru
        _
      // Predicated region
      $region17: #{cnn_score_forward.4} parent=11 // pred_check
        %p121 = pneg %p77
      $region18: #{cnn_score_forward.4} parent=11 // pred_check_branch
        %123 = sbr.rel (%p121) target = $region20
      $region19: #{cnn_score_forward.4} parent=11 // pred_region
        _
      $region20: #{cnn_score_forward.4} parent=11 // pred_fallthru
        _
    $region12: #{cnn_score_forward.4} parent=5 // pred_fallthru
      _
    %p124 = scmp.lt.s32.totalorder %s9, 2
    // Predicated region
    $region21: #{cnn_score_forward.4} parent=5 // pred_check
      %p125 = pneg %p124
    $region22: #{cnn_score_forward.4} parent=5 // pred_check_branch
      %127 = sbr.rel (%p125) target = $region24
    $region23: #{cnn_score_forward.4} parent=5 // pred_region
      // Predicated region
      $region25: #{cnn_score_forward.4} parent=23 // pred_check
        %p128 = pneg %p29
      $region26: #{cnn_score_forward.4} parent=23 // pred_check_branch
        %130 = sbr.rel (%p128) target = $region28
      $region27: #{cnn_score_forward.4} parent=23 // pred_region
        %p131 = scmp.lt.s32.totalorder %s9, 1
        %s132 = scalar_select %p131, %s9, 1
        %s133 = smul.addr %s132, 128
        %s134 = smul.addr %s133, 4
        %s135 = scalar_lea.vmem %s0, %s134
      $region28: #{cnn_score_forward.4} parent=23 // pred_fallthru
        _
    $region24: #{cnn_score_forward.4} parent=5 // pred_fallthru
      _
    %p136 = scmp.le.s32.totalorder 1, %s9
    %p137 = scmp.lt.s32.totalorder %s9, 3
    %p138 = pnand %p136, %p137
    %p139 = pneg %p138
    // Predicated region
    $region29: #{cnn_score_forward.4} parent=5 // pred_check
      _
    $region30: #{cnn_score_forward.4} parent=5 // pred_check_branch
      %141 = sbr.rel (%p138) target = $region32
    $region31: #{cnn_score_forward.4} parent=5 // pred_region
      %s142 = ssub.s32 %s9, 1
      %p143 = scmp.lt.s32.totalorder %s14, 1
      %s144 = scalar_select %p143, %s14, 1
      %s145 = smul.addr %s144, 128
      %s146 = smul.addr %s145, 4
      %s147 = scalar_lea.vmem %s0, %s146
      %p148 = pneg %p35
      %p149 = pneg %p32
      %p150 = pneg %p56
      %p151 = pneg %p53
      %p152 = pneg %p77
      %p153 = pneg %p74
      %p154 = pneg %p103
      %p155 = pneg %p100
      %p156 = scmp.lt.s32.totalorder %s14, 1
      %s157 = scalar_select %p156, %s14, 1
      %s158 = smul.addr %s157, 16
      %s159 = smul.addr %s158, 8
      %s160 = scalar_lea.vmem %s3, %s159
      %p161 = scmp.lt.s32.totalorder %s14, 1
      %s162 = scalar_select %p161, %s14, 1
      %s163 = smul.addr %s162, 128
      %s164 = smul.addr %s163, 4
      %s165 = scalar_lea.vmem %s0, %s164
      %p166 = scmp.lt.s32.totalorder %s14, 1
      %s167 = scalar_select %p166, %s14, 1
      %s168 = smul.addr %s167, 16
      %s169 = smul.addr %s168, 8
      %s170 = scalar_lea.vmem %s3, %s169
      %v172 = vld [vmem:[%s1] sm:$0xf]
      %v173 = vld [vmem:[%s165] sm:$0xff]
      %v174 = vld [vmem:[%s165 + $0x8] sm:$0xff]
      %v175 = vld [vmem:[%s165 + $0x10] sm:$0xff]
      %v176 = vld [vmem:[%s165 + $0x18] sm:$0xff]
      %v177 = vld [vmem:[%s165 + $0x20] sm:$0xff]
      %v178 = vld [vmem:[%s165 + $0x28] sm:$0xff]
      %v179 = vld [vmem:[%s165 + $0x30] sm:$0xff]
      %v180 = vld [vmem:[%s165 + $0x38] sm:$0xff]
      %v181 = vld [vmem:[%s165 + $0x40] sm:$0xff]
      %v182 = vld [vmem:[%s165 + $0x48] sm:$0xff]
      %v183 = vld [vmem:[%s165 + $0x50] sm:$0xff]
      %v184 = vld [vmem:[%s165 + $0x58] sm:$0xff]
      %v185 = vld [vmem:[%s165 + $0x60] sm:$0xff]
      %v186 = vld [vmem:[%s165 + $0x68] sm:$0xff]
      %v187 = vld [vmem:[%s165 + $0x70] sm:$0xff]
      %v188 = vld [vmem:[%s165 + $0x78] sm:$0xff]
      %v189 = vld [vmem:[%s165 + $0x80] sm:$0xff]
      %v190 = vld [vmem:[%s165 + $0x88] sm:$0xff]
      %v191 = vld [vmem:[%s165 + $0x90] sm:$0xff]
      %v192 = vld [vmem:[%s165 + $0x98] sm:$0xff]
      %v193 = vld [vmem:[%s165 + $0xa0] sm:$0xff]
      %v194 = vld [vmem:[%s165 + $0xa8] sm:$0xff]
      %v195 = vld [vmem:[%s165 + $0xb0] sm:$0xff]
      %v196 = vld [vmem:[%s165 + $0xb8] sm:$0xff]
      %v197 = vld [vmem:[%s165 + $0xc0] sm:$0xff]
      %v198 = vld [vmem:[%s165 + $0xc8] sm:$0xff]
      %v199 = vld [vmem:[%s165 + $0xd0] sm:$0xff]
      %v200 = vld [vmem:[%s165 + $0xd8] sm:$0xff]
      %v201 = vld [vmem:[%s165 + $0xe0] sm:$0xff]
      %v202 = vld [vmem:[%s165 + $0xe8] sm:$0xff]
      %v203 = vld [vmem:[%s165 + $0xf0] sm:$0xff]
      %v204 = vld [vmem:[%s165 + $0xf8] sm:$0xff]
      %v205 = vld [vmem:[%s165 + $0x100] sm:$0x11]
      %v206 = vld [vmem:[%s165 + $0x108] sm:$0x11]
      %v207 = vld [vmem:[%s165 + $0x110] sm:$0x11]
      %v208 = vld [vmem:[%s165 + $0x118] sm:$0x11]
      %v209 = vld [vmem:[%s165 + $0x120] sm:$0x11]
      %v210 = vld [vmem:[%s165 + $0x128] sm:$0x11]
      %v211 = vld [vmem:[%s165 + $0x130] sm:$0x11]
      %v212 = vld [vmem:[%s165 + $0x138] sm:$0x11]
      %v213 = vld [vmem:[%s165 + $0x140] sm:$0x11]
      %v214 = vld [vmem:[%s165 + $0x148] sm:$0x11]
      %v215 = vld [vmem:[%s165 + $0x150] sm:$0x11]
      %v216 = vld [vmem:[%s165 + $0x158] sm:$0x11]
      %v217 = vld [vmem:[%s165 + $0x160] sm:$0x11]
      %v218 = vld [vmem:[%s165 + $0x168] sm:$0x11]
      %v219 = vld [vmem:[%s165 + $0x170] sm:$0x11]
      %v220 = vld [vmem:[%s165 + $0x178] sm:$0x11]
      %v221 = vld [vmem:[%s165 + $0x180] sm:$0x11]
      %v222 = vld [vmem:[%s165 + $0x188] sm:$0x11]
      %v223 = vld [vmem:[%s165 + $0x190] sm:$0x11]
      %v224 = vld [vmem:[%s165 + $0x198] sm:$0x11]
      %v225 = vld [vmem:[%s165 + $0x1a0] sm:$0x11]
      %v226 = vld [vmem:[%s165 + $0x1a8] sm:$0x11]
      %v227 = vld [vmem:[%s165 + $0x1b0] sm:$0x11]
      %v228 = vld [vmem:[%s165 + $0x1b8] sm:$0x11]
      %v229 = vld [vmem:[%s165 + $0x1c0] sm:$0x11]
      %v230 = vld [vmem:[%s165 + $0x1c8] sm:$0x11]
      %v231 = vld [vmem:[%s165 + $0x1d0] sm:$0x11]
      %v232 = vld [vmem:[%s165 + $0x1d8] sm:$0x11]
      %v233 = vld [vmem:[%s165 + $0x1e0] sm:$0x11]
      %v234 = vld [vmem:[%s165 + $0x1e8] sm:$0x11]
      %v235 = vld [vmem:[%s165 + $0x1f0] sm:$0x11]
      %v236 = vld [vmem:[%s165 + $0x1f8] sm:$0x11]
      %v301 = vunpack.c.l.b16 %v173
      %v302 = vunpack.c.h.b16 %v173
      %v303 = vunpack.c.l.b16 %v174
      %v304 = vunpack.c.h.b16 %v174
      %v305 = vunpack.c.l.b16 %v175
      %v306 = vunpack.c.h.b16 %v175
      %v307 = vunpack.c.l.b16 %v176
      %v308 = vunpack.c.h.b16 %v176
      %v309 = vunpack.c.l.b16 %v177
      %v310 = vunpack.c.h.b16 %v177
      %v311 = vunpack.c.l.b16 %v178
      %v312 = vunpack.c.h.b16 %v178
      %v313 = vunpack.c.l.b16 %v179
      %v314 = vunpack.c.h.b16 %v179
      %v315 = vunpack.c.l.b16 %v180
      %v316 = vunpack.c.h.b16 %v180
      %v317 = vunpack.c.l.b16 %v181
      %v318 = vunpack.c.h.b16 %v181
      %v319 = vunpack.c.l.b16 %v182
      %v320 = vunpack.c.h.b16 %v182
      %v321 = vunpack.c.l.b16 %v183
      %v322 = vunpack.c.h.b16 %v183
      %v323 = vunpack.c.l.b16 %v184
      %v324 = vunpack.c.h.b16 %v184
      %v325 = vunpack.c.l.b16 %v185
      %v326 = vunpack.c.h.b16 %v185
      %v327 = vunpack.c.l.b16 %v186
      %v328 = vunpack.c.h.b16 %v186
      %v329 = vunpack.c.l.b16 %v187
      %v330 = vunpack.c.h.b16 %v187
      %v331 = vunpack.c.l.b16 %v188
      %v332 = vunpack.c.h.b16 %v188
      %v333 = vunpack.c.l.b16 %v189
      %v334 = vunpack.c.h.b16 %v189
      %v335 = vunpack.c.l.b16 %v190
      %v336 = vunpack.c.h.b16 %v190
      %v337 = vunpack.c.l.b16 %v191
      %v338 = vunpack.c.h.b16 %v191
      %v339 = vunpack.c.l.b16 %v192
      %v340 = vunpack.c.h.b16 %v192
      %v341 = vunpack.c.l.b16 %v193
      %v342 = vunpack.c.h.b16 %v193
      %v343 = vunpack.c.l.b16 %v194
      %v344 = vunpack.c.h.b16 %v194
      %v345 = vunpack.c.l.b16 %v195
      %v346 = vunpack.c.h.b16 %v195
      %v347 = vunpack.c.l.b16 %v196
      %v348 = vunpack.c.h.b16 %v196
      %v349 = vunpack.c.l.b16 %v197
      %v350 = vunpack.c.h.b16 %v197
      %v351 = vunpack.c.l.b16 %v198
      %v352 = vunpack.c.h.b16 %v198
      %v353 = vunpack.c.l.b16 %v199
      %v354 = vunpack.c.h.b16 %v199
      %v355 = vunpack.c.l.b16 %v200
      %v356 = vunpack.c.h.b16 %v200
      %v357 = vunpack.c.l.b16 %v201
      %v358 = vunpack.c.h.b16 %v201
      %v359 = vunpack.c.l.b16 %v202
      %v360 = vunpack.c.h.b16 %v202
      %v361 = vunpack.c.l.b16 %v203
      %v362 = vunpack.c.h.b16 %v203
      %v363 = vunpack.c.l.b16 %v204
      %v364 = vunpack.c.h.b16 %v204
      %v365 = vunpack.c.l.b16 %v205
      %v366 = vunpack.c.h.b16 %v205
      %v367 = vunpack.c.l.b16 %v206
      %v368 = vunpack.c.h.b16 %v206
      %v369 = vunpack.c.l.b16 %v207
      %v370 = vunpack.c.h.b16 %v207
      %v371 = vunpack.c.l.b16 %v208
      %v372 = vunpack.c.h.b16 %v208
      %v373 = vunpack.c.l.b16 %v209
      %v374 = vunpack.c.h.b16 %v209
      %v375 = vunpack.c.l.b16 %v210
      %v376 = vunpack.c.h.b16 %v210
      %v377 = vunpack.c.l.b16 %v211
      %v378 = vunpack.c.h.b16 %v211
      %v379 = vunpack.c.l.b16 %v212
      %v380 = vunpack.c.h.b16 %v212
      %v381 = vunpack.c.l.b16 %v213
      %v382 = vunpack.c.h.b16 %v213
      %v383 = vunpack.c.l.b16 %v214
      %v384 = vunpack.c.h.b16 %v214
      %v385 = vunpack.c.l.b16 %v215
      %v386 = vunpack.c.h.b16 %v215
      %v387 = vunpack.c.l.b16 %v216
      %v388 = vunpack.c.h.b16 %v216
      %v389 = vunpack.c.l.b16 %v217
      %v390 = vunpack.c.h.b16 %v217
      %v391 = vunpack.c.l.b16 %v218
      %v392 = vunpack.c.h.b16 %v218
      %v393 = vunpack.c.l.b16 %v219
      %v394 = vunpack.c.h.b16 %v219
      %v395 = vunpack.c.l.b16 %v220
      %v396 = vunpack.c.h.b16 %v220
      %v397 = vunpack.c.l.b16 %v221
      %v398 = vunpack.c.h.b16 %v221
      %v399 = vunpack.c.l.b16 %v222
      %v400 = vunpack.c.h.b16 %v222
      %v401 = vunpack.c.l.b16 %v223
      %v402 = vunpack.c.h.b16 %v223
      %v403 = vunpack.c.l.b16 %v224
      %v404 = vunpack.c.h.b16 %v224
      %v405 = vunpack.c.l.b16 %v225
      %v406 = vunpack.c.h.b16 %v225
      %v407 = vunpack.c.l.b16 %v226
      %v408 = vunpack.c.h.b16 %v226
      %v409 = vunpack.c.l.b16 %v227
      %v410 = vunpack.c.h.b16 %v227
      %v411 = vunpack.c.l.b16 %v228
      %v412 = vunpack.c.h.b16 %v228
      %v413 = vunpack.c.l.b16 %v229
      %v414 = vunpack.c.h.b16 %v229
      %v415 = vunpack.c.l.b16 %v230
      %v416 = vunpack.c.h.b16 %v230
      %v417 = vunpack.c.l.b16 %v231
      %v418 = vunpack.c.h.b16 %v231
      %v419 = vunpack.c.l.b16 %v232
      %v420 = vunpack.c.h.b16 %v232
      %v421 = vunpack.c.l.b16 %v233
      %v422 = vunpack.c.h.b16 %v233
      %v423 = vunpack.c.l.b16 %v234
      %v424 = vunpack.c.h.b16 %v234
      %v425 = vunpack.c.l.b16 %v235
      %v426 = vunpack.c.h.b16 %v235
      %v427 = vunpack.c.l.b16 %v236
      %v428 = vunpack.c.h.b16 %v236
      %v429 = vpack.c.b16 %v365, %v301
      %v430 = vpack.c.b16 %v366, %v302
      %v431 = vpack.c.b16 %v367, %v303
      %v432 = vpack.c.b16 %v368, %v304
      %v433 = vpack.c.b16 %v369, %v305
      %v434 = vpack.c.b16 %v370, %v306
      %v435 = vpack.c.b16 %v371, %v307
      %v436 = vpack.c.b16 %v372, %v308
      %v437 = vpack.c.b16 %v373, %v309
      %v438 = vpack.c.b16 %v374, %v310
      %v439 = vpack.c.b16 %v375, %v311
      %v440 = vpack.c.b16 %v376, %v312
      %v441 = vpack.c.b16 %v377, %v313
      %v442 = vpack.c.b16 %v378, %v314
      %v443 = vpack.c.b16 %v379, %v315
      %v444 = vpack.c.b16 %v380, %v316
      %v445 = vpack.c.b16 %v381, %v317
      %v446 = vpack.c.b16 %v382, %v318
      %v447 = vpack.c.b16 %v383, %v319
      %v448 = vpack.c.b16 %v384, %v320
      %v449 = vpack.c.b16 %v385, %v321
      %v450 = vpack.c.b16 %v386, %v322
      %v451 = vpack.c.b16 %v387, %v323
      %v452 = vpack.c.b16 %v388, %v324
      %v453 = vpack.c.b16 %v389, %v325
      %v454 = vpack.c.b16 %v390, %v326
      %v455 = vpack.c.b16 %v391, %v327
      %v456 = vpack.c.b16 %v392, %v328
      %v457 = vpack.c.b16 %v393, %v329
      %v458 = vpack.c.b16 %v394, %v330
      %v459 = vpack.c.b16 %v395, %v331
      %v460 = vpack.c.b16 %v396, %v332
      %v461 = vpack.c.b16 %v397, %v333
      %v462 = vpack.c.b16 %v398, %v334
      %v463 = vpack.c.b16 %v399, %v335
      %v464 = vpack.c.b16 %v400, %v336
      %v465 = vpack.c.b16 %v401, %v337
      %v466 = vpack.c.b16 %v402, %v338
      %v467 = vpack.c.b16 %v403, %v339
      %v468 = vpack.c.b16 %v404, %v340
      %v469 = vpack.c.b16 %v405, %v341
      %v470 = vpack.c.b16 %v406, %v342
      %v471 = vpack.c.b16 %v407, %v343
      %v472 = vpack.c.b16 %v408, %v344
      %v473 = vpack.c.b16 %v409, %v345
      %v474 = vpack.c.b16 %v410, %v346
      %v475 = vpack.c.b16 %v411, %v347
      %v476 = vpack.c.b16 %v412, %v348
      %v477 = vpack.c.b16 %v413, %v349
      %v478 = vpack.c.b16 %v414, %v350
      %v479 = vpack.c.b16 %v415, %v351
      %v480 = vpack.c.b16 %v416, %v352
      %v481 = vpack.c.b16 %v417, %v353
      %v482 = vpack.c.b16 %v418, %v354
      %v483 = vpack.c.b16 %v419, %v355
      %v484 = vpack.c.b16 %v420, %v356
      %v485 = vpack.c.b16 %v421, %v357
      %v486 = vpack.c.b16 %v422, %v358
      %v487 = vpack.c.b16 %v423, %v359
      %v488 = vpack.c.b16 %v424, %v360
      %v489 = vpack.c.b16 %v425, %v361
      %v490 = vpack.c.b16 %v426, %v362
      %v491 = vpack.c.b16 %v427, %v363
      %v492 = vpack.c.b16 %v428, %v364
      %vm493 = vcmask 72704
      %v495 = vsel %vm493, %v172, 0
      %vm497 = vcmask 1043456
      %vm498 = vcmask 1044480
      %v499 = vsel %vm497, 4294967295, 65535
      %v500 = vsel %vm498, %v499, 0
      %v502 = vand.u32 %v429, %v500
      %v505 = vand.u32 %v430, %v500
      %v508 = vand.u32 %v431, %v500
      %v511 = vand.u32 %v432, %v500
      %v514 = vand.u32 %v433, %v500
      %v517 = vand.u32 %v434, %v500
      %v520 = vand.u32 %v435, %v500
      %v523 = vand.u32 %v436, %v500
      %v526 = vand.u32 %v437, %v500
      %v529 = vand.u32 %v438, %v500
      %v532 = vand.u32 %v439, %v500
      %v535 = vand.u32 %v440, %v500
      %v538 = vand.u32 %v441, %v500
      %v541 = vand.u32 %v442, %v500
      %v544 = vand.u32 %v443, %v500
      %v547 = vand.u32 %v444, %v500
      %v550 = vand.u32 %v445, %v500
      %v553 = vand.u32 %v446, %v500
      %v556 = vand.u32 %v447, %v500
      %v559 = vand.u32 %v448, %v500
      %v562 = vand.u32 %v449, %v500
      %v565 = vand.u32 %v450, %v500
      %v568 = vand.u32 %v451, %v500
      %v571 = vand.u32 %v452, %v500
      %v574 = vand.u32 %v453, %v500
      %v577 = vand.u32 %v454, %v500
      %v580 = vand.u32 %v455, %v500
      %v583 = vand.u32 %v456, %v500
      %v586 = vand.u32 %v457, %v500
      %v589 = vand.u32 %v458, %v500
      %v592 = vand.u32 %v459, %v500
      %v595 = vand.u32 %v460, %v500
      %v598 = vand.u32 %v461, %v500
      %v601 = vand.u32 %v462, %v500
      %v604 = vand.u32 %v463, %v500
      %v607 = vand.u32 %v464, %v500
      %v610 = vand.u32 %v465, %v500
      %v613 = vand.u32 %v466, %v500
      %v616 = vand.u32 %v467, %v500
      %v619 = vand.u32 %v468, %v500
      %v622 = vand.u32 %v469, %v500
      %v625 = vand.u32 %v470, %v500
      %v628 = vand.u32 %v471, %v500
      %v631 = vand.u32 %v472, %v500
      %v634 = vand.u32 %v473, %v500
      %v637 = vand.u32 %v474, %v500
      %v640 = vand.u32 %v475, %v500
      %v643 = vand.u32 %v476, %v500
      %v646 = vand.u32 %v477, %v500
      %v649 = vand.u32 %v478, %v500
      %v652 = vand.u32 %v479, %v500
      %v655 = vand.u32 %v480, %v500
      %v658 = vand.u32 %v481, %v500
      %v661 = vand.u32 %v482, %v500
      %v664 = vand.u32 %v483, %v500
      %v667 = vand.u32 %v484, %v500
      %v670 = vand.u32 %v485, %v500
      %v673 = vand.u32 %v486, %v500
      %v676 = vand.u32 %v487, %v500
      %v679 = vand.u32 %v488, %v500
      %v682 = vand.u32 %v489, %v500
      %v685 = vand.u32 %v490, %v500
      %v688 = vand.u32 %v491, %v500
      %v691 = vand.u32 %v492, %v500
      %693 = vmatprep.subr.bf16.mxu0 0
      %694 = vmatpush1.bf16.msra.mxu0 0
      %695 = vmatprep.subr.bf16.mxu0 0
      %696 = vmatpush1.bf16.msra.mxu0 0
      %697 = vmatprep.subr.bf16.mxu0 0
      %698 = vmatpush1.bf16.msra.mxu0 0
      %699 = vmatprep.subr.bf16.mxu0 0
      %700 = vmatpush1.bf16.msra.mxu0 0
      %701 = vmatprep.subr.bf16.mxu0 0
      %702 = vmatpush1.bf16.msra.mxu0 0
      %703 = vmatprep.subr.bf16.mxu0 0
      %704 = vmatpush1.bf16.msra.mxu0 0
      %705 = vmatprep.subr.bf16.mxu0 0
      %706 = vmatpush1.bf16.msra.mxu0 0
      %707 = vmatprep.subr.bf16.mxu0 %v505
      %708 = vmatpush1.bf16.msra.mxu0 %v502
      %709 = vmatprep.subr.bf16.mxu0 0
      %710 = vmatpush2.bf16.msra.mxu0 0
      %711 = vmatprep.subr.bf16.mxu0 0
      %712 = vmatpush2.bf16.msra.mxu0 0
      %713 = vmatprep.subr.bf16.mxu0 0
      %714 = vmatpush2.bf16.msra.mxu0 0
      %715 = vmatprep.subr.bf16.mxu0 0
      %716 = vmatpush2.bf16.msra.mxu0 0
      %717 = vmatprep.subr.bf16.mxu0 0
      %718 = vmatpush2.bf16.msra.mxu0 0
      %719 = vmatprep.subr.bf16.mxu0 0
      %720 = vmatpush2.bf16.msra.mxu0 0
      %721 = vmatprep.subr.bf16.mxu0 0
      %722 = vmatpush2.bf16.msra.mxu0 0
      %723 = vmatprep.subr.bf16.mxu0 0
      %724 = vmatpush2.bf16.msra.mxu0 0
      %725 = vmatprep.mubr.bf16.mxu0 0
      %726 = vmatmul.mubr.bf16.gmra.mxu0 %v495
      %v727 = vpop.f32.mrf.mxu0
      %v728 = vadd.f32 0.0, %v727
      %v729 = vpop.f32.mrf.mxu0
      %v730 = vadd.f32 0.0, %v729
      %v731 = vpop.f32.mrf.mxu0
      %v732 = vpop.f32.mrf.mxu0
      %733 = vdwg.mxu0
      %734 = vmatprep.subr.bf16.mxu0 0
      %735 = vmatpush1.bf16.msra.mxu0 0
      %736 = vmatprep.subr.bf16.mxu0 0
      %737 = vmatpush1.bf16.msra.mxu0 0
      %738 = vmatprep.subr.bf16.mxu0 0
      %739 = vmatpush1.bf16.msra.mxu0 0
      %740 = vmatprep.subr.bf16.mxu0 0
      %741 = vmatpush1.bf16.msra.mxu0 0
      %742 = vmatprep.subr.bf16.mxu0 0
      %743 = vmatpush1.bf16.msra.mxu0 0
      %744 = vmatprep.subr.bf16.mxu0 0
      %745 = vmatpush1.bf16.msra.mxu0 0
      %746 = vmatprep.subr.bf16.mxu0 0
      %747 = vmatpush1.bf16.msra.mxu0 0
      %748 = vmatprep.subr.bf16.mxu0 %v511
      %749 = vmatpush1.bf16.msra.mxu0 %v508
      %750 = vmatprep.subr.bf16.mxu0 0
      %751 = vmatpush2.bf16.msra.mxu0 0
      %752 = vmatprep.subr.bf16.mxu0 0
      %753 = vmatpush2.bf16.msra.mxu0 0
      %754 = vmatprep.subr.bf16.mxu0 0
      %755 = vmatpush2.bf16.msra.mxu0 0
      %756 = vmatprep.subr.bf16.mxu0 0
      %757 = vmatpush2.bf16.msra.mxu0 0
      %758 = vmatprep.subr.bf16.mxu0 0
      %759 = vmatpush2.bf16.msra.mxu0 0
      %760 = vmatprep.subr.bf16.mxu0 0
      %761 = vmatpush2.bf16.msra.mxu0 0
      %762 = vmatprep.subr.bf16.mxu0 0
      %763 = vmatpush2.bf16.msra.mxu0 0
      %764 = vmatprep.subr.bf16.mxu0 0
      %765 = vmatpush2.bf16.msra.mxu0 0
      %766 = vmatprep.mubr.bf16.mxu0 0
      %767 = vmatmul.mubr.bf16.gmra.mxu0 %v495
      %v768 = vpop.f32.mrf.mxu0
      %v769 = vadd.f32 0.0, %v768
      %v770 = vpop.f32.mrf.mxu0
      %v771 = vadd.f32 0.0, %v770
      %v772 = vpop.f32.mrf.mxu0
      %v773 = vpop.f32.mrf.mxu0
      %774 = vdwg.mxu0
      %775 = vmatprep.subr.bf16.mxu0 0
      %776 = vmatpush1.bf16.msra.mxu0 0
      %777 = vmatprep.subr.bf16.mxu0 0
      %778 = vmatpush1.bf16.msra.mxu0 0
      %779 = vmatprep.subr.bf16.mxu0 0
      %780 = vmatpush1.bf16.msra.mxu0 0
      %781 = vmatprep.subr.bf16.mxu0 0
      %782 = vmatpush1.bf16.msra.mxu0 0
      %783 = vmatprep.subr.bf16.mxu0 0
      %784 = vmatpush1.bf16.msra.mxu0 0
      %785 = vmatprep.subr.bf16.mxu0 0
      %786 = vmatpush1.bf16.msra.mxu0 0
      %787 = vmatprep.subr.bf16.mxu0 0
      %788 = vmatpush1.bf16.msra.mxu0 0
      %789 = vmatprep.subr.bf16.mxu0 %v517
      %790 = vmatpush1.bf16.msra.mxu0 %v514
      %791 = vmatprep.subr.bf16.mxu0 0
      %792 = vmatpush2.bf16.msra.mxu0 0
      %793 = vmatprep.subr.bf16.mxu0 0
      %794 = vmatpush2.bf16.msra.mxu0 0
      %795 = vmatprep.subr.bf16.mxu0 0
      %796 = vmatpush2.bf16.msra.mxu0 0
      %797 = vmatprep.subr.bf16.mxu0 0
      %798 = vmatpush2.bf16.msra.mxu0 0
      %799 = vmatprep.subr.bf16.mxu0 0
      %800 = vmatpush2.bf16.msra.mxu0 0
      %801 = vmatprep.subr.bf16.mxu0 0
      %802 = vmatpush2.bf16.msra.mxu0 0
      %803 = vmatprep.subr.bf16.mxu0 0
      %804 = vmatpush2.bf16.msra.mxu0 0
      %805 = vmatprep.subr.bf16.mxu0 0
      %806 = vmatpush2.bf16.msra.mxu0 0
      %807 = vmatprep.mubr.bf16.mxu0 0
      %808 = vmatmul.mubr.bf16.gmra.mxu0 %v495
      %v809 = vpop.f32.mrf.mxu0
      %v810 = vadd.f32 0.0, %v809
      %v811 = vpop.f32.mrf.mxu0
      %v812 = vadd.f32 0.0, %v811
      %v813 = vpop.f32.mrf.mxu0
      %v814 = vpop.f32.mrf.mxu0
      %815 = vdwg.mxu0
      %816 = vmatprep.subr.bf16.mxu0 0
      %817 = vmatpush1.bf16.msra.mxu0 0
      %818 = vmatprep.subr.bf16.mxu0 0
      %819 = vmatpush1.bf16.msra.mxu0 0
      %820 = vmatprep.subr.bf16.mxu0 0
      %821 = vmatpush1.bf16.msra.mxu0 0
      %822 = vmatprep.subr.bf16.mxu0 0
      %823 = vmatpush1.bf16.msra.mxu0 0
      %824 = vmatprep.subr.bf16.mxu0 0
      %825 = vmatpush1.bf16.msra.mxu0 0
      %826 = vmatprep.subr.bf16.mxu0 0
      %827 = vmatpush1.bf16.msra.mxu0 0
      %828 = vmatprep.subr.bf16.mxu0 0
      %829 = vmatpush1.bf16.msra.mxu0 0
      %830 = vmatprep.subr.bf16.mxu0 %v523
      %831 = vmatpush1.bf16.msra.mxu0 %v520
      %832 = vmatprep.subr.bf16.mxu0 0
      %833 = vmatpush2.bf16.msra.mxu0 0
      %834 = vmatprep.subr.bf16.mxu0 0
      %835 = vmatpush2.bf16.msra.mxu0 0
      %836 = vmatprep.subr.bf16.mxu0 0
      %837 = vmatpush2.bf16.msra.mxu0 0
      %838 = vmatprep.subr.bf16.mxu0 0
      %839 = vmatpush2.bf16.msra.mxu0 0
      %840 = vmatprep.subr.bf16.mxu0 0
      %841 = vmatpush2.bf16.msra.mxu0 0
      %842 = vmatprep.subr.bf16.mxu0 0
      %843 = vmatpush2.bf16.msra.mxu0 0
      %844 = vmatprep.subr.bf16.mxu0 0
      %845 = vmatpush2.bf16.msra.mxu0 0
      %846 = vmatprep.subr.bf16.mxu0 0
      %847 = vmatpush2.bf16.msra.mxu0 0
      %848 = vmatprep.mubr.bf16.mxu0 0
      %849 = vmatmul.mubr.bf16.gmra.mxu0 %v495
      %v850 = vpop.f32.mrf.mxu0
      %v851 = vadd.f32 0.0, %v850
      %v852 = vpop.f32.mrf.mxu0
      %v853 = vadd.f32 0.0, %v852
      %v854 = vpop.f32.mrf.mxu0
      %v855 = vpop.f32.mrf.mxu0
      %856 = vdwg.mxu0
      %857 = vmatprep.subr.bf16.mxu0 0
      %858 = vmatpush1.bf16.msra.mxu0 0
      %859 = vmatprep.subr.bf16.mxu0 0
      %860 = vmatpush1.bf16.msra.mxu0 0
      %861 = vmatprep.subr.bf16.mxu0 0
      %862 = vmatpush1.bf16.msra.mxu0 0
      %863 = vmatprep.subr.bf16.mxu0 0
      %864 = vmatpush1.bf16.msra.mxu0 0
      %865 = vmatprep.subr.bf16.mxu0 0
      %866 = vmatpush1.bf16.msra.mxu0 0
      %867 = vmatprep.subr.bf16.mxu0 0
      %868 = vmatpush1.bf16.msra.mxu0 0
      %869 = vmatprep.subr.bf16.mxu0 0
      %870 = vmatpush1.bf16.msra.mxu0 0
      %871 = vmatprep.subr.bf16.mxu0 %v529
      %872 = vmatpush1.bf16.msra.mxu0 %v526
      %873 = vmatprep.subr.bf16.mxu0 0
      %874 = vmatpush2.bf16.msra.mxu0 0
      %875 = vmatprep.subr.bf16.mxu0 0
      %876 = vmatpush2.bf16.msra.mxu0 0
      %877 = vmatprep.subr.bf16.mxu0 0
      %878 = vmatpush2.bf16.msra.mxu0 0
      %879 = vmatprep.subr.bf16.mxu0 0
      %880 = vmatpush2.bf16.msra.mxu0 0
      %881 = vmatprep.subr.bf16.mxu0 0
      %882 = vmatpush2.bf16.msra.mxu0 0
      %883 = vmatprep.subr.bf16.mxu0 0
      %884 = vmatpush2.bf16.msra.mxu0 0
      %885 = vmatprep.subr.bf16.mxu0 0
      %886 = vmatpush2.bf16.msra.mxu0 0
      %887 = vmatprep.subr.bf16.mxu0 0
      %888 = vmatpush2.bf16.msra.mxu0 0
      %889 = vmatprep.mubr.bf16.mxu0 0
      %890 = vmatmul.mubr.bf16.gmra.mxu0 %v495
      %v891 = vpop.f32.mrf.mxu0
      %v892 = vadd.f32 0.0, %v891
      %v893 = vpop.f32.mrf.mxu0
      %v894 = vadd.f32 0.0, %v893
      %v895 = vpop.f32.mrf.mxu0
      %v896 = vpop.f32.mrf.mxu0
      %897 = vdwg.mxu0
      %898 = vmatprep.subr.bf16.mxu0 0
      %899 = vmatpush1.bf16.msra.mxu0 0
      %900 = vmatprep.subr.bf16.mxu0 0
      %901 = vmatpush1.bf16.msra.mxu0 0
      %902 = vmatprep.subr.bf16.mxu0 0
      %903 = vmatpush1.bf16.msra.mxu0 0
      %904 = vmatprep.subr.bf16.mxu0 0
      %905 = vmatpush1.bf16.msra.mxu0 0
      %906 = vmatprep.subr.bf16.mxu0 0
      %907 = vmatpush1.bf16.msra.mxu0 0
      %908 = vmatprep.subr.bf16.mxu0 0
      %909 = vmatpush1.bf16.msra.mxu0 0
      %910 = vmatprep.subr.bf16.mxu0 0
      %911 = vmatpush1.bf16.msra.mxu0 0
      %912 = vmatprep.subr.bf16.mxu0 %v535
      %913 = vmatpush1.bf16.msra.mxu0 %v532
      %914 = vmatprep.subr.bf16.mxu0 0
      %915 = vmatpush2.bf16.msra.mxu0 0
      %916 = vmatprep.subr.bf16.mxu0 0
      %917 = vmatpush2.bf16.msra.mxu0 0
      %918 = vmatprep.subr.bf16.mxu0 0
      %919 = vmatpush2.bf16.msra.mxu0 0
      %920 = vmatprep.subr.bf16.mxu0 0
      %921 = vmatpush2.bf16.msra.mxu0 0
      %922 = vmatprep.subr.bf16.mxu0 0
      %923 = vmatpush2.bf16.msra.mxu0 0
      %924 = vmatprep.subr.bf16.mxu0 0
      %925 = vmatpush2.bf16.msra.mxu0 0
      %926 = vmatprep.subr.bf16.mxu0 0
      %927 = vmatpush2.bf16.msra.mxu0 0
      %928 = vmatprep.subr.bf16.mxu0 0
      %929 = vmatpush2.bf16.msra.mxu0 0
      %930 = vmatprep.mubr.bf16.mxu0 0
      %931 = vmatmul.mubr.bf16.gmra.mxu0 %v495
      %v932 = vpop.f32.mrf.mxu0
      %v933 = vadd.f32 0.0, %v932
      %v934 = vpop.f32.mrf.mxu0
      %v935 = vadd.f32 0.0, %v934
      %v936 = vpop.f32.mrf.mxu0
      %v937 = vpop.f32.mrf.mxu0
      %938 = vdwg.mxu0
      %939 = vmatprep.subr.bf16.mxu0 0
      %940 = vmatpush1.bf16.msra.mxu0 0
      %941 = vmatprep.subr.bf16.mxu0 0
      %942 = vmatpush1.bf16.msra.mxu0 0
      %943 = vmatprep.subr.bf16.mxu0 0
      %944 = vmatpush1.bf16.msra.mxu0 0
      %945 = vmatprep.subr.bf16.mxu0 0
      %946 = vmatpush1.bf16.msra.mxu0 0
      %947 = vmatprep.subr.bf16.mxu0 0
      %948 = vmatpush1.bf16.msra.mxu0 0
      %949 = vmatprep.subr.bf16.mxu0 0
      %950 = vmatpush1.bf16.msra.mxu0 0
      %951 = vmatprep.subr.bf16.mxu0 0
      %952 = vmatpush1.bf16.msra.mxu0 0
      %953 = vmatprep.subr.bf16.mxu0 %v541
      %954 = vmatpush1.bf16.msra.mxu0 %v538
      %955 = vmatprep.subr.bf16.mxu0 0
      %956 = vmatpush2.bf16.msra.mxu0 0
      %957 = vmatprep.subr.bf16.mxu0 0
      %958 = vmatpush2.bf16.msra.mxu0 0
      %959 = vmatprep.subr.bf16.mxu0 0
      %960 = vmatpush2.bf16.msra.mxu0 0
      %961 = vmatprep.subr.bf16.mxu0 0
      %962 = vmatpush2.bf16.msra.mxu0 0
      %963 = vmatprep.subr.bf16.mxu0 0
      %964 = vmatpush2.bf16.msra.mxu0 0
      %965 = vmatprep.subr.bf16.mxu0 0
      %966 = vmatpush2.bf16.msra.mxu0 0
      %967 = vmatprep.subr.bf16.mxu0 0
      %968 = vmatpush2.bf16.msra.mxu0 0
      %969 = vmatprep.subr.bf16.mxu0 0
      %970 = vmatpush2.bf16.msra.mxu0 0
      %971 = vmatprep.mubr.bf16.mxu0 0
      %972 = vmatmul.mubr.bf16.gmra.mxu0 %v495
      %v973 = vpop.f32.mrf.mxu0
      %v974 = vadd.f32 0.0, %v973
      %v975 = vpop.f32.mrf.mxu0
      %v976 = vadd.f32 0.0, %v975
      %v977 = vpop.f32.mrf.mxu0
      %v978 = vpop.f32.mrf.mxu0
      %979 = vdwg.mxu0
      %980 = vmatprep.subr.bf16.mxu0 0
      %981 = vmatpush1.bf16.msra.mxu0 0
      %982 = vmatprep.subr.bf16.mxu0 0
      %983 = vmatpush1.bf16.msra.mxu0 0
      %984 = vmatprep.subr.bf16.mxu0 0
      %985 = vmatpush1.bf16.msra.mxu0 0
      %986 = vmatprep.subr.bf16.mxu0 0
      %987 = vmatpush1.bf16.msra.mxu0 0
      %988 = vmatprep.subr.bf16.mxu0 0
      %989 = vmatpush1.bf16.msra.mxu0 0
      %990 = vmatprep.subr.bf16.mxu0 0
      %991 = vmatpush1.bf16.msra.mxu0 0
      %992 = vmatprep.subr.bf16.mxu0 0
      %993 = vmatpush1.bf16.msra.mxu0 0
      %994 = vmatprep.subr.bf16.mxu0 %v547
      %995 = vmatpush1.bf16.msra.mxu0 %v544
      %996 = vmatprep.subr.bf16.mxu0 0
      %997 = vmatpush2.bf16.msra.mxu0 0
      %998 = vmatprep.subr.bf16.mxu0 0
      %999 = vmatpush2.bf16.msra.mxu0 0
      %1000 = vmatprep.subr.bf16.mxu0 0
      %1001 = vmatpush2.bf16.msra.mxu0 0
      %1002 = vmatprep.subr.bf16.mxu0 0
      %1003 = vmatpush2.bf16.msra.mxu0 0
      %1004 = vmatprep.subr.bf16.mxu0 0
      %1005 = vmatpush2.bf16.msra.mxu0 0
      %1006 = vmatprep.subr.bf16.mxu0 0
      %1007 = vmatpush2.bf16.msra.mxu0 0
      %1008 = vmatprep.subr.bf16.mxu0 0
      %1009 = vmatpush2.bf16.msra.mxu0 0
      %1010 = vmatprep.subr.bf16.mxu0 0
      %1011 = vmatpush2.bf16.msra.mxu0 0
      %1012 = vmatprep.mubr.bf16.mxu0 0
      %1013 = vmatmul.mubr.bf16.gmra.mxu0 %v495
      %v1014 = vpop.f32.mrf.mxu0
      %v1015 = vadd.f32 0.0, %v1014
      %v1016 = vpop.f32.mrf.mxu0
      %v1017 = vadd.f32 0.0, %v1016
      %v1018 = vpop.f32.mrf.mxu0
      %v1019 = vpop.f32.mrf.mxu0
      %1020 = vdwg.mxu0
      %1021 = vmatprep.subr.bf16.mxu0 0
      %1022 = vmatpush1.bf16.msra.mxu0 0
      %1023 = vmatprep.subr.bf16.mxu0 0
      %1024 = vmatpush1.bf16.msra.mxu0 0
      %1025 = vmatprep.subr.bf16.mxu0 0
      %1026 = vmatpush1.bf16.msra.mxu0 0
      %1027 = vmatprep.subr.bf16.mxu0 0
      %1028 = vmatpush1.bf16.msra.mxu0 0
      %1029 = vmatprep.subr.bf16.mxu0 0
      %1030 = vmatpush1.bf16.msra.mxu0 0
      %1031 = vmatprep.subr.bf16.mxu0 0
      %1032 = vmatpush1.bf16.msra.mxu0 0
      %1033 = vmatprep.subr.bf16.mxu0 0
      %1034 = vmatpush1.bf16.msra.mxu0 0
      %1035 = vmatprep.subr.bf16.mxu0 %v553
      %1036 = vmatpush1.bf16.msra.mxu0 %v550
      %1037 = vmatprep.subr.bf16.mxu0 0
      %1038 = vmatpush2.bf16.msra.mxu0 0
      %1039 = vmatprep.subr.bf16.mxu0 0
      %1040 = vmatpush2.bf16.msra.mxu0 0
      %1041 = vmatprep.subr.bf16.mxu0 0
      %1042 = vmatpush2.bf16.msra.mxu0 0
      %1043 = vmatprep.subr.bf16.mxu0 0
      %1044 = vmatpush2.bf16.msra.mxu0 0
      %1045 = vmatprep.subr.bf16.mxu0 0
      %1046 = vmatpush2.bf16.msra.mxu0 0
      %1047 = vmatprep.subr.bf16.mxu0 0
      %1048 = vmatpush2.bf16.msra.mxu0 0
      %1049 = vmatprep.subr.bf16.mxu0 0
      %1050 = vmatpush2.bf16.msra.mxu0 0
      %1051 = vmatprep.subr.bf16.mxu0 0
      %1052 = vmatpush2.bf16.msra.mxu0 0
      %1053 = vmatprep.mubr.bf16.mxu0 0
      %1054 = vmatmul.mubr.bf16.gmra.mxu0 %v495
      %v1055 = vpop.f32.mrf.mxu0
      %v1056 = vadd.f32 0.0, %v1055
      %v1057 = vpop.f32.mrf.mxu0
      %v1058 = vadd.f32 0.0, %v1057
      %v1059 = vpop.f32.mrf.mxu0
      %v1060 = vpop.f32.mrf.mxu0
      %1061 = vdwg.mxu0
      %1062 = vmatprep.subr.bf16.mxu0 0
      %1063 = vmatpush1.bf16.msra.mxu0 0
      %1064 = vmatprep.subr.bf16.mxu0 0
      %1065 = vmatpush1.bf16.msra.mxu0 0
      %1066 = vmatprep.subr.bf16.mxu0 0
      %1067 = vmatpush1.bf16.msra.mxu0 0
      %1068 = vmatprep.subr.bf16.mxu0 0
      %1069 = vmatpush1.bf16.msra.mxu0 0
      %1070 = vmatprep.subr.bf16.mxu0 0
      %1071 = vmatpush1.bf16.msra.mxu0 0
      %1072 = vmatprep.subr.bf16.mxu0 0
      %1073 = vmatpush1.bf16.msra.mxu0 0
      %1074 = vmatprep.subr.bf16.mxu0 0
      %1075 = vmatpush1.bf16.msra.mxu0 0
      %1076 = vmatprep.subr.bf16.mxu0 %v559
      %1077 = vmatpush1.bf16.msra.mxu0 %v556
      %1078 = vmatprep.subr.bf16.mxu0 0
      %1079 = vmatpush2.bf16.msra.mxu0 0
      %1080 = vmatprep.subr.bf16.mxu0 0
      %1081 = vmatpush2.bf16.msra.mxu0 0
      %1082 = vmatprep.subr.bf16.mxu0 0
      %1083 = vmatpush2.bf16.msra.mxu0 0
      %1084 = vmatprep.subr.bf16.mxu0 0
      %1085 = vmatpush2.bf16.msra.mxu0 0
      %1086 = vmatprep.subr.bf16.mxu0 0
      %1087 = vmatpush2.bf16.msra.mxu0 0
      %1088 = vmatprep.subr.bf16.mxu0 0
      %1089 = vmatpush2.bf16.msra.mxu0 0
      %1090 = vmatprep.subr.bf16.mxu0 0
      %1091 = vmatpush2.bf16.msra.mxu0 0
      %1092 = vmatprep.subr.bf16.mxu0 0
      %1093 = vmatpush2.bf16.msra.mxu0 0
      %1094 = vmatprep.mubr.bf16.mxu0 0
      %1095 = vmatmul.mubr.bf16.gmra.mxu0 %v495
      %v1096 = vpop.f32.mrf.mxu0
      %v1097 = vadd.f32 0.0, %v1096
      %v1098 = vpop.f32.mrf.mxu0
      %v1099 = vadd.f32 0.0, %v1098
      %v1100 = vpop.f32.mrf.mxu0
      %v1101 = vpop.f32.mrf.mxu0
      %1102 = vdwg.mxu0
      %1103 = vmatprep.subr.bf16.mxu0 0
      %1104 = vmatpush1.bf16.msra.mxu0 0
      %1105 = vmatprep.subr.bf16.mxu0 0
      %1106 = vmatpush1.bf16.msra.mxu0 0
      %1107 = vmatprep.subr.bf16.mxu0 0
      %1108 = vmatpush1.bf16.msra.mxu0 0
      %1109 = vmatprep.subr.bf16.mxu0 0
      %1110 = vmatpush1.bf16.msra.mxu0 0
      %1111 = vmatprep.subr.bf16.mxu0 0
      %1112 = vmatpush1.bf16.msra.mxu0 0
      %1113 = vmatprep.subr.bf16.mxu0 0
      %1114 = vmatpush1.bf16.msra.mxu0 0
      %1115 = vmatprep.subr.bf16.mxu0 0
      %1116 = vmatpush1.bf16.msra.mxu0 0
      %1117 = vmatprep.subr.bf16.mxu0 %v565
      %1118 = vmatpush1.bf16.msra.mxu0 %v562
      %1119 = vmatprep.subr.bf16.mxu0 0
      %1120 = vmatpush2.bf16.msra.mxu0 0
      %1121 = vmatprep.subr.bf16.mxu0 0
      %1122 = vmatpush2.bf16.msra.mxu0 0
      %1123 = vmatprep.subr.bf16.mxu0 0
      %1124 = vmatpush2.bf16.msra.mxu0 0
      %1125 = vmatprep.subr.bf16.mxu0 0
      %1126 = vmatpush2.bf16.msra.mxu0 0
      %1127 = vmatprep.subr.bf16.mxu0 0
      %1128 = vmatpush2.bf16.msra.mxu0 0
      %1129 = vmatprep.subr.bf16.mxu0 0
      %1130 = vmatpush2.bf16.msra.mxu0 0
      %1131 = vmatprep.subr.bf16.mxu0 0
      %1132 = vmatpush2.bf16.msra.mxu0 0
      %1133 = vmatprep.subr.bf16.mxu0 0
      %1134 = vmatpush2.bf16.msra.mxu0 0
      %1135 = vmatprep.mubr.bf16.mxu0 0
      %1136 = vmatmul.mubr.bf16.gmra.mxu0 %v495
      %v1137 = vpop.f32.mrf.mxu0
      %v1138 = vadd.f32 0.0, %v1137
      %v1139 = vpop.f32.mrf.mxu0
      %v1140 = vadd.f32 0.0, %v1139
      %v1141 = vpop.f32.mrf.mxu0
      %v1142 = vpop.f32.mrf.mxu0
      %1143 = vdwg.mxu0
      %1144 = vmatprep.subr.bf16.mxu0 0
      %1145 = vmatpush1.bf16.msra.mxu0 0
      %1146 = vmatprep.subr.bf16.mxu0 0
      %1147 = vmatpush1.bf16.msra.mxu0 0
      %1148 = vmatprep.subr.bf16.mxu0 0
      %1149 = vmatpush1.bf16.msra.mxu0 0
      %1150 = vmatprep.subr.bf16.mxu0 0
      %1151 = vmatpush1.bf16.msra.mxu0 0
      %1152 = vmatprep.subr.bf16.mxu0 0
      %1153 = vmatpush1.bf16.msra.mxu0 0
      %1154 = vmatprep.subr.bf16.mxu0 0
      %1155 = vmatpush1.bf16.msra.mxu0 0
      %1156 = vmatprep.subr.bf16.mxu0 0
      %1157 = vmatpush1.bf16.msra.mxu0 0
      %1158 = vmatprep.subr.bf16.mxu0 %v571
      %1159 = vmatpush1.bf16.msra.mxu0 %v568
      %1160 = vmatprep.subr.bf16.mxu0 0
      %1161 = vmatpush2.bf16.msra.mxu0 0
      %1162 = vmatprep.subr.bf16.mxu0 0
      %1163 = vmatpush2.bf16.msra.mxu0 0
      %1164 = vmatprep.subr.bf16.mxu0 0
      %1165 = vmatpush2.bf16.msra.mxu0 0
      %1166 = vmatprep.subr.bf16.mxu0 0
      %1167 = vmatpush2.bf16.msra.mxu0 0
      %1168 = vmatprep.subr.bf16.mxu0 0
      %1169 = vmatpush2.bf16.msra.mxu0 0
      %1170 = vmatprep.subr.bf16.mxu0 0
      %1171 = vmatpush2.bf16.msra.mxu0 0
      %1172 = vmatprep.subr.bf16.mxu0 0
      %1173 = vmatpush2.bf16.msra.mxu0 0
      %1174 = vmatprep.subr.bf16.mxu0 0
      %1175 = vmatpush2.bf16.msra.mxu0 0
      %1176 = vmatprep.mubr.bf16.mxu0 0
      %1177 = vmatmul.mubr.bf16.gmra.mxu0 %v495
      %v1178 = vpop.f32.mrf.mxu0
      %v1179 = vadd.f32 0.0, %v1178
      %v1180 = vpop.f32.mrf.mxu0
      %v1181 = vadd.f32 0.0, %v1180
      %v1182 = vpop.f32.mrf.mxu0
      %v1183 = vpop.f32.mrf.mxu0
      %1184 = vdwg.mxu0
      %1185 = vmatprep.subr.bf16.mxu0 0
      %1186 = vmatpush1.bf16.msra.mxu0 0
      %1187 = vmatprep.subr.bf16.mxu0 0
      %1188 = vmatpush1.bf16.msra.mxu0 0
      %1189 = vmatprep.subr.bf16.mxu0 0
      %1190 = vmatpush1.bf16.msra.mxu0 0
      %1191 = vmatprep.subr.bf16.mxu0 0
      %1192 = vmatpush1.bf16.msra.mxu0 0
      %1193 = vmatprep.subr.bf16.mxu0 0
      %1194 = vmatpush1.bf16.msra.mxu0 0
      %1195 = vmatprep.subr.bf16.mxu0 0
      %1196 = vmatpush1.bf16.msra.mxu0 0
      %1197 = vmatprep.subr.bf16.mxu0 0
      %1198 = vmatpush1.bf16.msra.mxu0 0
      %1199 = vmatprep.subr.bf16.mxu0 %v577
      %1200 = vmatpush1.bf16.msra.mxu0 %v574
      %1201 = vmatprep.subr.bf16.mxu0 0
      %1202 = vmatpush2.bf16.msra.mxu0 0
      %1203 = vmatprep.subr.bf16.mxu0 0
      %1204 = vmatpush2.bf16.msra.mxu0 0
      %1205 = vmatprep.subr.bf16.mxu0 0
      %1206 = vmatpush2.bf16.msra.mxu0 0
      %1207 = vmatprep.subr.bf16.mxu0 0
      %1208 = vmatpush2.bf16.msra.mxu0 0
      %1209 = vmatprep.subr.bf16.mxu0 0
      %1210 = vmatpush2.bf16.msra.mxu0 0
      %1211 = vmatprep.subr.bf16.mxu0 0
      %1212 = vmatpush2.bf16.msra.mxu0 0
      %1213 = vmatprep.subr.bf16.mxu0 0
      %1214 = vmatpush2.bf16.msra.mxu0 0
      %1215 = vmatprep.subr.bf16.mxu0 0
      %1216 = vmatpush2.bf16.msra.mxu0 0
      %1217 = vmatprep.mubr.bf16.mxu0 0
      %1218 = vmatmul.mubr.bf16.gmra.mxu0 %v495
      %v1219 = vpop.f32.mrf.mxu0
      %v1220 = vadd.f32 0.0, %v1219
      %v1221 = vpop.f32.mrf.mxu0
      %v1222 = vadd.f32 0.0, %v1221
      %v1223 = vpop.f32.mrf.mxu0
      %v1224 = vpop.f32.mrf.mxu0
      %1225 = vdwg.mxu0
      %1226 = vmatprep.subr.bf16.mxu0 0
      %1227 = vmatpush1.bf16.msra.mxu0 0
      %1228 = vmatprep.subr.bf16.mxu0 0
      %1229 = vmatpush1.bf16.msra.mxu0 0
      %1230 = vmatprep.subr.bf16.mxu0 0
      %1231 = vmatpush1.bf16.msra.mxu0 0
      %1232 = vmatprep.subr.bf16.mxu0 0
      %1233 = vmatpush1.bf16.msra.mxu0 0
      %1234 = vmatprep.subr.bf16.mxu0 0
      %1235 = vmatpush1.bf16.msra.mxu0 0
      %1236 = vmatprep.subr.bf16.mxu0 0
      %1237 = vmatpush1.bf16.msra.mxu0 0
      %1238 = vmatprep.subr.bf16.mxu0 0
      %1239 = vmatpush1.bf16.msra.mxu0 0
      %1240 = vmatprep.subr.bf16.mxu0 %v583
      %1241 = vmatpush1.bf16.msra.mxu0 %v580
      %1242 = vmatprep.subr.bf16.mxu0 0
      %1243 = vmatpush2.bf16.msra.mxu0 0
      %1244 = vmatprep.subr.bf16.mxu0 0
      %1245 = vmatpush2.bf16.msra.mxu0 0
      %1246 = vmatprep.subr.bf16.mxu0 0
      %1247 = vmatpush2.bf16.msra.mxu0 0
      %1248 = vmatprep.subr.bf16.mxu0 0
      %1249 = vmatpush2.bf16.msra.mxu0 0
      %1250 = vmatprep.subr.bf16.mxu0 0
      %1251 = vmatpush2.bf16.msra.mxu0 0
      %1252 = vmatprep.subr.bf16.mxu0 0
      %1253 = vmatpush2.bf16.msra.mxu0 0
      %1254 = vmatprep.subr.bf16.mxu0 0
      %1255 = vmatpush2.bf16.msra.mxu0 0
      %1256 = vmatprep.subr.bf16.mxu0 0
      %1257 = vmatpush2.bf16.msra.mxu0 0
      %1258 = vmatprep.mubr.bf16.mxu0 0
      %1259 = vmatmul.mubr.bf16.gmra.mxu0 %v495
      %v1260 = vpop.f32.mrf.mxu0
      %v1261 = vadd.f32 0.0, %v1260
      %v1262 = vpop.f32.mrf.mxu0
      %v1263 = vadd.f32 0.0, %v1262
      %v1264 = vpop.f32.mrf.mxu0
      %v1265 = vpop.f32.mrf.mxu0
      %1266 = vdwg.mxu0
      %1267 = vmatprep.subr.bf16.mxu0 0
      %1268 = vmatpush1.bf16.msra.mxu0 0
      %1269 = vmatprep.subr.bf16.mxu0 0
      %1270 = vmatpush1.bf16.msra.mxu0 0
      %1271 = vmatprep.subr.bf16.mxu0 0
      %1272 = vmatpush1.bf16.msra.mxu0 0
      %1273 = vmatprep.subr.bf16.mxu0 0
      %1274 = vmatpush1.bf16.msra.mxu0 0
      %1275 = vmatprep.subr.bf16.mxu0 0
      %1276 = vmatpush1.bf16.msra.mxu0 0
      %1277 = vmatprep.subr.bf16.mxu0 0
      %1278 = vmatpush1.bf16.msra.mxu0 0
      %1279 = vmatprep.subr.bf16.mxu0 0
      %1280 = vmatpush1.bf16.msra.mxu0 0
      %1281 = vmatprep.subr.bf16.mxu0 %v589
      %1282 = vmatpush1.bf16.msra.mxu0 %v586
      %1283 = vmatprep.subr.bf16.mxu0 0
      %1284 = vmatpush2.bf16.msra.mxu0 0
      %1285 = vmatprep.subr.bf16.mxu0 0
      %1286 = vmatpush2.bf16.msra.mxu0 0
      %1287 = vmatprep.subr.bf16.mxu0 0
      %1288 = vmatpush2.bf16.msra.mxu0 0
      %1289 = vmatprep.subr.bf16.mxu0 0
      %1290 = vmatpush2.bf16.msra.mxu0 0
      %1291 = vmatprep.subr.bf16.mxu0 0
      %1292 = vmatpush2.bf16.msra.mxu0 0
      %1293 = vmatprep.subr.bf16.mxu0 0
      %1294 = vmatpush2.bf16.msra.mxu0 0
      %1295 = vmatprep.subr.bf16.mxu0 0
      %1296 = vmatpush2.bf16.msra.mxu0 0
      %1297 = vmatprep.subr.bf16.mxu0 0
      %1298 = vmatpush2.bf16.msra.mxu0 0
      %1299 = vmatprep.mubr.bf16.mxu0 0
      %1300 = vmatmul.mubr.bf16.gmra.mxu0 %v495
      %v1301 = vpop.f32.mrf.mxu0
      %v1302 = vadd.f32 0.0, %v1301
      %v1303 = vpop.f32.mrf.mxu0
      %v1304 = vadd.f32 0.0, %v1303
      %v1305 = vpop.f32.mrf.mxu0
      %v1306 = vpop.f32.mrf.mxu0
      %1307 = vdwg.mxu0
      %1308 = vmatprep.subr.bf16.mxu0 0
      %1309 = vmatpush1.bf16.msra.mxu0 0
      %1310 = vmatprep.subr.bf16.mxu0 0
      %1311 = vmatpush1.bf16.msra.mxu0 0
      %1312 = vmatprep.subr.bf16.mxu0 0
      %1313 = vmatpush1.bf16.msra.mxu0 0
      %1314 = vmatprep.subr.bf16.mxu0 0
      %1315 = vmatpush1.bf16.msra.mxu0 0
      %1316 = vmatprep.subr.bf16.mxu0 0
      %1317 = vmatpush1.bf16.msra.mxu0 0
      %1318 = vmatprep.subr.bf16.mxu0 0
      %1319 = vmatpush1.bf16.msra.mxu0 0
      %1320 = vmatprep.subr.bf16.mxu0 0
      %1321 = vmatpush1.bf16.msra.mxu0 0
      %1322 = vmatprep.subr.bf16.mxu0 %v595
      %1323 = vmatpush1.bf16.msra.mxu0 %v592
      %1324 = vmatprep.subr.bf16.mxu0 0
      %1325 = vmatpush2.bf16.msra.mxu0 0
      %1326 = vmatprep.subr.bf16.mxu0 0
      %1327 = vmatpush2.bf16.msra.mxu0 0
      %1328 = vmatprep.subr.bf16.mxu0 0
      %1329 = vmatpush2.bf16.msra.mxu0 0
      %1330 = vmatprep.subr.bf16.mxu0 0
      %1331 = vmatpush2.bf16.msra.mxu0 0
      %1332 = vmatprep.subr.bf16.mxu0 0
      %1333 = vmatpush2.bf16.msra.mxu0 0
      %1334 = vmatprep.subr.bf16.mxu0 0
      %1335 = vmatpush2.bf16.msra.mxu0 0
      %1336 = vmatprep.subr.bf16.mxu0 0
      %1337 = vmatpush2.bf16.msra.mxu0 0
      %1338 = vmatprep.subr.bf16.mxu0 0
      %1339 = vmatpush2.bf16.msra.mxu0 0
      %1340 = vmatprep.mubr.bf16.mxu0 0
      %1341 = vmatmul.mubr.bf16.gmra.mxu0 %v495
      %v1342 = vpop.f32.mrf.mxu0
      %v1343 = vadd.f32 0.0, %v1342
      %v1344 = vpop.f32.mrf.mxu0
      %v1345 = vadd.f32 0.0, %v1344
      %v1346 = vpop.f32.mrf.mxu0
      %v1347 = vpop.f32.mrf.mxu0
      %1348 = vdwg.mxu0
      %1349 = vmatprep.subr.bf16.mxu0 0
      %1350 = vmatpush1.bf16.msra.mxu0 0
      %1351 = vmatprep.subr.bf16.mxu0 0
      %1352 = vmatpush1.bf16.msra.mxu0 0
      %1353 = vmatprep.subr.bf16.mxu0 0
      %1354 = vmatpush1.bf16.msra.mxu0 0
      %1355 = vmatprep.subr.bf16.mxu0 0
      %1356 = vmatpush1.bf16.msra.mxu0 0
      %1357 = vmatprep.subr.bf16.mxu0 0
      %1358 = vmatpush1.bf16.msra.mxu0 0
      %1359 = vmatprep.subr.bf16.mxu0 0
      %1360 = vmatpush1.bf16.msra.mxu0 0
      %1361 = vmatprep.subr.bf16.mxu0 0
      %1362 = vmatpush1.bf16.msra.mxu0 0
      %1363 = vmatprep.subr.bf16.mxu0 %v601
      %1364 = vmatpush1.bf16.msra.mxu0 %v598
      %1365 = vmatprep.subr.bf16.mxu0 0
      %1366 = vmatpush2.bf16.msra.mxu0 0
      %1367 = vmatprep.subr.bf16.mxu0 0
      %1368 = vmatpush2.bf16.msra.mxu0 0
      %1369 = vmatprep.subr.bf16.mxu0 0
      %1370 = vmatpush2.bf16.msra.mxu0 0
      %1371 = vmatprep.subr.bf16.mxu0 0
      %1372 = vmatpush2.bf16.msra.mxu0 0
      %1373 = vmatprep.subr.bf16.mxu0 0
      %1374 = vmatpush2.bf16.msra.mxu0 0
      %1375 = vmatprep.subr.bf16.mxu0 0
      %1376 = vmatpush2.bf16.msra.mxu0 0
      %1377 = vmatprep.subr.bf16.mxu0 0
      %1378 = vmatpush2.bf16.msra.mxu0 0
      %1379 = vmatprep.subr.bf16.mxu0 0
      %1380 = vmatpush2.bf16.msra.mxu0 0
      %1381 = vmatprep.mubr.bf16.mxu0 0
      %1382 = vmatmul.mubr.bf16.gmra.mxu0 %v495
      %v1383 = vpop.f32.mrf.mxu0
      %v1384 = vadd.f32 0.0, %v1383
      %v1385 = vpop.f32.mrf.mxu0
      %v1386 = vadd.f32 0.0, %v1385
      %v1387 = vpop.f32.mrf.mxu0
      %v1388 = vpop.f32.mrf.mxu0
      %1389 = vdwg.mxu0
      %1390 = vmatprep.subr.bf16.mxu0 0
      %1391 = vmatpush1.bf16.msra.mxu0 0
      %1392 = vmatprep.subr.bf16.mxu0 0
      %1393 = vmatpush1.bf16.msra.mxu0 0
      %1394 = vmatprep.subr.bf16.mxu0 0
      %1395 = vmatpush1.bf16.msra.mxu0 0
      %1396 = vmatprep.subr.bf16.mxu0 0
      %1397 = vmatpush1.bf16.msra.mxu0 0
      %1398 = vmatprep.subr.bf16.mxu0 0
      %1399 = vmatpush1.bf16.msra.mxu0 0
      %1400 = vmatprep.subr.bf16.mxu0 0
      %1401 = vmatpush1.bf16.msra.mxu0 0
      %1402 = vmatprep.subr.bf16.mxu0 0
      %1403 = vmatpush1.bf16.msra.mxu0 0
      %1404 = vmatprep.subr.bf16.mxu0 %v607
      %1405 = vmatpush1.bf16.msra.mxu0 %v604
      %1406 = vmatprep.subr.bf16.mxu0 0
      %1407 = vmatpush2.bf16.msra.mxu0 0
      %1408 = vmatprep.subr.bf16.mxu0 0
      %1409 = vmatpush2.bf16.msra.mxu0 0
      %1410 = vmatprep.subr.bf16.mxu0 0
      %1411 = vmatpush2.bf16.msra.mxu0 0
      %1412 = vmatprep.subr.bf16.mxu0 0
      %1413 = vmatpush2.bf16.msra.mxu0 0
      %1414 = vmatprep.subr.bf16.mxu0 0
      %1415 = vmatpush2.bf16.msra.mxu0 0
      %1416 = vmatprep.subr.bf16.mxu0 0
      %1417 = vmatpush2.bf16.msra.mxu0 0
      %1418 = vmatprep.subr.bf16.mxu0 0
      %1419 = vmatpush2.bf16.msra.mxu0 0
      %1420 = vmatprep.subr.bf16.mxu0 0
      %1421 = vmatpush2.bf16.msra.mxu0 0
      %1422 = vmatprep.mubr.bf16.mxu0 0
      %1423 = vmatmul.mubr.bf16.gmra.mxu0 %v495
      %v1424 = vpop.f32.mrf.mxu0
      %v1425 = vadd.f32 0.0, %v1424
      %v1426 = vpop.f32.mrf.mxu0
      %v1427 = vadd.f32 0.0, %v1426
      %v1428 = vpop.f32.mrf.mxu0
      %v1429 = vpop.f32.mrf.mxu0
      %1430 = vdwg.mxu0
      %1431 = vmatprep.subr.bf16.mxu0 0
      %1432 = vmatpush1.bf16.msra.mxu0 0
      %1433 = vmatprep.subr.bf16.mxu0 0
      %1434 = vmatpush1.bf16.msra.mxu0 0
      %1435 = vmatprep.subr.bf16.mxu0 0
      %1436 = vmatpush1.bf16.msra.mxu0 0
      %1437 = vmatprep.subr.bf16.mxu0 0
      %1438 = vmatpush1.bf16.msra.mxu0 0
      %1439 = vmatprep.subr.bf16.mxu0 0
      %1440 = vmatpush1.bf16.msra.mxu0 0
      %1441 = vmatprep.subr.bf16.mxu0 0
      %1442 = vmatpush1.bf16.msra.mxu0 0
      %1443 = vmatprep.subr.bf16.mxu0 0
      %1444 = vmatpush1.bf16.msra.mxu0 0
      %1445 = vmatprep.subr.bf16.mxu0 %v613
      %1446 = vmatpush1.bf16.msra.mxu0 %v610
      %1447 = vmatprep.subr.bf16.mxu0 0
      %1448 = vmatpush2.bf16.msra.mxu0 0
      %1449 = vmatprep.subr.bf16.mxu0 0
      %1450 = vmatpush2.bf16.msra.mxu0 0
      %1451 = vmatprep.subr.bf16.mxu0 0
      %1452 = vmatpush2.bf16.msra.mxu0 0
      %1453 = vmatprep.subr.bf16.mxu0 0
      %1454 = vmatpush2.bf16.msra.mxu0 0
      %1455 = vmatprep.subr.bf16.mxu0 0
      %1456 = vmatpush2.bf16.msra.mxu0 0
      %1457 = vmatprep.subr.bf16.mxu0 0
      %1458 = vmatpush2.bf16.msra.mxu0 0
      %1459 = vmatprep.subr.bf16.mxu0 0
      %1460 = vmatpush2.bf16.msra.mxu0 0
      %1461 = vmatprep.subr.bf16.mxu0 0
      %1462 = vmatpush2.bf16.msra.mxu0 0
      %1463 = vmatprep.mubr.bf16.mxu0 0
      %1464 = vmatmul.mubr.bf16.gmra.mxu0 %v495
      %v1465 = vpop.f32.mrf.mxu0
      %v1466 = vadd.f32 0.0, %v1465
      %v1467 = vpop.f32.mrf.mxu0
      %v1468 = vadd.f32 0.0, %v1467
      %v1469 = vpop.f32.mrf.mxu0
      %v1470 = vpop.f32.mrf.mxu0
      %1471 = vdwg.mxu0
      %1472 = vmatprep.subr.bf16.mxu0 0
      %1473 = vmatpush1.bf16.msra.mxu0 0
      %1474 = vmatprep.subr.bf16.mxu0 0
      %1475 = vmatpush1.bf16.msra.mxu0 0
      %1476 = vmatprep.subr.bf16.mxu0 0
      %1477 = vmatpush1.bf16.msra.mxu0 0
      %1478 = vmatprep.subr.bf16.mxu0 0
      %1479 = vmatpush1.bf16.msra.mxu0 0
      %1480 = vmatprep.subr.bf16.mxu0 0
      %1481 = vmatpush1.bf16.msra.mxu0 0
      %1482 = vmatprep.subr.bf16.mxu0 0
      %1483 = vmatpush1.bf16.msra.mxu0 0
      %1484 = vmatprep.subr.bf16.mxu0 0
      %1485 = vmatpush1.bf16.msra.mxu0 0
      %1486 = vmatprep.subr.bf16.mxu0 %v619
      %1487 = vmatpush1.bf16.msra.mxu0 %v616
      %1488 = vmatprep.subr.bf16.mxu0 0
      %1489 = vmatpush2.bf16.msra.mxu0 0
      %1490 = vmatprep.subr.bf16.mxu0 0
      %1491 = vmatpush2.bf16.msra.mxu0 0
      %1492 = vmatprep.subr.bf16.mxu0 0
      %1493 = vmatpush2.bf16.msra.mxu0 0
      %1494 = vmatprep.subr.bf16.mxu0 0
      %1495 = vmatpush2.bf16.msra.mxu0 0
      %1496 = vmatprep.subr.bf16.mxu0 0
      %1497 = vmatpush2.bf16.msra.mxu0 0
      %1498 = vmatprep.subr.bf16.mxu0 0
      %1499 = vmatpush2.bf16.msra.mxu0 0
      %1500 = vmatprep.subr.bf16.mxu0 0
      %1501 = vmatpush2.bf16.msra.mxu0 0
      %1502 = vmatprep.subr.bf16.mxu0 0
      %1503 = vmatpush2.bf16.msra.mxu0 0
      %1504 = vmatprep.mubr.bf16.mxu0 0
      %1505 = vmatmul.mubr.bf16.gmra.mxu0 %v495
      %v1506 = vpop.f32.mrf.mxu0
      %v1507 = vadd.f32 0.0, %v1506
      %v1508 = vpop.f32.mrf.mxu0
      %v1509 = vadd.f32 0.0, %v1508
      %v1510 = vpop.f32.mrf.mxu0
      %v1511 = vpop.f32.mrf.mxu0
      %1512 = vdwg.mxu0
      %1513 = vmatprep.subr.bf16.mxu0 0
      %1514 = vmatpush1.bf16.msra.mxu0 0
      %1515 = vmatprep.subr.bf16.mxu0 0
      %1516 = vmatpush1.bf16.msra.mxu0 0
      %1517 = vmatprep.subr.bf16.mxu0 0
      %1518 = vmatpush1.bf16.msra.mxu0 0
      %1519 = vmatprep.subr.bf16.mxu0 0
      %1520 = vmatpush1.bf16.msra.mxu0 0
      %1521 = vmatprep.subr.bf16.mxu0 0
      %1522 = vmatpush1.bf16.msra.mxu0 0
      %1523 = vmatprep.subr.bf16.mxu0 0
      %1524 = vmatpush1.bf16.msra.mxu0 0
      %1525 = vmatprep.subr.bf16.mxu0 0
      %1526 = vmatpush1.bf16.msra.mxu0 0
      %1527 = vmatprep.subr.bf16.mxu0 %v625
      %1528 = vmatpush1.bf16.msra.mxu0 %v622
      %1529 = vmatprep.subr.bf16.mxu0 0
      %1530 = vmatpush2.bf16.msra.mxu0 0
      %1531 = vmatprep.subr.bf16.mxu0 0
      %1532 = vmatpush2.bf16.msra.mxu0 0
      %1533 = vmatprep.subr.bf16.mxu0 0
      %1534 = vmatpush2.bf16.msra.mxu0 0
      %1535 = vmatprep.subr.bf16.mxu0 0
      %1536 = vmatpush2.bf16.msra.mxu0 0
      %1537 = vmatprep.subr.bf16.mxu0 0
      %1538 = vmatpush2.bf16.msra.mxu0 0
      %1539 = vmatprep.subr.bf16.mxu0 0
      %1540 = vmatpush2.bf16.msra.mxu0 0
      %1541 = vmatprep.subr.bf16.mxu0 0
      %1542 = vmatpush2.bf16.msra.mxu0 0
      %1543 = vmatprep.subr.bf16.mxu0 0
      %1544 = vmatpush2.bf16.msra.mxu0 0
      %1545 = vmatprep.mubr.bf16.mxu0 0
      %1546 = vmatmul.mubr.bf16.gmra.mxu0 %v495
      %v1547 = vpop.f32.mrf.mxu0
      %v1548 = vadd.f32 0.0, %v1547
      %v1549 = vpop.f32.mrf.mxu0
      %v1550 = vadd.f32 0.0, %v1549
      %v1551 = vpop.f32.mrf.mxu0
      %v1552 = vpop.f32.mrf.mxu0
      %1553 = vdwg.mxu0
      %1554 = vmatprep.subr.bf16.mxu0 0
      %1555 = vmatpush1.bf16.msra.mxu0 0
      %1556 = vmatprep.subr.bf16.mxu0 0
      %1557 = vmatpush1.bf16.msra.mxu0 0
      %1558 = vmatprep.subr.bf16.mxu0 0
      %1559 = vmatpush1.bf16.msra.mxu0 0
      %1560 = vmatprep.subr.bf16.mxu0 0
      %1561 = vmatpush1.bf16.msra.mxu0 0
      %1562 = vmatprep.subr.bf16.mxu0 0
      %1563 = vmatpush1.bf16.msra.mxu0 0
      %1564 = vmatprep.subr.bf16.mxu0 0
      %1565 = vmatpush1.bf16.msra.mxu0 0
      %1566 = vmatprep.subr.bf16.mxu0 0
      %1567 = vmatpush1.bf16.msra.mxu0 0
      %1568 = vmatprep.subr.bf16.mxu0 %v631
      %1569 = vmatpush1.bf16.msra.mxu0 %v628
      %1570 = vmatprep.subr.bf16.mxu0 0
      %1571 = vmatpush2.bf16.msra.mxu0 0
      %1572 = vmatprep.subr.bf16.mxu0 0
      %1573 = vmatpush2.bf16.msra.mxu0 0
      %1574 = vmatprep.subr.bf16.mxu0 0
      %1575 = vmatpush2.bf16.msra.mxu0 0
      %1576 = vmatprep.subr.bf16.mxu0 0
      %1577 = vmatpush2.bf16.msra.mxu0 0
      %1578 = vmatprep.subr.bf16.mxu0 0
      %1579 = vmatpush2.bf16.msra.mxu0 0
      %1580 = vmatprep.subr.bf16.mxu0 0
      %1581 = vmatpush2.bf16.msra.mxu0 0
      %1582 = vmatprep.subr.bf16.mxu0 0
      %1583 = vmatpush2.bf16.msra.mxu0 0
      %1584 = vmatprep.subr.bf16.mxu0 0
      %1585 = vmatpush2.bf16.msra.mxu0 0
      %1586 = vmatprep.mubr.bf16.mxu0 0
      %1587 = vmatmul.mubr.bf16.gmra.mxu0 %v495
      %v1588 = vpop.f32.mrf.mxu0
      %v1589 = vadd.f32 0.0, %v1588
      %v1590 = vpop.f32.mrf.mxu0
      %v1591 = vadd.f32 0.0, %v1590
      %v1592 = vpop.f32.mrf.mxu0
      %v1593 = vpop.f32.mrf.mxu0
      %1594 = vdwg.mxu0
      %1595 = vmatprep.subr.bf16.mxu0 0
      %1596 = vmatpush1.bf16.msra.mxu0 0
      %1597 = vmatprep.subr.bf16.mxu0 0
      %1598 = vmatpush1.bf16.msra.mxu0 0
      %1599 = vmatprep.subr.bf16.mxu0 0
      %1600 = vmatpush1.bf16.msra.mxu0 0
      %1601 = vmatprep.subr.bf16.mxu0 0
      %1602 = vmatpush1.bf16.msra.mxu0 0
      %1603 = vmatprep.subr.bf16.mxu0 0
      %1604 = vmatpush1.bf16.msra.mxu0 0
      %1605 = vmatprep.subr.bf16.mxu0 0
      %1606 = vmatpush1.bf16.msra.mxu0 0
      %1607 = vmatprep.subr.bf16.mxu0 0
      %1608 = vmatpush1.bf16.msra.mxu0 0
      %1609 = vmatprep.subr.bf16.mxu0 %v637
      %1610 = vmatpush1.bf16.msra.mxu0 %v634
      %1611 = vmatprep.subr.bf16.mxu0 0
      %1612 = vmatpush2.bf16.msra.mxu0 0
      %1613 = vmatprep.subr.bf16.mxu0 0
      %1614 = vmatpush2.bf16.msra.mxu0 0
      %1615 = vmatprep.subr.bf16.mxu0 0
      %1616 = vmatpush2.bf16.msra.mxu0 0
      %1617 = vmatprep.subr.bf16.mxu0 0
      %1618 = vmatpush2.bf16.msra.mxu0 0
      %1619 = vmatprep.subr.bf16.mxu0 0
      %1620 = vmatpush2.bf16.msra.mxu0 0
      %1621 = vmatprep.subr.bf16.mxu0 0
      %1622 = vmatpush2.bf16.msra.mxu0 0
      %1623 = vmatprep.subr.bf16.mxu0 0
      %1624 = vmatpush2.bf16.msra.mxu0 0
      %1625 = vmatprep.subr.bf16.mxu0 0
      %1626 = vmatpush2.bf16.msra.mxu0 0
      %1627 = vmatprep.mubr.bf16.mxu0 0
      %1628 = vmatmul.mubr.bf16.gmra.mxu0 %v495
      %v1629 = vpop.f32.mrf.mxu0
      %v1630 = vadd.f32 0.0, %v1629
      %v1631 = vpop.f32.mrf.mxu0
      %v1632 = vadd.f32 0.0, %v1631
      %v1633 = vpop.f32.mrf.mxu0
      %v1634 = vpop.f32.mrf.mxu0
      %1635 = vdwg.mxu0
      %1636 = vmatprep.subr.bf16.mxu0 0
      %1637 = vmatpush1.bf16.msra.mxu0 0
      %1638 = vmatprep.subr.bf16.mxu0 0
      %1639 = vmatpush1.bf16.msra.mxu0 0
      %1640 = vmatprep.subr.bf16.mxu0 0
      %1641 = vmatpush1.bf16.msra.mxu0 0
      %1642 = vmatprep.subr.bf16.mxu0 0
      %1643 = vmatpush1.bf16.msra.mxu0 0
      %1644 = vmatprep.subr.bf16.mxu0 0
      %1645 = vmatpush1.bf16.msra.mxu0 0
      %1646 = vmatprep.subr.bf16.mxu0 0
      %1647 = vmatpush1.bf16.msra.mxu0 0
      %1648 = vmatprep.subr.bf16.mxu0 0
      %1649 = vmatpush1.bf16.msra.mxu0 0
      %1650 = vmatprep.subr.bf16.mxu0 %v643
      %1651 = vmatpush1.bf16.msra.mxu0 %v640
      %1652 = vmatprep.subr.bf16.mxu0 0
      %1653 = vmatpush2.bf16.msra.mxu0 0
      %1654 = vmatprep.subr.bf16.mxu0 0
      %1655 = vmatpush2.bf16.msra.mxu0 0
      %1656 = vmatprep.subr.bf16.mxu0 0
      %1657 = vmatpush2.bf16.msra.mxu0 0
      %1658 = vmatprep.subr.bf16.mxu0 0
      %1659 = vmatpush2.bf16.msra.mxu0 0
      %1660 = vmatprep.subr.bf16.mxu0 0
      %1661 = vmatpush2.bf16.msra.mxu0 0
      %1662 = vmatprep.subr.bf16.mxu0 0
      %1663 = vmatpush2.bf16.msra.mxu0 0
      %1664 = vmatprep.subr.bf16.mxu0 0
      %1665 = vmatpush2.bf16.msra.mxu0 0
      %1666 = vmatprep.subr.bf16.mxu0 0
      %1667 = vmatpush2.bf16.msra.mxu0 0
      %1668 = vmatprep.mubr.bf16.mxu0 0
      %1669 = vmatmul.mubr.bf16.gmra.mxu0 %v495
      %v1670 = vpop.f32.mrf.mxu0
      %v1671 = vadd.f32 0.0, %v1670
      %v1672 = vpop.f32.mrf.mxu0
      %v1673 = vadd.f32 0.0, %v1672
      %v1674 = vpop.f32.mrf.mxu0
      %v1675 = vpop.f32.mrf.mxu0
      %1676 = vdwg.mxu0
      %1677 = vmatprep.subr.bf16.mxu0 0
      %1678 = vmatpush1.bf16.msra.mxu0 0
      %1679 = vmatprep.subr.bf16.mxu0 0
      %1680 = vmatpush1.bf16.msra.mxu0 0
      %1681 = vmatprep.subr.bf16.mxu0 0
      %1682 = vmatpush1.bf16.msra.mxu0 0
      %1683 = vmatprep.subr.bf16.mxu0 0
      %1684 = vmatpush1.bf16.msra.mxu0 0
      %1685 = vmatprep.subr.bf16.mxu0 0
      %1686 = vmatpush1.bf16.msra.mxu0 0
      %1687 = vmatprep.subr.bf16.mxu0 0
      %1688 = vmatpush1.bf16.msra.mxu0 0
      %1689 = vmatprep.subr.bf16.mxu0 0
      %1690 = vmatpush1.bf16.msra.mxu0 0
      %1691 = vmatprep.subr.bf16.mxu0 %v649
      %1692 = vmatpush1.bf16.msra.mxu0 %v646
      %1693 = vmatprep.subr.bf16.mxu0 0
      %1694 = vmatpush2.bf16.msra.mxu0 0
      %1695 = vmatprep.subr.bf16.mxu0 0
      %1696 = vmatpush2.bf16.msra.mxu0 0
      %1697 = vmatprep.subr.bf16.mxu0 0
      %1698 = vmatpush2.bf16.msra.mxu0 0
      %1699 = vmatprep.subr.bf16.mxu0 0
      %1700 = vmatpush2.bf16.msra.mxu0 0
      %1701 = vmatprep.subr.bf16.mxu0 0
      %1702 = vmatpush2.bf16.msra.mxu0 0
      %1703 = vmatprep.subr.bf16.mxu0 0
      %1704 = vmatpush2.bf16.msra.mxu0 0
      %1705 = vmatprep.subr.bf16.mxu0 0
      %1706 = vmatpush2.bf16.msra.mxu0 0
      %1707 = vmatprep.subr.bf16.mxu0 0
      %1708 = vmatpush2.bf16.msra.mxu0 0
      %1709 = vmatprep.mubr.bf16.mxu0 0
      %1710 = vmatmul.mubr.bf16.gmra.mxu0 %v495
      %v1711 = vpop.f32.mrf.mxu0
      %v1712 = vadd.f32 0.0, %v1711
      %v1713 = vpop.f32.mrf.mxu0
      %v1714 = vadd.f32 0.0, %v1713
      %v1715 = vpop.f32.mrf.mxu0
      %v1716 = vpop.f32.mrf.mxu0
      %1717 = vdwg.mxu0
      %1718 = vmatprep.subr.bf16.mxu0 0
      %1719 = vmatpush1.bf16.msra.mxu0 0
      %1720 = vmatprep.subr.bf16.mxu0 0
      %1721 = vmatpush1.bf16.msra.mxu0 0
      %1722 = vmatprep.subr.bf16.mxu0 0
      %1723 = vmatpush1.bf16.msra.mxu0 0
      %1724 = vmatprep.subr.bf16.mxu0 0
      %1725 = vmatpush1.bf16.msra.mxu0 0
      %1726 = vmatprep.subr.bf16.mxu0 0
      %1727 = vmatpush1.bf16.msra.mxu0 0
      %1728 = vmatprep.subr.bf16.mxu0 0
      %1729 = vmatpush1.bf16.msra.mxu0 0
      %1730 = vmatprep.subr.bf16.mxu0 0
      %1731 = vmatpush1.bf16.msra.mxu0 0
      %1732 = vmatprep.subr.bf16.mxu0 %v655
      %1733 = vmatpush1.bf16.msra.mxu0 %v652
      %1734 = vmatprep.subr.bf16.mxu0 0
      %1735 = vmatpush2.bf16.msra.mxu0 0
      %1736 = vmatprep.subr.bf16.mxu0 0
      %1737 = vmatpush2.bf16.msra.mxu0 0
      %1738 = vmatprep.subr.bf16.mxu0 0
      %1739 = vmatpush2.bf16.msra.mxu0 0
      %1740 = vmatprep.subr.bf16.mxu0 0
      %1741 = vmatpush2.bf16.msra.mxu0 0
      %1742 = vmatprep.subr.bf16.mxu0 0
      %1743 = vmatpush2.bf16.msra.mxu0 0
      %1744 = vmatprep.subr.bf16.mxu0 0
      %1745 = vmatpush2.bf16.msra.mxu0 0
      %1746 = vmatprep.subr.bf16.mxu0 0
      %1747 = vmatpush2.bf16.msra.mxu0 0
      %1748 = vmatprep.subr.bf16.mxu0 0
      %1749 = vmatpush2.bf16.msra.mxu0 0
      %1750 = vmatprep.mubr.bf16.mxu0 0
      %1751 = vmatmul.mubr.bf16.gmra.mxu0 %v495
      %v1752 = vpop.f32.mrf.mxu0
      %v1753 = vadd.f32 0.0, %v1752
      %v1754 = vpop.f32.mrf.mxu0
      %v1755 = vadd.f32 0.0, %v1754
      %v1756 = vpop.f32.mrf.mxu0
      %v1757 = vpop.f32.mrf.mxu0
      %1758 = vdwg.mxu0
      %1759 = vmatprep.subr.bf16.mxu0 0
      %1760 = vmatpush1.bf16.msra.mxu0 0
      %1761 = vmatprep.subr.bf16.mxu0 0
      %1762 = vmatpush1.bf16.msra.mxu0 0
      %1763 = vmatprep.subr.bf16.mxu0 0
      %1764 = vmatpush1.bf16.msra.mxu0 0
      %1765 = vmatprep.subr.bf16.mxu0 0
      %1766 = vmatpush1.bf16.msra.mxu0 0
      %1767 = vmatprep.subr.bf16.mxu0 0
      %1768 = vmatpush1.bf16.msra.mxu0 0
      %1769 = vmatprep.subr.bf16.mxu0 0
      %1770 = vmatpush1.bf16.msra.mxu0 0
      %1771 = vmatprep.subr.bf16.mxu0 0
      %1772 = vmatpush1.bf16.msra.mxu0 0
      %1773 = vmatprep.subr.bf16.mxu0 %v661
      %1774 = vmatpush1.bf16.msra.mxu0 %v658
      %1775 = vmatprep.subr.bf16.mxu0 0
      %1776 = vmatpush2.bf16.msra.mxu0 0
      %1777 = vmatprep.subr.bf16.mxu0 0
      %1778 = vmatpush2.bf16.msra.mxu0 0
      %1779 = vmatprep.subr.bf16.mxu0 0
      %1780 = vmatpush2.bf16.msra.mxu0 0
      %1781 = vmatprep.subr.bf16.mxu0 0
      %1782 = vmatpush2.bf16.msra.mxu0 0
      %1783 = vmatprep.subr.bf16.mxu0 0
      %1784 = vmatpush2.bf16.msra.mxu0 0
      %1785 = vmatprep.subr.bf16.mxu0 0
      %1786 = vmatpush2.bf16.msra.mxu0 0
      %1787 = vmatprep.subr.bf16.mxu0 0
      %1788 = vmatpush2.bf16.msra.mxu0 0
      %1789 = vmatprep.subr.bf16.mxu0 0
      %1790 = vmatpush2.bf16.msra.mxu0 0
      %1791 = vmatprep.mubr.bf16.mxu0 0
      %1792 = vmatmul.mubr.bf16.gmra.mxu0 %v495
      %v1793 = vpop.f32.mrf.mxu0
      %v1794 = vadd.f32 0.0, %v1793
      %v1795 = vpop.f32.mrf.mxu0
      %v1796 = vadd.f32 0.0, %v1795
      %v1797 = vpop.f32.mrf.mxu0
      %v1798 = vpop.f32.mrf.mxu0
      %1799 = vdwg.mxu0
      %1800 = vmatprep.subr.bf16.mxu0 0
      %1801 = vmatpush1.bf16.msra.mxu0 0
      %1802 = vmatprep.subr.bf16.mxu0 0
      %1803 = vmatpush1.bf16.msra.mxu0 0
      %1804 = vmatprep.subr.bf16.mxu0 0
      %1805 = vmatpush1.bf16.msra.mxu0 0
      %1806 = vmatprep.subr.bf16.mxu0 0
      %1807 = vmatpush1.bf16.msra.mxu0 0
      %1808 = vmatprep.subr.bf16.mxu0 0
      %1809 = vmatpush1.bf16.msra.mxu0 0
      %1810 = vmatprep.subr.bf16.mxu0 0
      %1811 = vmatpush1.bf16.msra.mxu0 0
      %1812 = vmatprep.subr.bf16.mxu0 0
      %1813 = vmatpush1.bf16.msra.mxu0 0
      %1814 = vmatprep.subr.bf16.mxu0 %v667
      %1815 = vmatpush1.bf16.msra.mxu0 %v664
      %1816 = vmatprep.subr.bf16.mxu0 0
      %1817 = vmatpush2.bf16.msra.mxu0 0
      %1818 = vmatprep.subr.bf16.mxu0 0
      %1819 = vmatpush2.bf16.msra.mxu0 0
      %1820 = vmatprep.subr.bf16.mxu0 0
      %1821 = vmatpush2.bf16.msra.mxu0 0
      %1822 = vmatprep.subr.bf16.mxu0 0
      %1823 = vmatpush2.bf16.msra.mxu0 0
      %1824 = vmatprep.subr.bf16.mxu0 0
      %1825 = vmatpush2.bf16.msra.mxu0 0
      %1826 = vmatprep.subr.bf16.mxu0 0
      %1827 = vmatpush2.bf16.msra.mxu0 0
      %1828 = vmatprep.subr.bf16.mxu0 0
      %1829 = vmatpush2.bf16.msra.mxu0 0
      %1830 = vmatprep.subr.bf16.mxu0 0
      %1831 = vmatpush2.bf16.msra.mxu0 0
      %1832 = vmatprep.mubr.bf16.mxu0 0
      %1833 = vmatmul.mubr.bf16.gmra.mxu0 %v495
      %v1834 = vpop.f32.mrf.mxu0
      %v1835 = vadd.f32 0.0, %v1834
      %v1836 = vpop.f32.mrf.mxu0
      %v1837 = vadd.f32 0.0, %v1836
      %v1838 = vpop.f32.mrf.mxu0
      %v1839 = vpop.f32.mrf.mxu0
      %1840 = vdwg.mxu0
      %1841 = vmatprep.subr.bf16.mxu0 0
      %1842 = vmatpush1.bf16.msra.mxu0 0
      %1843 = vmatprep.subr.bf16.mxu0 0
      %1844 = vmatpush1.bf16.msra.mxu0 0
      %1845 = vmatprep.subr.bf16.mxu0 0
      %1846 = vmatpush1.bf16.msra.mxu0 0
      %1847 = vmatprep.subr.bf16.mxu0 0
      %1848 = vmatpush1.bf16.msra.mxu0 0
      %1849 = vmatprep.subr.bf16.mxu0 0
      %1850 = vmatpush1.bf16.msra.mxu0 0
      %1851 = vmatprep.subr.bf16.mxu0 0
      %1852 = vmatpush1.bf16.msra.mxu0 0
      %1853 = vmatprep.subr.bf16.mxu0 0
      %1854 = vmatpush1.bf16.msra.mxu0 0
      %1855 = vmatprep.subr.bf16.mxu0 %v673
      %1856 = vmatpush1.bf16.msra.mxu0 %v670
      %1857 = vmatprep.subr.bf16.mxu0 0
      %1858 = vmatpush2.bf16.msra.mxu0 0
      %1859 = vmatprep.subr.bf16.mxu0 0
      %1860 = vmatpush2.bf16.msra.mxu0 0
      %1861 = vmatprep.subr.bf16.mxu0 0
      %1862 = vmatpush2.bf16.msra.mxu0 0
      %1863 = vmatprep.subr.bf16.mxu0 0
      %1864 = vmatpush2.bf16.msra.mxu0 0
      %1865 = vmatprep.subr.bf16.mxu0 0
      %1866 = vmatpush2.bf16.msra.mxu0 0
      %1867 = vmatprep.subr.bf16.mxu0 0
      %1868 = vmatpush2.bf16.msra.mxu0 0
      %1869 = vmatprep.subr.bf16.mxu0 0
      %1870 = vmatpush2.bf16.msra.mxu0 0
      %1871 = vmatprep.subr.bf16.mxu0 0
      %1872 = vmatpush2.bf16.msra.mxu0 0
      %1873 = vmatprep.mubr.bf16.mxu0 0
      %1874 = vmatmul.mubr.bf16.gmra.mxu0 %v495
      %v1875 = vpop.f32.mrf.mxu0
      %v1876 = vadd.f32 0.0, %v1875
      %v1877 = vpop.f32.mrf.mxu0
      %v1878 = vadd.f32 0.0, %v1877
      %v1879 = vpop.f32.mrf.mxu0
      %v1880 = vpop.f32.mrf.mxu0
      %1881 = vdwg.mxu0
      %1882 = vmatprep.subr.bf16.mxu0 0
      %1883 = vmatpush1.bf16.msra.mxu0 0
      %1884 = vmatprep.subr.bf16.mxu0 0
      %1885 = vmatpush1.bf16.msra.mxu0 0
      %1886 = vmatprep.subr.bf16.mxu0 0
      %1887 = vmatpush1.bf16.msra.mxu0 0
      %1888 = vmatprep.subr.bf16.mxu0 0
      %1889 = vmatpush1.bf16.msra.mxu0 0
      %1890 = vmatprep.subr.bf16.mxu0 0
      %1891 = vmatpush1.bf16.msra.mxu0 0
      %1892 = vmatprep.subr.bf16.mxu0 0
      %1893 = vmatpush1.bf16.msra.mxu0 0
      %1894 = vmatprep.subr.bf16.mxu0 0
      %1895 = vmatpush1.bf16.msra.mxu0 0
      %1896 = vmatprep.subr.bf16.mxu0 %v679
      %1897 = vmatpush1.bf16.msra.mxu0 %v676
      %1898 = vmatprep.subr.bf16.mxu0 0
      %1899 = vmatpush2.bf16.msra.mxu0 0
      %1900 = vmatprep.subr.bf16.mxu0 0
      %1901 = vmatpush2.bf16.msra.mxu0 0
      %1902 = vmatprep.subr.bf16.mxu0 0
      %1903 = vmatpush2.bf16.msra.mxu0 0
      %1904 = vmatprep.subr.bf16.mxu0 0
      %1905 = vmatpush2.bf16.msra.mxu0 0
      %1906 = vmatprep.subr.bf16.mxu0 0
      %1907 = vmatpush2.bf16.msra.mxu0 0
      %1908 = vmatprep.subr.bf16.mxu0 0
      %1909 = vmatpush2.bf16.msra.mxu0 0
      %1910 = vmatprep.subr.bf16.mxu0 0
      %1911 = vmatpush2.bf16.msra.mxu0 0
      %1912 = vmatprep.subr.bf16.mxu0 0
      %1913 = vmatpush2.bf16.msra.mxu0 0
      %1914 = vmatprep.mubr.bf16.mxu0 0
      %1915 = vmatmul.mubr.bf16.gmra.mxu0 %v495
      %v1916 = vpop.f32.mrf.mxu0
      %v1917 = vadd.f32 0.0, %v1916
      %v1918 = vpop.f32.mrf.mxu0
      %v1919 = vadd.f32 0.0, %v1918
      %v1920 = vpop.f32.mrf.mxu0
      %v1921 = vpop.f32.mrf.mxu0
      %1922 = vdwg.mxu0
      %1923 = vmatprep.subr.bf16.mxu0 0
      %1924 = vmatpush1.bf16.msra.mxu0 0
      %1925 = vmatprep.subr.bf16.mxu0 0
      %1926 = vmatpush1.bf16.msra.mxu0 0
      %1927 = vmatprep.subr.bf16.mxu0 0
      %1928 = vmatpush1.bf16.msra.mxu0 0
      %1929 = vmatprep.subr.bf16.mxu0 0
      %1930 = vmatpush1.bf16.msra.mxu0 0
      %1931 = vmatprep.subr.bf16.mxu0 0
      %1932 = vmatpush1.bf16.msra.mxu0 0
      %1933 = vmatprep.subr.bf16.mxu0 0
      %1934 = vmatpush1.bf16.msra.mxu0 0
      %1935 = vmatprep.subr.bf16.mxu0 0
      %1936 = vmatpush1.bf16.msra.mxu0 0
      %1937 = vmatprep.subr.bf16.mxu0 %v685
      %1938 = vmatpush1.bf16.msra.mxu0 %v682
      %1939 = vmatprep.subr.bf16.mxu0 0
      %1940 = vmatpush2.bf16.msra.mxu0 0
      %1941 = vmatprep.subr.bf16.mxu0 0
      %1942 = vmatpush2.bf16.msra.mxu0 0
      %1943 = vmatprep.subr.bf16.mxu0 0
      %1944 = vmatpush2.bf16.msra.mxu0 0
      %1945 = vmatprep.subr.bf16.mxu0 0
      %1946 = vmatpush2.bf16.msra.mxu0 0
      %1947 = vmatprep.subr.bf16.mxu0 0
      %1948 = vmatpush2.bf16.msra.mxu0 0
      %1949 = vmatprep.subr.bf16.mxu0 0
      %1950 = vmatpush2.bf16.msra.mxu0 0
      %1951 = vmatprep.subr.bf16.mxu0 0
      %1952 = vmatpush2.bf16.msra.mxu0 0
      %1953 = vmatprep.subr.bf16.mxu0 0
      %1954 = vmatpush2.bf16.msra.mxu0 0
      %1955 = vmatprep.mubr.bf16.mxu0 0
      %1956 = vmatmul.mubr.bf16.gmra.mxu0 %v495
      %v1957 = vpop.f32.mrf.mxu0
      %v1958 = vadd.f32 0.0, %v1957
      %v1959 = vpop.f32.mrf.mxu0
      %v1960 = vadd.f32 0.0, %v1959
      %v1961 = vpop.f32.mrf.mxu0
      %v1962 = vpop.f32.mrf.mxu0
      %1963 = vdwg.mxu0
      %1964 = vmatprep.subr.bf16.mxu0 0
      %1965 = vmatpush1.bf16.msra.mxu0 0
      %1966 = vmatprep.subr.bf16.mxu0 0
      %1967 = vmatpush1.bf16.msra.mxu0 0
      %1968 = vmatprep.subr.bf16.mxu0 0
      %1969 = vmatpush1.bf16.msra.mxu0 0
      %1970 = vmatprep.subr.bf16.mxu0 0
      %1971 = vmatpush1.bf16.msra.mxu0 0
      %1972 = vmatprep.subr.bf16.mxu0 0
      %1973 = vmatpush1.bf16.msra.mxu0 0
      %1974 = vmatprep.subr.bf16.mxu0 0
      %1975 = vmatpush1.bf16.msra.mxu0 0
      %1976 = vmatprep.subr.bf16.mxu0 0
      %1977 = vmatpush1.bf16.msra.mxu0 0
      %1978 = vmatprep.subr.bf16.mxu0 %v691
      %1979 = vmatpush1.bf16.msra.mxu0 %v688
      %1980 = vmatprep.subr.bf16.mxu0 0
      %1981 = vmatpush2.bf16.msra.mxu0 0
      %1982 = vmatprep.subr.bf16.mxu0 0
      %1983 = vmatpush2.bf16.msra.mxu0 0
      %1984 = vmatprep.subr.bf16.mxu0 0
      %1985 = vmatpush2.bf16.msra.mxu0 0
      %1986 = vmatprep.subr.bf16.mxu0 0
      %1987 = vmatpush2.bf16.msra.mxu0 0
      %1988 = vmatprep.subr.bf16.mxu0 0
      %1989 = vmatpush2.bf16.msra.mxu0 0
      %1990 = vmatprep.subr.bf16.mxu0 0
      %1991 = vmatpush2.bf16.msra.mxu0 0
      %1992 = vmatprep.subr.bf16.mxu0 0
      %1993 = vmatpush2.bf16.msra.mxu0 0
      %1994 = vmatprep.subr.bf16.mxu0 0
      %1995 = vmatpush2.bf16.msra.mxu0 0
      %1996 = vmatprep.mubr.bf16.mxu0 0
      %1997 = vmatmul.mubr.bf16.gmra.mxu0 %v495
      %v1998 = vpop.f32.mrf.mxu0
      %v1999 = vadd.f32 0.0, %v1998
      %v2000 = vpop.f32.mrf.mxu0
      %v2001 = vadd.f32 0.0, %v2000
      %v2002 = vpop.f32.mrf.mxu0
      %v2003 = vpop.f32.mrf.mxu0
      %2004 = vdwg.mxu0
      %v2005 = vmax.f32 %v728, %v1056
      %v2006 = vmax.f32 %v730, %v1058
      %v2007 = vmax.f32 %v769, %v1097
      %v2008 = vmax.f32 %v771, %v1099
      %v2009 = vmax.f32 %v810, %v1138
      %v2010 = vmax.f32 %v812, %v1140
      %v2011 = vmax.f32 %v851, %v1179
      %v2012 = vmax.f32 %v853, %v1181
      %v2013 = vmax.f32 %v892, %v1220
      %v2014 = vmax.f32 %v894, %v1222
      %v2015 = vmax.f32 %v933, %v1261
      %v2016 = vmax.f32 %v935, %v1263
      %v2017 = vmax.f32 %v974, %v1302
      %v2018 = vmax.f32 %v976, %v1304
      %v2019 = vmax.f32 %v1015, %v1343
      %v2020 = vmax.f32 %v1017, %v1345
      %v2021 = vmax.f32 %v1384, %v1712
      %v2022 = vmax.f32 %v1386, %v1714
      %v2023 = vmax.f32 %v1425, %v1753
      %v2024 = vmax.f32 %v1427, %v1755
      %v2025 = vmax.f32 %v1466, %v1794
      %v2026 = vmax.f32 %v1468, %v1796
      %v2027 = vmax.f32 %v1507, %v1835
      %v2028 = vmax.f32 %v1509, %v1837
      %v2029 = vmax.f32 %v1548, %v1876
      %v2030 = vmax.f32 %v1550, %v1878
      %v2031 = vmax.f32 %v1589, %v1917
      %v2032 = vmax.f32 %v1591, %v1919
      %v2033 = vmax.f32 %v1630, %v1958
      %v2034 = vmax.f32 %v1632, %v1960
      %v2035 = vmax.f32 %v1671, %v1999
      %v2036 = vmax.f32 %v1673, %v2001
      %v2037 = vmax.f32 %v2005, %v2021
      %v2038 = vmax.f32 %v2006, %v2022
      %v2039 = vmax.f32 %v2007, %v2023
      %v2040 = vmax.f32 %v2008, %v2024
      %v2041 = vmax.f32 %v2009, %v2025
      %v2042 = vmax.f32 %v2010, %v2026
      %v2043 = vmax.f32 %v2011, %v2027
      %v2044 = vmax.f32 %v2012, %v2028
      %v2045 = vmax.f32 %v2013, %v2029
      %v2046 = vmax.f32 %v2014, %v2030
      %v2047 = vmax.f32 %v2015, %v2031
      %v2048 = vmax.f32 %v2016, %v2032
      %v2049 = vmax.f32 %v2017, %v2033
      %v2050 = vmax.f32 %v2018, %v2034
      %v2051 = vmax.f32 %v2019, %v2035
      %v2052 = vmax.f32 %v2020, %v2036
      %v2053 = vld [vmem:[%s2] sm:$0xff]
      %2055 = vset.pattern.permute.xlu0 0
      %2056 = vperm.xlu0 %2055, %v2053
      %v2057 = vpop.permute.xlu0 %2056
      %v2059 = vadd.f32 %v2037, %v2057
      %v2060 = vadd.f32 %v2038, %v2057
      %v2061 = vadd.f32 %v2039, %v2057
      %v2062 = vadd.f32 %v2040, %v2057
      %v2063 = vadd.f32 %v2041, %v2057
      %v2064 = vadd.f32 %v2042, %v2057
      %v2065 = vadd.f32 %v2043, %v2057
      %v2066 = vadd.f32 %v2044, %v2057
      %v2067 = vadd.f32 %v2045, %v2057
      %v2068 = vadd.f32 %v2046, %v2057
      %v2069 = vadd.f32 %v2047, %v2057
      %v2070 = vadd.f32 %v2048, %v2057
      %v2071 = vadd.f32 %v2049, %v2057
      %v2072 = vadd.f32 %v2050, %v2057
      %v2073 = vadd.f32 %v2051, %v2057
      %v2074 = vadd.f32 %v2052, %v2057
      %v2075 = vmul.f32 %v2059, 0.33
      %v2076 = vmul.f32 %v2060, 0.33
      %v2077 = vmul.f32 %v2061, 0.33
      %v2078 = vmul.f32 %v2062, 0.33
      %v2079 = vmul.f32 %v2063, 0.33
      %v2080 = vmul.f32 %v2064, 0.33
      %v2081 = vmul.f32 %v2065, 0.33
      %v2082 = vmul.f32 %v2066, 0.33
      %v2083 = vmul.f32 %v2067, 0.33
      %v2084 = vmul.f32 %v2068, 0.33
      %v2085 = vmul.f32 %v2069, 0.33
      %v2086 = vmul.f32 %v2070, 0.33
      %v2087 = vmul.f32 %v2071, 0.33
      %v2088 = vmul.f32 %v2072, 0.33
      %v2089 = vmul.f32 %v2073, 0.33
      %v2090 = vmul.f32 %v2074, 0.33
      %v2091 = vmax.f32 %v2059, %v2075
      %v2092 = vmax.f32 %v2060, %v2076
      %v2093 = vmax.f32 %v2061, %v2077
      %v2094 = vmax.f32 %v2062, %v2078
      %v2095 = vmax.f32 %v2063, %v2079
      %v2096 = vmax.f32 %v2064, %v2080
      %v2097 = vmax.f32 %v2065, %v2081
      %v2098 = vmax.f32 %v2066, %v2082
      %v2099 = vmax.f32 %v2067, %v2083
      %v2100 = vmax.f32 %v2068, %v2084
      %v2101 = vmax.f32 %v2069, %v2085
      %v2102 = vmax.f32 %v2070, %v2086
      %v2103 = vmax.f32 %v2071, %v2087
      %v2104 = vmax.f32 %v2072, %v2088
      %v2105 = vmax.f32 %v2073, %v2089
      %v2106 = vmax.f32 %v2074, %v2090
      %2107 = vst [vmem:[%s170] sm:$0xff] %v2091
      %2108 = vst [vmem:[%s170 + $0x8] sm:$0xff] %v2092
      %2109 = vst [vmem:[%s170 + $0x10] sm:$0xff] %v2093
      %2110 = vst [vmem:[%s170 + $0x18] sm:$0xff] %v2094
      %2111 = vst [vmem:[%s170 + $0x20] sm:$0xff] %v2095
      %2112 = vst [vmem:[%s170 + $0x28] sm:$0xff] %v2096
      %2113 = vst [vmem:[%s170 + $0x30] sm:$0xff] %v2097
      %2114 = vst [vmem:[%s170 + $0x38] sm:$0xff] %v2098
      %2115 = vst [vmem:[%s170 + $0x40] sm:$0xff] %v2099
      %2116 = vst [vmem:[%s170 + $0x48] sm:$0xff] %v2100
      %2117 = vst [vmem:[%s170 + $0x50] sm:$0xff] %v2101
      %2118 = vst [vmem:[%s170 + $0x58] sm:$0xff] %v2102
      %2119 = vst [vmem:[%s170 + $0x60] sm:$0xff] %v2103
      %2120 = vst [vmem:[%s170 + $0x68] sm:$0xff] %v2104
      %2121 = vst [vmem:[%s170 + $0x70] sm:$0xff] %v2105
      %2122 = vst [vmem:[%s170 + $0x78] sm:$0xff] %v2106
      %p2123 = scmp.lt.s32.totalorder %s14, 1
      %s2124 = scalar_select %p2123, %s14, 1
      %s2125 = smul.addr %s2124, 16
      %s2126 = smul.addr %s2125, 8
      %s2127 = scalar_lea.vmem %s3, %s2126
      // Predicated region
      $region33: #{cnn_score_forward.4} parent=31 // pred_check
        %p2128 = pneg %p100
      $region34: #{cnn_score_forward.4} parent=31 // pred_check_branch
        %2130 = sbr.rel (%p2128) target = $region36
      $region35: #{cnn_score_forward.4} parent=31 // pred_region
        _
      $region36: #{cnn_score_forward.4} parent=31 // pred_fallthru
        _
    $region32: #{cnn_score_forward.4} parent=5 // pred_fallthru
      _
    %p2131 = scmp.le.s32.totalorder 2, %s9
    // Predicated region
    $region37: #{cnn_score_forward.4} parent=5 // pred_check
      %p2132 = pneg %p2131
    $region38: #{cnn_score_forward.4} parent=5 // pred_check_branch
      %2134 = sbr.rel (%p2132) target = $region40
    $region39: #{cnn_score_forward.4} parent=5 // pred_region
      %s2135 = ssub.s32 %s9, 2
      // Predicated region
      $region41: #{cnn_score_forward.4} parent=39 // pred_check
        %p2136 = pneg %p106
      $region42: #{cnn_score_forward.4} parent=39 // pred_check_branch
        %2138 = sbr.rel (%p2136) target = $region44
      $region43: #{cnn_score_forward.4} parent=39 // pred_region
        %p2139 = scmp.lt.s32.totalorder %s15, 1
        %s2140 = scalar_select %p2139, %s15, 1
        %s2141 = smul.addr %s2140, 16
        %s2142 = smul.addr %s2141, 8
        %s2143 = scalar_lea.vmem %s3, %s2142
      $region44: #{cnn_score_forward.4} parent=39 // pred_fallthru
        _
    $region40: #{cnn_score_forward.4} parent=5 // pred_fallthru
      _
  $region6: #{cnn_score_forward.4} parent=0 // loop_footer
    %s13 = sadd.s32 1, %s9
  $region7: #{cnn_score_forward.4} parent=0 // loop_footer_branch
    %8 = sbr.rel target = $region3
  $region8: #{cnn_score_forward.4} parent=0 // loop_exit
    _

// kernel: cnn_score_forward.5
$region0: #{cnn_score_forward.5}
  #allocation0 [shape = 'u32[]', space=smem, size = 0x4, offset = 0x4, fixed_abs, tag = 'smem constant byte address 0x4 - core index']
  #allocation1 [shape = 'u32[144,128]{1,0:T(1,128)}', space=vmem, size = 0x12000, scoped, tag = 'internal scratch']
  %s0 = inlined_call_operand.vmem [shape: bf16[2,72,2048], index: 0, kind: input, shape index: {}]
  %s1 = inlined_call_operand.vmem [shape: bf16[16,72], index: 1, kind: input, shape index: {}]
  %s2 = inlined_call_operand.vmem [shape: f32[16,1], index: 2, kind: input, shape index: {}]
  %s3 = inlined_call_operand.vmem [shape: f32[2,16,512], index: 3, kind: output, shape index: {}]
  %s4 = sld [smem:[#allocation0]]
  $region45: #{cnn_score_forward.5} parent=0
    _
  %s6 = ssub.s32 1, %s4
  %s7 = scalar_select 0, %s6, %s4
  loop: start=0, step=1, limit=4
  $region2: #{cnn_score_forward.5} parent=0 // loop_pre_header
    _
  $region3: #{cnn_score_forward.5} parent=0 // loop_header
    %s9 = sphi 0, %s13
    %p10 = scmp.ge.s32.totalorder %s9, 4
    %s19 = sphi 0, %s21
    %s22 = sphi 0, %s19
    %s23 = sphi 0, %s22
    %s39 = sphi 0, %s23
    %s43 = sphi 0, %s43
    %s45 = sphi 0, %s43
    %s46 = sphi 0, %s45
    %s60 = sphi 0, %s46
    %s64 = sphi 0, %s64
    %s66 = sphi 0, %s64
    %s67 = sphi 0, %s66
    %s81 = sphi 0, %s67
    %s87 = sphi 0, %s89
    %s90 = sphi 0, %s87
    %s91 = sphi 0, %s90
    %s107 = sphi 0, %s91
  $region4: #{cnn_score_forward.5} parent=0 // loop_header_branch
    %12 = sbr.rel (%p10) target = $region8
  $region5: #{cnn_score_forward.5} parent=0 // loop_body
    %s14 = ssub.s32 %s9, 1
    %s15 = ssub.s32 %s9, 2
    %s16 = sadd.s32 %s9, 1
    %s17 = ssub.s32 %s9, %s16
    %p18 = scmp.eq.s32.totalorder %s17, 0
    %s20 = sadd.s32 %s19, 1
    %s21 = scalar_select %p18, %s19, %s20
    %p24 = pneg %p18
    %p25 = scmp.eq.s32.totalorder %s9, 1
    %p26 = por %p24, %p25
    %p27 = scmp.ne.s32.totalorder %s19, %s22
    %p28 = scmp.eq.s32.totalorder %s9, 0
    %p29 = por %p27, %p28
    %p30 = scmp.ne.s32.totalorder %s19, %s22
    %p31 = scmp.eq.s32.totalorder %s14, 1
    %p32 = por %p30, %p31
    %p33 = scmp.ne.s32.totalorder %s22, %s23
    %p34 = scmp.eq.s32.totalorder %s14, 0
    %p35 = por %p33, %p34
    %p36 = scmp.ne.s32.totalorder %s22, %s23
    %p37 = scmp.eq.s32.totalorder %s15, 1
    %p38 = por %p36, %p37
    %p40 = scmp.ne.s32.totalorder %s23, %s39
    %p41 = scmp.eq.s32.totalorder %s15, 0
    %p42 = por %p40, %p41
    %s44 = sadd.s32 %s43, 1
    %p47 = scmp.eq.s32.totalorder %s9, 1
    %p48 = scmp.ne.s32.totalorder %s43, %s45
    %p49 = scmp.eq.s32.totalorder %s9, 0
    %p50 = por %p48, %p49
    %p51 = scmp.ne.s32.totalorder %s43, %s45
    %p52 = scmp.eq.s32.totalorder %s14, 1
    %p53 = por %p51, %p52
    %p54 = scmp.ne.s32.totalorder %s45, %s46
    %p55 = scmp.eq.s32.totalorder %s14, 0
    %p56 = por %p54, %p55
    %p57 = scmp.ne.s32.totalorder %s45, %s46
    %p58 = scmp.eq.s32.totalorder %s15, 1
    %p59 = por %p57, %p58
    %p61 = scmp.ne.s32.totalorder %s46, %s60
    %p62 = scmp.eq.s32.totalorder %s15, 0
    %p63 = por %p61, %p62
    %s65 = sadd.s32 %s64, 1
    %p68 = scmp.eq.s32.totalorder %s9, 1
    %p69 = scmp.ne.s32.totalorder %s64, %s66
    %p70 = scmp.eq.s32.totalorder %s9, 0
    %p71 = por %p69, %p70
    %p72 = scmp.ne.s32.totalorder %s64, %s66
    %p73 = scmp.eq.s32.totalorder %s14, 1
    %p74 = por %p72, %p73
    %p75 = scmp.ne.s32.totalorder %s66, %s67
    %p76 = scmp.eq.s32.totalorder %s14, 0
    %p77 = por %p75, %p76
    %p78 = scmp.ne.s32.totalorder %s66, %s67
    %p79 = scmp.eq.s32.totalorder %s15, 1
    %p80 = por %p78, %p79
    %p82 = scmp.ne.s32.totalorder %s67, %s81
    %p83 = scmp.eq.s32.totalorder %s15, 0
    %p84 = por %p82, %p83
    %s85 = ssub.s32 %s9, %s16
    %p86 = scmp.eq.s32.totalorder %s85, 0
    %s88 = sadd.s32 %s87, 1
    %s89 = scalar_select %p86, %s87, %s88
    %p92 = pneg %p86
    %p93 = scmp.eq.s32.totalorder %s9, 1
    %p94 = por %p92, %p93
    %p95 = scmp.ne.s32.totalorder %s87, %s90
    %p96 = scmp.eq.s32.totalorder %s9, 0
    %p97 = por %p95, %p96
    %p98 = scmp.ne.s32.totalorder %s87, %s90
    %p99 = scmp.eq.s32.totalorder %s14, 1
    %p100 = por %p98, %p99
    %p101 = scmp.ne.s32.totalorder %s90, %s91
    %p102 = scmp.eq.s32.totalorder %s14, 0
    %p103 = por %p101, %p102
    %p104 = scmp.ne.s32.totalorder %s90, %s91
    %p105 = scmp.eq.s32.totalorder %s15, 1
    %p106 = por %p104, %p105
    %p108 = scmp.ne.s32.totalorder %s91, %s107
    %p109 = scmp.eq.s32.totalorder %s15, 0
    %p110 = por %p108, %p109
    %p111 = scmp.le.s32.totalorder 1, %s9
    %p112 = scmp.lt.s32.totalorder %s9, 3
    %p113 = pnand %p111, %p112
    %p114 = pneg %p113
    // Predicated region
    $region9: #{cnn_score_forward.5} parent=5 // pred_check
      _
    $region10: #{cnn_score_forward.5} parent=5 // pred_check_branch
      %116 = sbr.rel (%p113) target = $region12
    $region11: #{cnn_score_forward.5} parent=5 // pred_region
      %s117 = ssub.s32 %s9, 1
      // Predicated region
      $region13: #{cnn_score_forward.5} parent=11 // pred_check
        %p118 = pneg %p56
      $region14: #{cnn_score_forward.5} parent=11 // pred_check_branch
        %120 = sbr.rel (%p118) target = $region16
      $region15: #{cnn_score_forward.5} parent=11 // pred_region
        _
      $region16: #{cnn_score_forward.5} parent=11 // pred_fallthru
        _
      // Predicated region
      $region17: #{cnn_score_forward.5} parent=11 // pred_check
        %p121 = pneg %p77
      $region18: #{cnn_score_forward.5} parent=11 // pred_check_branch
        %123 = sbr.rel (%p121) target = $region20
      $region19: #{cnn_score_forward.5} parent=11 // pred_region
        _
      $region20: #{cnn_score_forward.5} parent=11 // pred_fallthru
        _
    $region12: #{cnn_score_forward.5} parent=5 // pred_fallthru
      _
    %p124 = scmp.lt.s32.totalorder %s9, 2
    // Predicated region
    $region21: #{cnn_score_forward.5} parent=5 // pred_check
      %p125 = pneg %p124
    $region22: #{cnn_score_forward.5} parent=5 // pred_check_branch
      %127 = sbr.rel (%p125) target = $region24
    $region23: #{cnn_score_forward.5} parent=5 // pred_region
      // Predicated region
      $region25: #{cnn_score_forward.5} parent=23 // pred_check
        %p128 = pneg %p29
      $region26: #{cnn_score_forward.5} parent=23 // pred_check_branch
        %130 = sbr.rel (%p128) target = $region28
      $region27: #{cnn_score_forward.5} parent=23 // pred_region
        %p131 = scmp.lt.s32.totalorder %s9, 1
        %s132 = scalar_select %p131, %s9, 1
        %s133 = smul.addr %s132, 144
        %s134 = smul.addr %s133, 4
        %s135 = scalar_lea.vmem %s0, %s134
      $region28: #{cnn_score_forward.5} parent=23 // pred_fallthru
        _
    $region24: #{cnn_score_forward.5} parent=5 // pred_fallthru
      _
    %p136 = scmp.le.s32.totalorder 1, %s9
    %p137 = scmp.lt.s32.totalorder %s9, 3
    %p138 = pnand %p136, %p137
    %p139 = pneg %p138
    // Predicated region
    $region29: #{cnn_score_forward.5} parent=5 // pred_check
      _
    $region30: #{cnn_score_forward.5} parent=5 // pred_check_branch
      %141 = sbr.rel (%p138) target = $region32
    $region31: #{cnn_score_forward.5} parent=5 // pred_region
      %s142 = ssub.s32 %s9, 1
      %p143 = scmp.lt.s32.totalorder %s14, 1
      %s144 = scalar_select %p143, %s14, 1
      %s145 = smul.addr %s144, 144
      %s146 = smul.addr %s145, 4
      %s147 = scalar_lea.vmem %s0, %s146
      %p148 = pneg %p35
      %p149 = pneg %p32
      %p150 = pneg %p56
      %p151 = pneg %p53
      %p152 = pneg %p77
      %p153 = pneg %p74
      %p154 = pneg %p103
      %p155 = pneg %p100
      %p156 = scmp.lt.s32.totalorder %s14, 1
      %s157 = scalar_select %p156, %s14, 1
      %s158 = smul.addr %s157, 8
      %s159 = smul.addr %s158, 8
      %s160 = scalar_lea.vmem %s3, %s159
      %p161 = scmp.lt.s32.totalorder %s14, 1
      %s162 = scalar_select %p161, %s14, 1
      %s163 = smul.addr %s162, 144
      %s164 = smul.addr %s163, 4
      %s165 = scalar_lea.vmem %s0, %s164
      %p166 = scmp.lt.s32.totalorder %s14, 1
      %s167 = scalar_select %p166, %s14, 1
      %s168 = smul.addr %s167, 8
      %s169 = smul.addr %s168, 8
      %s170 = scalar_lea.vmem %s3, %s169
      %v172 = vld [vmem:[%s1] sm:$0xf]
      %v173 = vld [vmem:[%s1 + $0x4] sm:$0xf]
      %v174 = vld [vmem:[%s165] sm:$0xff]
      %v175 = vld [vmem:[%s165 + $0x8] sm:$0xff]
      %v176 = vld [vmem:[%s165 + $0x10] sm:$0xff]
      %v177 = vld [vmem:[%s165 + $0x18] sm:$0xff]
      %v178 = vld [vmem:[%s165 + $0x20] sm:$0xff]
      %v179 = vld [vmem:[%s165 + $0x28] sm:$0xff]
      %v180 = vld [vmem:[%s165 + $0x30] sm:$0xff]
      %v181 = vld [vmem:[%s165 + $0x38] sm:$0xff]
      %v182 = vld [vmem:[%s165 + $0x40] sm:$0xff]
      %v183 = vld [vmem:[%s165 + $0x48] sm:$0xff]
      %v184 = vld [vmem:[%s165 + $0x50] sm:$0xff]
      %v185 = vld [vmem:[%s165 + $0x58] sm:$0xff]
      %v186 = vld [vmem:[%s165 + $0x60] sm:$0xff]
      %v187 = vld [vmem:[%s165 + $0x68] sm:$0xff]
      %v188 = vld [vmem:[%s165 + $0x70] sm:$0xff]
      %v189 = vld [vmem:[%s165 + $0x78] sm:$0xff]
      %v190 = vld [vmem:[%s165 + $0x80] sm:$0xff]
      %v191 = vld [vmem:[%s165 + $0x88] sm:$0xff]
      %v192 = vld [vmem:[%s165 + $0x90] sm:$0xff]
      %v193 = vld [vmem:[%s165 + $0x98] sm:$0xff]
      %v194 = vld [vmem:[%s165 + $0xa0] sm:$0xff]
      %v195 = vld [vmem:[%s165 + $0xa8] sm:$0xff]
      %v196 = vld [vmem:[%s165 + $0xb0] sm:$0xff]
      %v197 = vld [vmem:[%s165 + $0xb8] sm:$0xff]
      %v198 = vld [vmem:[%s165 + $0xc0] sm:$0xff]
      %v199 = vld [vmem:[%s165 + $0xc8] sm:$0xff]
      %v200 = vld [vmem:[%s165 + $0xd0] sm:$0xff]
      %v201 = vld [vmem:[%s165 + $0xd8] sm:$0xff]
      %v202 = vld [vmem:[%s165 + $0xe0] sm:$0xff]
      %v203 = vld [vmem:[%s165 + $0xe8] sm:$0xff]
      %v204 = vld [vmem:[%s165 + $0xf0] sm:$0xff]
      %v205 = vld [vmem:[%s165 + $0xf8] sm:$0xff]
      %v206 = vld [vmem:[%s165 + $0x100] sm:$0xff]
      %v207 = vld [vmem:[%s165 + $0x108] sm:$0xff]
      %v208 = vld [vmem:[%s165 + $0x110] sm:$0xff]
      %v209 = vld [vmem:[%s165 + $0x118] sm:$0xff]
      %v210 = vld [vmem:[%s165 + $0x120] sm:$0xff]
      %v211 = vld [vmem:[%s165 + $0x128] sm:$0xff]
      %v212 = vld [vmem:[%s165 + $0x130] sm:$0xff]
      %v213 = vld [vmem:[%s165 + $0x138] sm:$0xff]
      %v214 = vld [vmem:[%s165 + $0x140] sm:$0xff]
      %v215 = vld [vmem:[%s165 + $0x148] sm:$0xff]
      %v216 = vld [vmem:[%s165 + $0x150] sm:$0xff]
      %v217 = vld [vmem:[%s165 + $0x158] sm:$0xff]
      %v218 = vld [vmem:[%s165 + $0x160] sm:$0xff]
      %v219 = vld [vmem:[%s165 + $0x168] sm:$0xff]
      %v220 = vld [vmem:[%s165 + $0x170] sm:$0xff]
      %v221 = vld [vmem:[%s165 + $0x178] sm:$0xff]
      %v222 = vld [vmem:[%s165 + $0x180] sm:$0xff]
      %v223 = vld [vmem:[%s165 + $0x188] sm:$0xff]
      %v224 = vld [vmem:[%s165 + $0x190] sm:$0xff]
      %v225 = vld [vmem:[%s165 + $0x198] sm:$0xff]
      %v226 = vld [vmem:[%s165 + $0x1a0] sm:$0xff]
      %v227 = vld [vmem:[%s165 + $0x1a8] sm:$0xff]
      %v228 = vld [vmem:[%s165 + $0x1b0] sm:$0xff]
      %v229 = vld [vmem:[%s165 + $0x1b8] sm:$0xff]
      %v230 = vld [vmem:[%s165 + $0x1c0] sm:$0xff]
      %v231 = vld [vmem:[%s165 + $0x1c8] sm:$0xff]
      %v232 = vld [vmem:[%s165 + $0x1d0] sm:$0xff]
      %v233 = vld [vmem:[%s165 + $0x1d8] sm:$0xff]
      %v234 = vld [vmem:[%s165 + $0x1e0] sm:$0xff]
      %v235 = vld [vmem:[%s165 + $0x1e8] sm:$0xff]
      %v236 = vld [vmem:[%s165 + $0x1f0] sm:$0xff]
      %v237 = vld [vmem:[%s165 + $0x1f8] sm:$0xff]
      %v238 = vld [vmem:[%s165 + $0x200] sm:$0xff]
      %v239 = vld [vmem:[%s165 + $0x208] sm:$0xff]
      %v240 = vld [vmem:[%s165 + $0x210] sm:$0xff]
      %v241 = vld [vmem:[%s165 + $0x218] sm:$0xff]
      %v242 = vld [vmem:[%s165 + $0x220] sm:$0xff]
      %v243 = vld [vmem:[%s165 + $0x228] sm:$0xff]
      %v244 = vld [vmem:[%s165 + $0x230] sm:$0xff]
      %v245 = vld [vmem:[%s165 + $0x238] sm:$0xff]
      %v248 = vunpack.c.l.b16 %v172
      %v249 = vunpack.c.l.b16 %v173
      %v250 = vpack.c.b16 %v249, %v248
      %v323 = vunpack.c.l.b16 %v174
      %v324 = vunpack.c.h.b16 %v174
      %v325 = vunpack.c.l.b16 %v175
      %v326 = vunpack.c.h.b16 %v175
      %v327 = vunpack.c.l.b16 %v176
      %v328 = vunpack.c.h.b16 %v176
      %v329 = vunpack.c.l.b16 %v177
      %v330 = vunpack.c.h.b16 %v177
      %v331 = vunpack.c.l.b16 %v178
      %v332 = vunpack.c.h.b16 %v178
      %v333 = vunpack.c.l.b16 %v179
      %v334 = vunpack.c.h.b16 %v179
      %v335 = vunpack.c.l.b16 %v180
      %v336 = vunpack.c.h.b16 %v180
      %v337 = vunpack.c.l.b16 %v181
      %v338 = vunpack.c.h.b16 %v181
      %v339 = vunpack.c.l.b16 %v182
      %v340 = vunpack.c.h.b16 %v182
      %v341 = vunpack.c.l.b16 %v183
      %v342 = vunpack.c.h.b16 %v183
      %v343 = vunpack.c.l.b16 %v184
      %v344 = vunpack.c.h.b16 %v184
      %v345 = vunpack.c.l.b16 %v185
      %v346 = vunpack.c.h.b16 %v185
      %v347 = vunpack.c.l.b16 %v186
      %v348 = vunpack.c.h.b16 %v186
      %v349 = vunpack.c.l.b16 %v187
      %v350 = vunpack.c.h.b16 %v187
      %v351 = vunpack.c.l.b16 %v188
      %v352 = vunpack.c.h.b16 %v188
      %v353 = vunpack.c.l.b16 %v189
      %v354 = vunpack.c.h.b16 %v189
      %v355 = vunpack.c.l.b16 %v190
      %v356 = vunpack.c.h.b16 %v190
      %v357 = vunpack.c.l.b16 %v191
      %v358 = vunpack.c.h.b16 %v191
      %v359 = vunpack.c.l.b16 %v192
      %v360 = vunpack.c.h.b16 %v192
      %v361 = vunpack.c.l.b16 %v193
      %v362 = vunpack.c.h.b16 %v193
      %v363 = vunpack.c.l.b16 %v194
      %v364 = vunpack.c.h.b16 %v194
      %v365 = vunpack.c.l.b16 %v195
      %v366 = vunpack.c.h.b16 %v195
      %v367 = vunpack.c.l.b16 %v196
      %v368 = vunpack.c.h.b16 %v196
      %v369 = vunpack.c.l.b16 %v197
      %v370 = vunpack.c.h.b16 %v197
      %v371 = vunpack.c.l.b16 %v198
      %v372 = vunpack.c.h.b16 %v198
      %v373 = vunpack.c.l.b16 %v199
      %v374 = vunpack.c.h.b16 %v199
      %v375 = vunpack.c.l.b16 %v200
      %v376 = vunpack.c.h.b16 %v200
      %v377 = vunpack.c.l.b16 %v201
      %v378 = vunpack.c.h.b16 %v201
      %v379 = vunpack.c.l.b16 %v202
      %v380 = vunpack.c.h.b16 %v202
      %v381 = vunpack.c.l.b16 %v203
      %v382 = vunpack.c.h.b16 %v203
      %v383 = vunpack.c.l.b16 %v204
      %v384 = vunpack.c.h.b16 %v204
      %v385 = vunpack.c.l.b16 %v205
      %v386 = vunpack.c.h.b16 %v205
      %v387 = vunpack.c.l.b16 %v206
      %v388 = vunpack.c.h.b16 %v206
      %v389 = vunpack.c.l.b16 %v207
      %v390 = vunpack.c.h.b16 %v207
      %v391 = vunpack.c.l.b16 %v208
      %v392 = vunpack.c.h.b16 %v208
      %v393 = vunpack.c.l.b16 %v209
      %v394 = vunpack.c.h.b16 %v209
      %v395 = vunpack.c.l.b16 %v210
      %v396 = vunpack.c.h.b16 %v210
      %v397 = vunpack.c.l.b16 %v211
      %v398 = vunpack.c.h.b16 %v211
      %v399 = vunpack.c.l.b16 %v212
      %v400 = vunpack.c.h.b16 %v212
      %v401 = vunpack.c.l.b16 %v213
      %v402 = vunpack.c.h.b16 %v213
      %v403 = vunpack.c.l.b16 %v214
      %v404 = vunpack.c.h.b16 %v214
      %v405 = vunpack.c.l.b16 %v215
      %v406 = vunpack.c.h.b16 %v215
      %v407 = vunpack.c.l.b16 %v216
      %v408 = vunpack.c.h.b16 %v216
      %v409 = vunpack.c.l.b16 %v217
      %v410 = vunpack.c.h.b16 %v217
      %v411 = vunpack.c.l.b16 %v218
      %v412 = vunpack.c.h.b16 %v218
      %v413 = vunpack.c.l.b16 %v219
      %v414 = vunpack.c.h.b16 %v219
      %v415 = vunpack.c.l.b16 %v220
      %v416 = vunpack.c.h.b16 %v220
      %v417 = vunpack.c.l.b16 %v221
      %v418 = vunpack.c.h.b16 %v221
      %v419 = vunpack.c.l.b16 %v222
      %v420 = vunpack.c.h.b16 %v222
      %v421 = vunpack.c.l.b16 %v223
      %v422 = vunpack.c.h.b16 %v223
      %v423 = vunpack.c.l.b16 %v224
      %v424 = vunpack.c.h.b16 %v224
      %v425 = vunpack.c.l.b16 %v225
      %v426 = vunpack.c.h.b16 %v225
      %v427 = vunpack.c.l.b16 %v226
      %v428 = vunpack.c.h.b16 %v226
      %v429 = vunpack.c.l.b16 %v227
      %v430 = vunpack.c.h.b16 %v227
      %v431 = vunpack.c.l.b16 %v228
      %v432 = vunpack.c.h.b16 %v228
      %v433 = vunpack.c.l.b16 %v229
      %v434 = vunpack.c.h.b16 %v229
      %v435 = vunpack.c.l.b16 %v230
      %v436 = vunpack.c.h.b16 %v230
      %v437 = vunpack.c.l.b16 %v231
      %v438 = vunpack.c.h.b16 %v231
      %v439 = vunpack.c.l.b16 %v232
      %v440 = vunpack.c.h.b16 %v232
      %v441 = vunpack.c.l.b16 %v233
      %v442 = vunpack.c.h.b16 %v233
      %v443 = vunpack.c.l.b16 %v234
      %v444 = vunpack.c.h.b16 %v234
      %v445 = vunpack.c.l.b16 %v235
      %v446 = vunpack.c.h.b16 %v235
      %v447 = vunpack.c.l.b16 %v236
      %v448 = vunpack.c.h.b16 %v236
      %v449 = vunpack.c.l.b16 %v237
      %v450 = vunpack.c.h.b16 %v237
      %v451 = vunpack.c.l.b16 %v238
      %v452 = vunpack.c.h.b16 %v238
      %v453 = vunpack.c.l.b16 %v239
      %v454 = vunpack.c.h.b16 %v239
      %v455 = vunpack.c.l.b16 %v240
      %v456 = vunpack.c.h.b16 %v240
      %v457 = vunpack.c.l.b16 %v241
      %v458 = vunpack.c.h.b16 %v241
      %v459 = vunpack.c.l.b16 %v242
      %v460 = vunpack.c.h.b16 %v242
      %v461 = vunpack.c.l.b16 %v243
      %v462 = vunpack.c.h.b16 %v243
      %v463 = vunpack.c.l.b16 %v244
      %v464 = vunpack.c.h.b16 %v244
      %v465 = vunpack.c.l.b16 %v245
      %v466 = vunpack.c.h.b16 %v245
      %v467 = vpack.c.b16 %v339, %v323
      %v468 = vpack.c.b16 %v340, %v324
      %v469 = vpack.c.b16 %v341, %v325
      %v470 = vpack.c.b16 %v342, %v326
      %v471 = vpack.c.b16 %v343, %v327
      %v472 = vpack.c.b16 %v344, %v328
      %v473 = vpack.c.b16 %v345, %v329
      %v474 = vpack.c.b16 %v346, %v330
      %v475 = vpack.c.b16 %v347, %v331
      %v476 = vpack.c.b16 %v348, %v332
      %v477 = vpack.c.b16 %v349, %v333
      %v478 = vpack.c.b16 %v350, %v334
      %v479 = vpack.c.b16 %v351, %v335
      %v480 = vpack.c.b16 %v352, %v336
      %v481 = vpack.c.b16 %v353, %v337
      %v482 = vpack.c.b16 %v354, %v338
      %v483 = vpack.c.b16 %v371, %v355
      %v484 = vpack.c.b16 %v372, %v356
      %v485 = vpack.c.b16 %v373, %v357
      %v486 = vpack.c.b16 %v374, %v358
      %v487 = vpack.c.b16 %v375, %v359
      %v488 = vpack.c.b16 %v376, %v360
      %v489 = vpack.c.b16 %v377, %v361
      %v490 = vpack.c.b16 %v378, %v362
      %v491 = vpack.c.b16 %v379, %v363
      %v492 = vpack.c.b16 %v380, %v364
      %v493 = vpack.c.b16 %v381, %v365
      %v494 = vpack.c.b16 %v382, %v366
      %v495 = vpack.c.b16 %v383, %v367
      %v496 = vpack.c.b16 %v384, %v368
      %v497 = vpack.c.b16 %v385, %v369
      %v498 = vpack.c.b16 %v386, %v370
      %v499 = vpack.c.b16 %v403, %v387
      %v500 = vpack.c.b16 %v404, %v388
      %v501 = vpack.c.b16 %v405, %v389
      %v502 = vpack.c.b16 %v406, %v390
      %v503 = vpack.c.b16 %v407, %v391
      %v504 = vpack.c.b16 %v408, %v392
      %v505 = vpack.c.b16 %v409, %v393
      %v506 = vpack.c.b16 %v410, %v394
      %v507 = vpack.c.b16 %v411, %v395
      %v508 = vpack.c.b16 %v412, %v396
      %v509 = vpack.c.b16 %v413, %v397
      %v510 = vpack.c.b16 %v414, %v398
      %v511 = vpack.c.b16 %v415, %v399
      %v512 = vpack.c.b16 %v416, %v400
      %v513 = vpack.c.b16 %v417, %v401
      %v514 = vpack.c.b16 %v418, %v402
      %v515 = vpack.c.b16 %v435, %v419
      %v516 = vpack.c.b16 %v436, %v420
      %v517 = vpack.c.b16 %v437, %v421
      %v518 = vpack.c.b16 %v438, %v422
      %v519 = vpack.c.b16 %v439, %v423
      %v520 = vpack.c.b16 %v440, %v424
      %v521 = vpack.c.b16 %v441, %v425
      %v522 = vpack.c.b16 %v442, %v426
      %v523 = vpack.c.b16 %v443, %v427
      %v524 = vpack.c.b16 %v444, %v428
      %v525 = vpack.c.b16 %v445, %v429
      %v526 = vpack.c.b16 %v446, %v430
      %v527 = vpack.c.b16 %v447, %v431
      %v528 = vpack.c.b16 %v448, %v432
      %v529 = vpack.c.b16 %v449, %v433
      %v530 = vpack.c.b16 %v450, %v434
      %v531 = vpack.c.b16 %v451, %v451
      %v532 = vpack.c.b16 %v452, %v452
      %v533 = vpack.c.b16 %v453, %v453
      %v534 = vpack.c.b16 %v454, %v454
      %v535 = vpack.c.b16 %v455, %v455
      %v536 = vpack.c.b16 %v456, %v456
      %v537 = vpack.c.b16 %v457, %v457
      %v538 = vpack.c.b16 %v458, %v458
      %v539 = vpack.c.b16 %v459, %v459
      %v540 = vpack.c.b16 %v460, %v460
      %v541 = vpack.c.b16 %v461, %v461
      %v542 = vpack.c.b16 %v462, %v462
      %v543 = vpack.c.b16 %v463, %v463
      %v544 = vpack.c.b16 %v464, %v464
      %v545 = vpack.c.b16 %v465, %v465
      %v546 = vpack.c.b16 %v466, %v466
      %vm611 = vcmask 588800
      %v613 = vsel %vm611, %v250, 0
      %vm615 = vcmask 1043456
      %v617 = vsel %vm615, %v531, 0
      %v620 = vsel %vm615, %v532, 0
      %v623 = vsel %vm615, %v533, 0
      %v626 = vsel %vm615, %v534, 0
      %v629 = vsel %vm615, %v535, 0
      %v632 = vsel %vm615, %v536, 0
      %v635 = vsel %vm615, %v537, 0
      %v638 = vsel %vm615, %v538, 0
      %v641 = vsel %vm615, %v539, 0
      %v644 = vsel %vm615, %v540, 0
      %v647 = vsel %vm615, %v541, 0
      %v650 = vsel %vm615, %v542, 0
      %v653 = vsel %vm615, %v543, 0
      %v656 = vsel %vm615, %v544, 0
      %v659 = vsel %vm615, %v545, 0
      %v662 = vsel %vm615, %v546, 0
      %664 = vmatprep.subr.bf16.mxu0 0
      %665 = vmatpush1.bf16.msra.mxu0 0
      %666 = vmatprep.subr.bf16.mxu0 0
      %667 = vmatpush1.bf16.msra.mxu0 0
      %668 = vmatprep.subr.bf16.mxu0 0
      %669 = vmatpush1.bf16.msra.mxu0 0
      %670 = vmatprep.subr.bf16.mxu0 %v620
      %671 = vmatpush1.bf16.msra.mxu0 %v617
      %672 = vmatprep.subr.bf16.mxu0 %v516
      %673 = vmatpush1.bf16.msra.mxu0 %v515
      %674 = vmatprep.subr.bf16.mxu0 %v500
      %675 = vmatpush1.bf16.msra.mxu0 %v499
      %676 = vmatprep.subr.bf16.mxu0 %v484
      %677 = vmatpush1.bf16.msra.mxu0 %v483
      %678 = vmatprep.subr.bf16.mxu0 %v468
      %679 = vmatpush1.bf16.msra.mxu0 %v467
      %680 = vmatprep.subr.bf16.mxu0 0
      %681 = vmatpush2.bf16.msra.mxu0 0
      %682 = vmatprep.subr.bf16.mxu0 0
      %683 = vmatpush2.bf16.msra.mxu0 0
      %684 = vmatprep.subr.bf16.mxu0 0
      %685 = vmatpush2.bf16.msra.mxu0 0
      %686 = vmatprep.subr.bf16.mxu0 0
      %687 = vmatpush2.bf16.msra.mxu0 0
      %688 = vmatprep.subr.bf16.mxu0 0
      %689 = vmatpush2.bf16.msra.mxu0 0
      %690 = vmatprep.subr.bf16.mxu0 0
      %691 = vmatpush2.bf16.msra.mxu0 0
      %692 = vmatprep.subr.bf16.mxu0 0
      %693 = vmatpush2.bf16.msra.mxu0 0
      %694 = vmatprep.subr.bf16.mxu0 0
      %695 = vmatpush2.bf16.msra.mxu0 0
      %696 = vmatprep.mubr.bf16.mxu0 0
      %697 = vmatmul.mubr.bf16.gmra.mxu0 %v613
      %v698 = vpop.f32.mrf.mxu0
      %v699 = vadd.f32 0.0, %v698
      %v700 = vpop.f32.mrf.mxu0
      %v701 = vadd.f32 0.0, %v700
      %v702 = vpop.f32.mrf.mxu0
      %v703 = vadd.f32 0.0, %v702
      %v704 = vpop.f32.mrf.mxu0
      %v705 = vadd.f32 0.0, %v704
      %706 = vdwg.mxu0
      %707 = vmatprep.subr.bf16.mxu0 0
      %708 = vmatpush1.bf16.msra.mxu0 0
      %709 = vmatprep.subr.bf16.mxu0 0
      %710 = vmatpush1.bf16.msra.mxu0 0
      %711 = vmatprep.subr.bf16.mxu0 0
      %712 = vmatpush1.bf16.msra.mxu0 0
      %713 = vmatprep.subr.bf16.mxu0 %v626
      %714 = vmatpush1.bf16.msra.mxu0 %v623
      %715 = vmatprep.subr.bf16.mxu0 %v518
      %716 = vmatpush1.bf16.msra.mxu0 %v517
      %717 = vmatprep.subr.bf16.mxu0 %v502
      %718 = vmatpush1.bf16.msra.mxu0 %v501
      %719 = vmatprep.subr.bf16.mxu0 %v486
      %720 = vmatpush1.bf16.msra.mxu0 %v485
      %721 = vmatprep.subr.bf16.mxu0 %v470
      %722 = vmatpush1.bf16.msra.mxu0 %v469
      %723 = vmatprep.subr.bf16.mxu0 0
      %724 = vmatpush2.bf16.msra.mxu0 0
      %725 = vmatprep.subr.bf16.mxu0 0
      %726 = vmatpush2.bf16.msra.mxu0 0
      %727 = vmatprep.subr.bf16.mxu0 0
      %728 = vmatpush2.bf16.msra.mxu0 0
      %729 = vmatprep.subr.bf16.mxu0 0
      %730 = vmatpush2.bf16.msra.mxu0 0
      %731 = vmatprep.subr.bf16.mxu0 0
      %732 = vmatpush2.bf16.msra.mxu0 0
      %733 = vmatprep.subr.bf16.mxu0 0
      %734 = vmatpush2.bf16.msra.mxu0 0
      %735 = vmatprep.subr.bf16.mxu0 0
      %736 = vmatpush2.bf16.msra.mxu0 0
      %737 = vmatprep.subr.bf16.mxu0 0
      %738 = vmatpush2.bf16.msra.mxu0 0
      %739 = vmatprep.mubr.bf16.mxu0 0
      %740 = vmatmul.mubr.bf16.gmra.mxu0 %v613
      %v741 = vpop.f32.mrf.mxu0
      %v742 = vadd.f32 0.0, %v741
      %v743 = vpop.f32.mrf.mxu0
      %v744 = vadd.f32 0.0, %v743
      %v745 = vpop.f32.mrf.mxu0
      %v746 = vadd.f32 0.0, %v745
      %v747 = vpop.f32.mrf.mxu0
      %v748 = vadd.f32 0.0, %v747
      %749 = vdwg.mxu0
      %750 = vmatprep.subr.bf16.mxu0 0
      %751 = vmatpush1.bf16.msra.mxu0 0
      %752 = vmatprep.subr.bf16.mxu0 0
      %753 = vmatpush1.bf16.msra.mxu0 0
      %754 = vmatprep.subr.bf16.mxu0 0
      %755 = vmatpush1.bf16.msra.mxu0 0
      %756 = vmatprep.subr.bf16.mxu0 %v632
      %757 = vmatpush1.bf16.msra.mxu0 %v629
      %758 = vmatprep.subr.bf16.mxu0 %v520
      %759 = vmatpush1.bf16.msra.mxu0 %v519
      %760 = vmatprep.subr.bf16.mxu0 %v504
      %761 = vmatpush1.bf16.msra.mxu0 %v503
      %762 = vmatprep.subr.bf16.mxu0 %v488
      %763 = vmatpush1.bf16.msra.mxu0 %v487
      %764 = vmatprep.subr.bf16.mxu0 %v472
      %765 = vmatpush1.bf16.msra.mxu0 %v471
      %766 = vmatprep.subr.bf16.mxu0 0
      %767 = vmatpush2.bf16.msra.mxu0 0
      %768 = vmatprep.subr.bf16.mxu0 0
      %769 = vmatpush2.bf16.msra.mxu0 0
      %770 = vmatprep.subr.bf16.mxu0 0
      %771 = vmatpush2.bf16.msra.mxu0 0
      %772 = vmatprep.subr.bf16.mxu0 0
      %773 = vmatpush2.bf16.msra.mxu0 0
      %774 = vmatprep.subr.bf16.mxu0 0
      %775 = vmatpush2.bf16.msra.mxu0 0
      %776 = vmatprep.subr.bf16.mxu0 0
      %777 = vmatpush2.bf16.msra.mxu0 0
      %778 = vmatprep.subr.bf16.mxu0 0
      %779 = vmatpush2.bf16.msra.mxu0 0
      %780 = vmatprep.subr.bf16.mxu0 0
      %781 = vmatpush2.bf16.msra.mxu0 0
      %782 = vmatprep.mubr.bf16.mxu0 0
      %783 = vmatmul.mubr.bf16.gmra.mxu0 %v613
      %v784 = vpop.f32.mrf.mxu0
      %v785 = vadd.f32 0.0, %v784
      %v786 = vpop.f32.mrf.mxu0
      %v787 = vadd.f32 0.0, %v786
      %v788 = vpop.f32.mrf.mxu0
      %v789 = vadd.f32 0.0, %v788
      %v790 = vpop.f32.mrf.mxu0
      %v791 = vadd.f32 0.0, %v790
      %792 = vdwg.mxu0
      %793 = vmatprep.subr.bf16.mxu0 0
      %794 = vmatpush1.bf16.msra.mxu0 0
      %795 = vmatprep.subr.bf16.mxu0 0
      %796 = vmatpush1.bf16.msra.mxu0 0
      %797 = vmatprep.subr.bf16.mxu0 0
      %798 = vmatpush1.bf16.msra.mxu0 0
      %799 = vmatprep.subr.bf16.mxu0 %v638
      %800 = vmatpush1.bf16.msra.mxu0 %v635
      %801 = vmatprep.subr.bf16.mxu0 %v522
      %802 = vmatpush1.bf16.msra.mxu0 %v521
      %803 = vmatprep.subr.bf16.mxu0 %v506
      %804 = vmatpush1.bf16.msra.mxu0 %v505
      %805 = vmatprep.subr.bf16.mxu0 %v490
      %806 = vmatpush1.bf16.msra.mxu0 %v489
      %807 = vmatprep.subr.bf16.mxu0 %v474
      %808 = vmatpush1.bf16.msra.mxu0 %v473
      %809 = vmatprep.subr.bf16.mxu0 0
      %810 = vmatpush2.bf16.msra.mxu0 0
      %811 = vmatprep.subr.bf16.mxu0 0
      %812 = vmatpush2.bf16.msra.mxu0 0
      %813 = vmatprep.subr.bf16.mxu0 0
      %814 = vmatpush2.bf16.msra.mxu0 0
      %815 = vmatprep.subr.bf16.mxu0 0
      %816 = vmatpush2.bf16.msra.mxu0 0
      %817 = vmatprep.subr.bf16.mxu0 0
      %818 = vmatpush2.bf16.msra.mxu0 0
      %819 = vmatprep.subr.bf16.mxu0 0
      %820 = vmatpush2.bf16.msra.mxu0 0
      %821 = vmatprep.subr.bf16.mxu0 0
      %822 = vmatpush2.bf16.msra.mxu0 0
      %823 = vmatprep.subr.bf16.mxu0 0
      %824 = vmatpush2.bf16.msra.mxu0 0
      %825 = vmatprep.mubr.bf16.mxu0 0
      %826 = vmatmul.mubr.bf16.gmra.mxu0 %v613
      %v827 = vpop.f32.mrf.mxu0
      %v828 = vadd.f32 0.0, %v827
      %v829 = vpop.f32.mrf.mxu0
      %v830 = vadd.f32 0.0, %v829
      %v831 = vpop.f32.mrf.mxu0
      %v832 = vadd.f32 0.0, %v831
      %v833 = vpop.f32.mrf.mxu0
      %v834 = vadd.f32 0.0, %v833
      %835 = vdwg.mxu0
      %836 = vmatprep.subr.bf16.mxu0 0
      %837 = vmatpush1.bf16.msra.mxu0 0
      %838 = vmatprep.subr.bf16.mxu0 0
      %839 = vmatpush1.bf16.msra.mxu0 0
      %840 = vmatprep.subr.bf16.mxu0 0
      %841 = vmatpush1.bf16.msra.mxu0 0
      %842 = vmatprep.subr.bf16.mxu0 %v644
      %843 = vmatpush1.bf16.msra.mxu0 %v641
      %844 = vmatprep.subr.bf16.mxu0 %v524
      %845 = vmatpush1.bf16.msra.mxu0 %v523
      %846 = vmatprep.subr.bf16.mxu0 %v508
      %847 = vmatpush1.bf16.msra.mxu0 %v507
      %848 = vmatprep.subr.bf16.mxu0 %v492
      %849 = vmatpush1.bf16.msra.mxu0 %v491
      %850 = vmatprep.subr.bf16.mxu0 %v476
      %851 = vmatpush1.bf16.msra.mxu0 %v475
      %852 = vmatprep.subr.bf16.mxu0 0
      %853 = vmatpush2.bf16.msra.mxu0 0
      %854 = vmatprep.subr.bf16.mxu0 0
      %855 = vmatpush2.bf16.msra.mxu0 0
      %856 = vmatprep.subr.bf16.mxu0 0
      %857 = vmatpush2.bf16.msra.mxu0 0
      %858 = vmatprep.subr.bf16.mxu0 0
      %859 = vmatpush2.bf16.msra.mxu0 0
      %860 = vmatprep.subr.bf16.mxu0 0
      %861 = vmatpush2.bf16.msra.mxu0 0
      %862 = vmatprep.subr.bf16.mxu0 0
      %863 = vmatpush2.bf16.msra.mxu0 0
      %864 = vmatprep.subr.bf16.mxu0 0
      %865 = vmatpush2.bf16.msra.mxu0 0
      %866 = vmatprep.subr.bf16.mxu0 0
      %867 = vmatpush2.bf16.msra.mxu0 0
      %868 = vmatprep.mubr.bf16.mxu0 0
      %869 = vmatmul.mubr.bf16.gmra.mxu0 %v613
      %v870 = vpop.f32.mrf.mxu0
      %v871 = vadd.f32 0.0, %v870
      %v872 = vpop.f32.mrf.mxu0
      %v873 = vadd.f32 0.0, %v872
      %v874 = vpop.f32.mrf.mxu0
      %v875 = vadd.f32 0.0, %v874
      %v876 = vpop.f32.mrf.mxu0
      %v877 = vadd.f32 0.0, %v876
      %878 = vdwg.mxu0
      %879 = vmatprep.subr.bf16.mxu0 0
      %880 = vmatpush1.bf16.msra.mxu0 0
      %881 = vmatprep.subr.bf16.mxu0 0
      %882 = vmatpush1.bf16.msra.mxu0 0
      %883 = vmatprep.subr.bf16.mxu0 0
      %884 = vmatpush1.bf16.msra.mxu0 0
      %885 = vmatprep.subr.bf16.mxu0 %v650
      %886 = vmatpush1.bf16.msra.mxu0 %v647
      %887 = vmatprep.subr.bf16.mxu0 %v526
      %888 = vmatpush1.bf16.msra.mxu0 %v525
      %889 = vmatprep.subr.bf16.mxu0 %v510
      %890 = vmatpush1.bf16.msra.mxu0 %v509
      %891 = vmatprep.subr.bf16.mxu0 %v494
      %892 = vmatpush1.bf16.msra.mxu0 %v493
      %893 = vmatprep.subr.bf16.mxu0 %v478
      %894 = vmatpush1.bf16.msra.mxu0 %v477
      %895 = vmatprep.subr.bf16.mxu0 0
      %896 = vmatpush2.bf16.msra.mxu0 0
      %897 = vmatprep.subr.bf16.mxu0 0
      %898 = vmatpush2.bf16.msra.mxu0 0
      %899 = vmatprep.subr.bf16.mxu0 0
      %900 = vmatpush2.bf16.msra.mxu0 0
      %901 = vmatprep.subr.bf16.mxu0 0
      %902 = vmatpush2.bf16.msra.mxu0 0
      %903 = vmatprep.subr.bf16.mxu0 0
      %904 = vmatpush2.bf16.msra.mxu0 0
      %905 = vmatprep.subr.bf16.mxu0 0
      %906 = vmatpush2.bf16.msra.mxu0 0
      %907 = vmatprep.subr.bf16.mxu0 0
      %908 = vmatpush2.bf16.msra.mxu0 0
      %909 = vmatprep.subr.bf16.mxu0 0
      %910 = vmatpush2.bf16.msra.mxu0 0
      %911 = vmatprep.mubr.bf16.mxu0 0
      %912 = vmatmul.mubr.bf16.gmra.mxu0 %v613
      %v913 = vpop.f32.mrf.mxu0
      %v914 = vadd.f32 0.0, %v913
      %v915 = vpop.f32.mrf.mxu0
      %v916 = vadd.f32 0.0, %v915
      %v917 = vpop.f32.mrf.mxu0
      %v918 = vadd.f32 0.0, %v917
      %v919 = vpop.f32.mrf.mxu0
      %v920 = vadd.f32 0.0, %v919
      %921 = vdwg.mxu0
      %922 = vmatprep.subr.bf16.mxu0 0
      %923 = vmatpush1.bf16.msra.mxu0 0
      %924 = vmatprep.subr.bf16.mxu0 0
      %925 = vmatpush1.bf16.msra.mxu0 0
      %926 = vmatprep.subr.bf16.mxu0 0
      %927 = vmatpush1.bf16.msra.mxu0 0
      %928 = vmatprep.subr.bf16.mxu0 %v656
      %929 = vmatpush1.bf16.msra.mxu0 %v653
      %930 = vmatprep.subr.bf16.mxu0 %v528
      %931 = vmatpush1.bf16.msra.mxu0 %v527
      %932 = vmatprep.subr.bf16.mxu0 %v512
      %933 = vmatpush1.bf16.msra.mxu0 %v511
      %934 = vmatprep.subr.bf16.mxu0 %v496
      %935 = vmatpush1.bf16.msra.mxu0 %v495
      %936 = vmatprep.subr.bf16.mxu0 %v480
      %937 = vmatpush1.bf16.msra.mxu0 %v479
      %938 = vmatprep.subr.bf16.mxu0 0
      %939 = vmatpush2.bf16.msra.mxu0 0
      %940 = vmatprep.subr.bf16.mxu0 0
      %941 = vmatpush2.bf16.msra.mxu0 0
      %942 = vmatprep.subr.bf16.mxu0 0
      %943 = vmatpush2.bf16.msra.mxu0 0
      %944 = vmatprep.subr.bf16.mxu0 0
      %945 = vmatpush2.bf16.msra.mxu0 0
      %946 = vmatprep.subr.bf16.mxu0 0
      %947 = vmatpush2.bf16.msra.mxu0 0
      %948 = vmatprep.subr.bf16.mxu0 0
      %949 = vmatpush2.bf16.msra.mxu0 0
      %950 = vmatprep.subr.bf16.mxu0 0
      %951 = vmatpush2.bf16.msra.mxu0 0
      %952 = vmatprep.subr.bf16.mxu0 0
      %953 = vmatpush2.bf16.msra.mxu0 0
      %954 = vmatprep.mubr.bf16.mxu0 0
      %955 = vmatmul.mubr.bf16.gmra.mxu0 %v613
      %v956 = vpop.f32.mrf.mxu0
      %v957 = vadd.f32 0.0, %v956
      %v958 = vpop.f32.mrf.mxu0
      %v959 = vadd.f32 0.0, %v958
      %v960 = vpop.f32.mrf.mxu0
      %v961 = vadd.f32 0.0, %v960
      %v962 = vpop.f32.mrf.mxu0
      %v963 = vadd.f32 0.0, %v962
      %964 = vdwg.mxu0
      %965 = vmatprep.subr.bf16.mxu0 0
      %966 = vmatpush1.bf16.msra.mxu0 0
      %967 = vmatprep.subr.bf16.mxu0 0
      %968 = vmatpush1.bf16.msra.mxu0 0
      %969 = vmatprep.subr.bf16.mxu0 0
      %970 = vmatpush1.bf16.msra.mxu0 0
      %971 = vmatprep.subr.bf16.mxu0 %v662
      %972 = vmatpush1.bf16.msra.mxu0 %v659
      %973 = vmatprep.subr.bf16.mxu0 %v530
      %974 = vmatpush1.bf16.msra.mxu0 %v529
      %975 = vmatprep.subr.bf16.mxu0 %v514
      %976 = vmatpush1.bf16.msra.mxu0 %v513
      %977 = vmatprep.subr.bf16.mxu0 %v498
      %978 = vmatpush1.bf16.msra.mxu0 %v497
      %979 = vmatprep.subr.bf16.mxu0 %v482
      %980 = vmatpush1.bf16.msra.mxu0 %v481
      %981 = vmatprep.subr.bf16.mxu0 0
      %982 = vmatpush2.bf16.msra.mxu0 0
      %983 = vmatprep.subr.bf16.mxu0 0
      %984 = vmatpush2.bf16.msra.mxu0 0
      %985 = vmatprep.subr.bf16.mxu0 0
      %986 = vmatpush2.bf16.msra.mxu0 0
      %987 = vmatprep.subr.bf16.mxu0 0
      %988 = vmatpush2.bf16.msra.mxu0 0
      %989 = vmatprep.subr.bf16.mxu0 0
      %990 = vmatpush2.bf16.msra.mxu0 0
      %991 = vmatprep.subr.bf16.mxu0 0
      %992 = vmatpush2.bf16.msra.mxu0 0
      %993 = vmatprep.subr.bf16.mxu0 0
      %994 = vmatpush2.bf16.msra.mxu0 0
      %995 = vmatprep.subr.bf16.mxu0 0
      %996 = vmatpush2.bf16.msra.mxu0 0
      %997 = vmatprep.mubr.bf16.mxu0 0
      %998 = vmatmul.mubr.bf16.gmra.mxu0 %v613
      %v999 = vpop.f32.mrf.mxu0
      %v1000 = vadd.f32 0.0, %v999
      %v1001 = vpop.f32.mrf.mxu0
      %v1002 = vadd.f32 0.0, %v1001
      %v1003 = vpop.f32.mrf.mxu0
      %v1004 = vadd.f32 0.0, %v1003
      %v1005 = vpop.f32.mrf.mxu0
      %v1006 = vadd.f32 0.0, %v1005
      %1007 = vdwg.mxu0
      %v1008 = vmax.f32 %v699, %v785
      %v1009 = vmax.f32 %v701, %v787
      %v1010 = vmax.f32 %v742, %v828
      %v1011 = vmax.f32 %v744, %v830
      %v1012 = vmax.f32 %v703, %v789
      %v1013 = vmax.f32 %v705, %v791
      %v1014 = vmax.f32 %v746, %v832
      %v1015 = vmax.f32 %v748, %v834
      %v1016 = vmax.f32 %v871, %v957
      %v1017 = vmax.f32 %v873, %v959
      %v1018 = vmax.f32 %v914, %v1000
      %v1019 = vmax.f32 %v916, %v1002
      %v1020 = vmax.f32 %v875, %v961
      %v1021 = vmax.f32 %v877, %v963
      %v1022 = vmax.f32 %v918, %v1004
      %v1023 = vmax.f32 %v920, %v1006
      %v1024 = vmax.f32 %v1008, %v1016
      %v1025 = vmax.f32 %v1009, %v1017
      %v1026 = vmax.f32 %v1010, %v1018
      %v1027 = vmax.f32 %v1011, %v1019
      %v1028 = vmax.f32 %v1012, %v1020
      %v1029 = vmax.f32 %v1013, %v1021
      %v1030 = vmax.f32 %v1014, %v1022
      %v1031 = vmax.f32 %v1015, %v1023
      %v1032 = vld [vmem:[%s2] sm:$0xff]
      %v1033 = vld [vmem:[%s2 + $0x8] sm:$0xff]
      %1035 = vset.pattern.permute.xlu0 0
      %1036 = vperm.xlu0 %1035, %v1032
      %v1037 = vpop.permute.xlu0 %1036
      %1040 = vset.pattern.permute.xlu0 0
      %1041 = vperm.xlu0 %1040, %v1033
      %v1042 = vpop.permute.xlu0 %1041
      %v1044 = vadd.f32 %v1024, %v1037
      %v1045 = vadd.f32 %v1025, %v1037
      %v1046 = vadd.f32 %v1026, %v1037
      %v1047 = vadd.f32 %v1027, %v1037
      %v1048 = vadd.f32 %v1028, %v1042
      %v1049 = vadd.f32 %v1029, %v1042
      %v1050 = vadd.f32 %v1030, %v1042
      %v1051 = vadd.f32 %v1031, %v1042
      %v1052 = vmul.f32 %v1044, 0.33
      %v1053 = vmul.f32 %v1045, 0.33
      %v1054 = vmul.f32 %v1046, 0.33
      %v1055 = vmul.f32 %v1047, 0.33
      %v1056 = vmul.f32 %v1048, 0.33
      %v1057 = vmul.f32 %v1049, 0.33
      %v1058 = vmul.f32 %v1050, 0.33
      %v1059 = vmul.f32 %v1051, 0.33
      %v1060 = vmax.f32 %v1044, %v1052
      %v1061 = vmax.f32 %v1045, %v1053
      %v1062 = vmax.f32 %v1046, %v1054
      %v1063 = vmax.f32 %v1047, %v1055
      %v1064 = vmax.f32 %v1048, %v1056
      %v1065 = vmax.f32 %v1049, %v1057
      %v1066 = vmax.f32 %v1050, %v1058
      %v1067 = vmax.f32 %v1051, %v1059
      %1068 = vst [vmem:[%s170] sm:$0xff] %v1060
      %1069 = vst [vmem:[%s170 + $0x8] sm:$0xff] %v1061
      %1070 = vst [vmem:[%s170 + $0x10] sm:$0xff] %v1062
      %1071 = vst [vmem:[%s170 + $0x18] sm:$0xff] %v1063
      %1072 = vst [vmem:[%s170 + $0x20] sm:$0xff] %v1064
      %1073 = vst [vmem:[%s170 + $0x28] sm:$0xff] %v1065
      %1074 = vst [vmem:[%s170 + $0x30] sm:$0xff] %v1066
      %1075 = vst [vmem:[%s170 + $0x38] sm:$0xff] %v1067
      %p1076 = scmp.lt.s32.totalorder %s14, 1
      %s1077 = scalar_select %p1076, %s14, 1
      %s1078 = smul.addr %s1077, 8
      %s1079 = smul.addr %s1078, 8
      %s1080 = scalar_lea.vmem %s3, %s1079
      // Predicated region
      $region33: #{cnn_score_forward.5} parent=31 // pred_check
        %p1081 = pneg %p100
      $region34: #{cnn_score_forward.5} parent=31 // pred_check_branch
        %1083 = sbr.rel (%p1081) target = $region36
      $region35: #{cnn_score_forward.5} parent=31 // pred_region
        _
      $region36: #{cnn_score_forward.5} parent=31 // pred_fallthru
        _
    $region32: #{cnn_score_forward.5} parent=5 // pred_fallthru
      _
    %p1084 = scmp.le.s32.totalorder 2, %s9
    // Predicated region
    $region37: #{cnn_score_forward.5} parent=5 // pred_check
      %p1085 = pneg %p1084
    $region38: #{cnn_score_forward.5} parent=5 // pred_check_branch
      %1087 = sbr.rel (%p1085) target = $region40
    $region39: #{cnn_score_forward.5} parent=5 // pred_region
      %s1088 = ssub.s32 %s9, 2
      // Predicated region
      $region41: #{cnn_score_forward.5} parent=39 // pred_check
        %p1089 = pneg %p106
      $region42: #{cnn_score_forward.5} parent=39 // pred_check_branch
        %1091 = sbr.rel (%p1089) target = $region44
      $region43: #{cnn_score_forward.5} parent=39 // pred_region
        %p1092 = scmp.lt.s32.totalorder %s15, 1
        %s1093 = scalar_select %p1092, %s15, 1
        %s1094 = smul.addr %s1093, 8
        %s1095 = smul.addr %s1094, 8
        %s1096 = scalar_lea.vmem %s3, %s1095
      $region44: #{cnn_score_forward.5} parent=39 // pred_fallthru
        _
    $region40: #{cnn_score_forward.5} parent=5 // pred_fallthru
      _
  $region6: #{cnn_score_forward.5} parent=0 // loop_footer
    %s13 = sadd.s32 1, %s9
  $region7: #{cnn_score_forward.5} parent=0 // loop_footer_branch
    %8 = sbr.rel target = $region3
  $region8: #{cnn_score_forward.5} parent=0 // loop_exit
    _

// kernel: cnn_score_forward.6
$region0: #{cnn_score_forward.6}
  #allocation0 [shape = 'u32[]', space=smem, size = 0x4, offset = 0x4, fixed_abs, tag = 'smem constant byte address 0x4 - core index']
  #allocation1 [shape = 'u32[144,128]{1,0:T(1,128)}', space=vmem, size = 0x12000, scoped, tag = 'internal scratch']
  #allocation2 [shape = 'f32[2,128]{1,0:T(2,128)}', space=vmem, size = 0x400, scoped, tag = 'scratch operand']
  %s0 = inlined_call_operand.vmem [shape: bf16[2,8192], index: 0, kind: input, shape index: {}]
  %s1 = inlined_call_operand.vmem [shape: bf16[8192,256], index: 1, kind: input, shape index: {}]
  %s2 = inlined_call_operand.vmem [shape: f32[1,256], index: 2, kind: input, shape index: {}]
  %s3 = inlined_call_operand.vmem [shape: f32[2,256], index: 3, kind: output, shape index: {}]
  %s4 = sld [smem:[#allocation0]]
  $region94: #{cnn_score_forward.6} parent=0
    _
  %s6 = ssub.s32 1, %s4
  %s7 = scalar_select 0, %s6, %s4
  $region1: #{cnn_score_forward.6} parent=0
    #allocation3 [shape = 'u8[1048576]{0}', space=vmem, size = 0x100000, scoped, tag = 'input window, operand 1']
    loop: start=0, step=1, limit=10
    $region2: #{cnn_score_forward.6} parent=1 // loop_pre_header
      _
    $region3: #{cnn_score_forward.6} parent=1 // loop_header
      %s9 = sphi 0, %s13
      %p10 = scmp.ge.s32.totalorder %s9, 10
      %s16 = sphi 0, %s28
      %s17 = sphi 0, %s24
      %s18 = sphi 0, %s16
      %s19 = sphi 0, %s17
      %s20 = sphi 0, %s18
      %s21 = sphi 0, %s19
      %s31 = sphi 0, %s33
      %s34 = sphi 0, %s31
      %s35 = sphi 0, %s34
      %s51 = sphi 0, %s35
      %s59 = sphi 0, %s61
      %s62 = sphi 0, %s59
      %s63 = sphi 0, %s62
      %s79 = sphi 0, %s63
      %s85 = sphi 0, %s87
      %s88 = sphi 0, %s85
      %s89 = sphi 0, %s88
      %s105 = sphi 0, %s89
      %s111 = sphi 0, %s113
      %s114 = sphi 0, %s111
      %s115 = sphi 0, %s114
      %s131 = sphi 0, %s115
    $region4: #{cnn_score_forward.6} parent=1 // loop_header_branch
      %12 = sbr.rel (%p10) target = $region8
    $region5: #{cnn_score_forward.6} parent=1 // loop_body
      %s14 = ssub.s32 %s9, 1
      %s15 = ssub.s32 %s9, 2
      %s22 = sadd.s32 1, %s17
      %p23 = scmp.ge.s32.totalorder %s22, 4
      %s24 = scalar_select %p23, 0, %s22
      %s25 = sadd.s32 1, %s16
      %s26 = scalar_select %p23, %s25, %s16
      %p27 = scmp.ge.s32.totalorder %s26, 2
      %s28 = scalar_select %p27, 0, %s26
      %s29 = ssub.s32 %s17, %s24
      %p30 = scmp.eq.s32.totalorder %s29, 0
      %s32 = sadd.s32 %s31, 1
      %s33 = scalar_select %p30, %s31, %s32
      %p36 = pneg %p30
      %p37 = scmp.eq.s32.totalorder %s9, 7
      %p38 = por %p36, %p37
      %p39 = scmp.ne.s32.totalorder %s31, %s34
      %p40 = scmp.eq.s32.totalorder %s9, 0
      %p41 = por %p39, %p40
      %p42 = scmp.ne.s32.totalorder %s31, %s34
      %p43 = scmp.eq.s32.totalorder %s14, 7
      %p44 = por %p42, %p43
      %p45 = scmp.ne.s32.totalorder %s34, %s35
      %p46 = scmp.eq.s32.totalorder %s14, 0
      %p47 = por %p45, %p46
      %p48 = scmp.ne.s32.totalorder %s34, %s35
      %p49 = scmp.eq.s32.totalorder %s15, 7
      %p50 = por %p48, %p49
      %p52 = scmp.ne.s32.totalorder %s35, %s51
      %p53 = scmp.eq.s32.totalorder %s15, 0
      %p54 = por %p52, %p53
      %s55 = ssub.s32 %s17, %s24
      %s56 = ssub.s32 %s16, %s28
      %s57 = sor.u32 %s55, %s56
      %p58 = scmp.eq.s32.totalorder %s57, 0
      %s60 = sadd.s32 %s59, 1
      %s61 = scalar_select %p58, %s59, %s60
      %p64 = pneg %p58
      %p65 = scmp.eq.s32.totalorder %s9, 7
      %p66 = por %p64, %p65
      %p67 = scmp.ne.s32.totalorder %s59, %s62
      %p68 = scmp.eq.s32.totalorder %s9, 0
      %p69 = por %p67, %p68
      %p70 = scmp.ne.s32.totalorder %s59, %s62
      %p71 = scmp.eq.s32.totalorder %s14, 7
      %p72 = por %p70, %p71
      %p73 = scmp.ne.s32.totalorder %s62, %s63
      %p74 = scmp.eq.s32.totalorder %s14, 0
      %p75 = por %p73, %p74
      %p76 = scmp.ne.s32.totalorder %s62, %s63
      %p77 = scmp.eq.s32.totalorder %s15, 7
      %p78 = por %p76, %p77
      %p80 = scmp.ne.s32.totalorder %s63, %s79
      %p81 = scmp.eq.s32.totalorder %s15, 0
      %p82 = por %p80, %p81
      %s83 = ssub.s32 %s16, %s28
      %p84 = scmp.eq.s32.totalorder %s83, 0
      %s86 = sadd.s32 %s85, 1
      %s87 = scalar_select %p84, %s85, %s86
      %p90 = pneg %p84
      %p91 = scmp.eq.s32.totalorder %s9, 7
      %p92 = por %p90, %p91
      %p93 = scmp.ne.s32.totalorder %s85, %s88
      %p94 = scmp.eq.s32.totalorder %s9, 0
      %p95 = por %p93, %p94
      %p96 = scmp.ne.s32.totalorder %s85, %s88
      %p97 = scmp.eq.s32.totalorder %s14, 7
      %p98 = por %p96, %p97
      %p99 = scmp.ne.s32.totalorder %s88, %s89
      %p100 = scmp.eq.s32.totalorder %s14, 0
      %p101 = por %p99, %p100
      %p102 = scmp.ne.s32.totalorder %s88, %s89
      %p103 = scmp.eq.s32.totalorder %s15, 7
      %p104 = por %p102, %p103
      %p106 = scmp.ne.s32.totalorder %s89, %s105
      %p107 = scmp.eq.s32.totalorder %s15, 0
      %p108 = por %p106, %p107
      %s109 = ssub.s32 %s16, %s28
      %p110 = scmp.eq.s32.totalorder %s109, 0
      %s112 = sadd.s32 %s111, 1
      %s113 = scalar_select %p110, %s111, %s112
      %p116 = pneg %p110
      %p117 = scmp.eq.s32.totalorder %s9, 7
      %p118 = por %p116, %p117
      %p119 = scmp.ne.s32.totalorder %s111, %s114
      %p120 = scmp.eq.s32.totalorder %s9, 0
      %p121 = por %p119, %p120
      %p122 = scmp.ne.s32.totalorder %s111, %s114
      %p123 = scmp.eq.s32.totalorder %s14, 7
      %p124 = por %p122, %p123
      %p125 = scmp.ne.s32.totalorder %s114, %s115
      %p126 = scmp.eq.s32.totalorder %s14, 0
      %p127 = por %p125, %p126
      %p128 = scmp.ne.s32.totalorder %s114, %s115
      %p129 = scmp.eq.s32.totalorder %s15, 7
      %p130 = por %p128, %p129
      %p132 = scmp.ne.s32.totalorder %s115, %s131
      %p133 = scmp.eq.s32.totalorder %s15, 0
      %p134 = por %p132, %p133
      %p135 = scmp.le.s32.totalorder 1, %s9
      %p136 = scmp.lt.s32.totalorder %s9, 9
      %p137 = pnand %p135, %p136
      %p138 = pneg %p137
      // Predicated region
      $region9: #{cnn_score_forward.6} parent=5 // pred_check
        _
      $region10: #{cnn_score_forward.6} parent=5 // pred_check_branch
        %140 = sbr.rel (%p137) target = $region12
      $region11: #{cnn_score_forward.6} parent=5 // pred_region
        %s141 = ssub.s32 %s9, 1
      $region12: #{cnn_score_forward.6} parent=5 // pred_fallthru
        _
      %p142 = scmp.lt.s32.totalorder %s9, 8
      // Predicated region
      $region13: #{cnn_score_forward.6} parent=5 // pred_check
        %p143 = pneg %p142
      $region14: #{cnn_score_forward.6} parent=5 // pred_check_branch
        %145 = sbr.rel (%p143) target = $region16
      $region15: #{cnn_score_forward.6} parent=5 // pred_region
        // Predicated region
        $region17: #{cnn_score_forward.6} parent=15 // pred_check
          %p146 = pneg %p41
        $region18: #{cnn_score_forward.6} parent=15 // pred_check_branch
          %148 = sbr.rel (%p146) target = $region20
        $region19: #{cnn_score_forward.6} parent=15 // pred_region
          %s149 = smul.u32 16, %s17
          %p150 = scmp.lt.s32.totalorder %s149, 63
          %s151 = scalar_select %p150, %s149, 63
          %s152 = scalar_lea.vmem %s0, %s151
          %s153 = smul.u32 16, %s17
        $region20: #{cnn_score_forward.6} parent=15 // pred_fallthru
          _
        // Predicated region
        $region21: #{cnn_score_forward.6} parent=15 // pred_check
          %p154 = pneg %p69
        $region22: #{cnn_score_forward.6} parent=15 // pred_check_branch
          %156 = sbr.rel (%p154) target = $region24
        $region23: #{cnn_score_forward.6} parent=15 // pred_region
          %s157 = sand.u32 %s59, 1
          %s158 = sand.u32 %s59, 1
          %s159 = smul.addr %s158, 1024
          %s160 = scalar_lea.vmem [#allocation3], %s159
          %s161 = smul.u32 256, %s17
          %s162 = smul.addr %s161, 2
          %s163 = sadd.s32 %s16, %s162
          %s164 = smul.addr %s163, 4
          %s165 = scalar_lea.vmem %s1, %s164
          // Predicated region
          $region25: #{cnn_score_forward.6} parent=23 // pred_check
            _
          $region26: #{cnn_score_forward.6} parent=23 // pred_check_branch
            %167 = sbr.rel (0) target = $region28
          $region27: #{cnn_score_forward.6} parent=23 // pred_region
            // Predicated region
            $region29: #{cnn_score_forward.6} parent=27 // pred_check
              _
            $region30: #{cnn_score_forward.6} parent=27 // pred_check_branch
              %169 = sbr.rel target = $region32
            $region31: #{cnn_score_forward.6} parent=27 // pred_region
              // Predicated region
              $region44: #{cnn_score_forward.6} parent=31 // pred_check
                _
              $region45: #{cnn_score_forward.6} parent=31 // pred_check_branch
                %695 = sbr.rel (0) target = $region47
              $region46: #{cnn_score_forward.6} parent=31 // pred_region
                loop: start=0, step=1, limit=1
                $region48: #{cnn_score_forward.6} parent=46 // loop_pre_header
                  _
                $region49: #{cnn_score_forward.6} parent=46 // loop_header
                  %s697 = sphi 0, %s701
                  %p698 = scmp.ge.s32.totalorder %s697, 1
                  %s702 = sphi %s165, %s165
                  %s703 = sphi %s160, %s160
                $region50: #{cnn_score_forward.6} parent=46 // loop_header_branch
                  %700 = sbr.rel (%p698) target = $region54
                $region51: #{cnn_score_forward.6} parent=46 // loop_body
                  _
                $region52: #{cnn_score_forward.6} parent=46 // loop_footer
                  %s701 = sadd.s32 1, %s697
                $region53: #{cnn_score_forward.6} parent=46 // loop_footer_branch
                  %696 = sbr.rel target = $region49
                $region54: #{cnn_score_forward.6} parent=46 // loop_exit
                  _
                %s705 = ssub.s32 16, 1
                loop: start=0, step=1, limit=1
                $region55: #{cnn_score_forward.6} parent=46 // loop_pre_header
                  _
                $region56: #{cnn_score_forward.6} parent=46 // loop_header
                  %s707 = sphi 0, %s711
                  %p708 = scmp.ge.s32.totalorder %s707, 1
                  %s712 = sphi %s165, %s165
                  %s713 = sphi %s160, %s160
                $region57: #{cnn_score_forward.6} parent=46 // loop_header_branch
                  %710 = sbr.rel (%p708) target = $region61
                $region58: #{cnn_score_forward.6} parent=46 // loop_body
                  %v714 = vld [vmem:[%s712] sm:%s705]
                  %715 = vst [vmem:[%s713] sm:%s705] %v714
                  %v716 = vld [vmem:[%s712 + $0x8] sm:%s705]
                  %717 = vst [vmem:[%s713 + $0x4] sm:%s705] %v716
                  %v718 = vld [vmem:[%s712 + $0x10] sm:%s705]
                  %719 = vst [vmem:[%s713 + $0x8] sm:%s705] %v718
                  %v720 = vld [vmem:[%s712 + $0x18] sm:%s705]
                  %721 = vst [vmem:[%s713 + $0xc] sm:%s705] %v720
                  %v722 = vld [vmem:[%s712 + $0x20] sm:%s705]
                  %723 = vst [vmem:[%s713 + $0x10] sm:%s705] %v722
                  %v724 = vld [vmem:[%s712 + $0x28] sm:%s705]
                  %725 = vst [vmem:[%s713 + $0x14] sm:%s705] %v724
                  %v726 = vld [vmem:[%s712 + $0x30] sm:%s705]
                  %727 = vst [vmem:[%s713 + $0x18] sm:%s705] %v726
                  %v728 = vld [vmem:[%s712 + $0x38] sm:%s705]
                  %729 = vst [vmem:[%s713 + $0x1c] sm:%s705] %v728
                  %v730 = vld [vmem:[%s712 + $0x40] sm:%s705]
                  %731 = vst [vmem:[%s713 + $0x20] sm:%s705] %v730
                  %v732 = vld [vmem:[%s712 + $0x48] sm:%s705]
                  %733 = vst [vmem:[%s713 + $0x24] sm:%s705] %v732
                  %v734 = vld [vmem:[%s712 + $0x50] sm:%s705]
                  %735 = vst [vmem:[%s713 + $0x28] sm:%s705] %v734
                  %v736 = vld [vmem:[%s712 + $0x58] sm:%s705]
                  %737 = vst [vmem:[%s713 + $0x2c] sm:%s705] %v736
                  %v738 = vld [vmem:[%s712 + $0x60] sm:%s705]
                  %739 = vst [vmem:[%s713 + $0x30] sm:%s705] %v738
                  %v740 = vld [vmem:[%s712 + $0x68] sm:%s705]
                  %741 = vst [vmem:[%s713 + $0x34] sm:%s705] %v740
                  %v742 = vld [vmem:[%s712 + $0x70] sm:%s705]
                  %743 = vst [vmem:[%s713 + $0x38] sm:%s705] %v742
                  %v744 = vld [vmem:[%s712 + $0x78] sm:%s705]
                  %745 = vst [vmem:[%s713 + $0x3c] sm:%s705] %v744
                  %v746 = vld [vmem:[%s712 + $0x80] sm:%s705]
                  %747 = vst [vmem:[%s713 + $0x40] sm:%s705] %v746
                  %v748 = vld [vmem:[%s712 + $0x88] sm:%s705]
                  %749 = vst [vmem:[%s713 + $0x44] sm:%s705] %v748
                  %v750 = vld [vmem:[%s712 + $0x90] sm:%s705]
                  %751 = vst [vmem:[%s713 + $0x48] sm:%s705] %v750
                  %v752 = vld [vmem:[%s712 + $0x98] sm:%s705]
                  %753 = vst [vmem:[%s713 + $0x4c] sm:%s705] %v752
                  %v754 = vld [vmem:[%s712 + $0xa0] sm:%s705]
                  %755 = vst [vmem:[%s713 + $0x50] sm:%s705] %v754
                  %v756 = vld [vmem:[%s712 + $0xa8] sm:%s705]
                  %757 = vst [vmem:[%s713 + $0x54] sm:%s705] %v756
                  %v758 = vld [vmem:[%s712 + $0xb0] sm:%s705]
                  %759 = vst [vmem:[%s713 + $0x58] sm:%s705] %v758
                  %v760 = vld [vmem:[%s712 + $0xb8] sm:%s705]
                  %761 = vst [vmem:[%s713 + $0x5c] sm:%s705] %v760
                  %v762 = vld [vmem:[%s712 + $0xc0] sm:%s705]
                  %763 = vst [vmem:[%s713 + $0x60] sm:%s705] %v762
                  %v764 = vld [vmem:[%s712 + $0xc8] sm:%s705]
                  %765 = vst [vmem:[%s713 + $0x64] sm:%s705] %v764
                  %v766 = vld [vmem:[%s712 + $0xd0] sm:%s705]
                  %767 = vst [vmem:[%s713 + $0x68] sm:%s705] %v766
                  %v768 = vld [vmem:[%s712 + $0xd8] sm:%s705]
                  %769 = vst [vmem:[%s713 + $0x6c] sm:%s705] %v768
                  %v770 = vld [vmem:[%s712 + $0xe0] sm:%s705]
                  %771 = vst [vmem:[%s713 + $0x70] sm:%s705] %v770
                  %v772 = vld [vmem:[%s712 + $0xe8] sm:%s705]
                  %773 = vst [vmem:[%s713 + $0x74] sm:%s705] %v772
                  %v774 = vld [vmem:[%s712 + $0xf0] sm:%s705]
                  %775 = vst [vmem:[%s713 + $0x78] sm:%s705] %v774
                  %v776 = vld [vmem:[%s712 + $0xf8] sm:%s705]
                  %777 = vst [vmem:[%s713 + $0x7c] sm:%s705] %v776
                  %v778 = vld [vmem:[%s712 + $0x100] sm:%s705]
                  %779 = vst [vmem:[%s713 + $0x80] sm:%s705] %v778
                  %v780 = vld [vmem:[%s712 + $0x108] sm:%s705]
                  %781 = vst [vmem:[%s713 + $0x84] sm:%s705] %v780
                  %v782 = vld [vmem:[%s712 + $0x110] sm:%s705]
                  %783 = vst [vmem:[%s713 + $0x88] sm:%s705] %v782
                  %v784 = vld [vmem:[%s712 + $0x118] sm:%s705]
                  %785 = vst [vmem:[%s713 + $0x8c] sm:%s705] %v784
                  %v786 = vld [vmem:[%s712 + $0x120] sm:%s705]
                  %787 = vst [vmem:[%s713 + $0x90] sm:%s705] %v786
                  %v788 = vld [vmem:[%s712 + $0x128] sm:%s705]
                  %789 = vst [vmem:[%s713 + $0x94] sm:%s705] %v788
                  %v790 = vld [vmem:[%s712 + $0x130] sm:%s705]
                  %791 = vst [vmem:[%s713 + $0x98] sm:%s705] %v790
                  %v792 = vld [vmem:[%s712 + $0x138] sm:%s705]
                  %793 = vst [vmem:[%s713 + $0x9c] sm:%s705] %v792
                  %v794 = vld [vmem:[%s712 + $0x140] sm:%s705]
                  %795 = vst [vmem:[%s713 + $0xa0] sm:%s705] %v794
                  %v796 = vld [vmem:[%s712 + $0x148] sm:%s705]
                  %797 = vst [vmem:[%s713 + $0xa4] sm:%s705] %v796
                  %v798 = vld [vmem:[%s712 + $0x150] sm:%s705]
                  %799 = vst [vmem:[%s713 + $0xa8] sm:%s705] %v798
                  %v800 = vld [vmem:[%s712 + $0x158] sm:%s705]
                  %801 = vst [vmem:[%s713 + $0xac] sm:%s705] %v800
                  %v802 = vld [vmem:[%s712 + $0x160] sm:%s705]
                  %803 = vst [vmem:[%s713 + $0xb0] sm:%s705] %v802
                  %v804 = vld [vmem:[%s712 + $0x168] sm:%s705]
                  %805 = vst [vmem:[%s713 + $0xb4] sm:%s705] %v804
                  %v806 = vld [vmem:[%s712 + $0x170] sm:%s705]
                  %807 = vst [vmem:[%s713 + $0xb8] sm:%s705] %v806
                  %v808 = vld [vmem:[%s712 + $0x178] sm:%s705]
                  %809 = vst [vmem:[%s713 + $0xbc] sm:%s705] %v808
                  %v810 = vld [vmem:[%s712 + $0x180] sm:%s705]
                  %811 = vst [vmem:[%s713 + $0xc0] sm:%s705] %v810
                  %v812 = vld [vmem:[%s712 + $0x188] sm:%s705]
                  %813 = vst [vmem:[%s713 + $0xc4] sm:%s705] %v812
                  %v814 = vld [vmem:[%s712 + $0x190] sm:%s705]
                  %815 = vst [vmem:[%s713 + $0xc8] sm:%s705] %v814
                  %v816 = vld [vmem:[%s712 + $0x198] sm:%s705]
                  %817 = vst [vmem:[%s713 + $0xcc] sm:%s705] %v816
                  %v818 = vld [vmem:[%s712 + $0x1a0] sm:%s705]
                  %819 = vst [vmem:[%s713 + $0xd0] sm:%s705] %v818
                  %v820 = vld [vmem:[%s712 + $0x1a8] sm:%s705]
                  %821 = vst [vmem:[%s713 + $0xd4] sm:%s705] %v820
                  %v822 = vld [vmem:[%s712 + $0x1b0] sm:%s705]
                  %823 = vst [vmem:[%s713 + $0xd8] sm:%s705] %v822
                  %v824 = vld [vmem:[%s712 + $0x1b8] sm:%s705]
                  %825 = vst [vmem:[%s713 + $0xdc] sm:%s705] %v824
                  %v826 = vld [vmem:[%s712 + $0x1c0] sm:%s705]
                  %827 = vst [vmem:[%s713 + $0xe0] sm:%s705] %v826
                  %v828 = vld [vmem:[%s712 + $0x1c8] sm:%s705]
                  %829 = vst [vmem:[%s713 + $0xe4] sm:%s705] %v828
                  %v830 = vld [vmem:[%s712 + $0x1d0] sm:%s705]
                  %831 = vst [vmem:[%s713 + $0xe8] sm:%s705] %v830
                  %v832 = vld [vmem:[%s712 + $0x1d8] sm:%s705]
                  %833 = vst [vmem:[%s713 + $0xec] sm:%s705] %v832
                  %v834 = vld [vmem:[%s712 + $0x1e0] sm:%s705]
                  %835 = vst [vmem:[%s713 + $0xf0] sm:%s705] %v834
                  %v836 = vld [vmem:[%s712 + $0x1e8] sm:%s705]
                  %837 = vst [vmem:[%s713 + $0xf4] sm:%s705] %v836
                  %v838 = vld [vmem:[%s712 + $0x1f0] sm:%s705]
                  %839 = vst [vmem:[%s713 + $0xf8] sm:%s705] %v838
                  %v840 = vld [vmem:[%s712 + $0x1f8] sm:%s705]
                  %841 = vst [vmem:[%s713 + $0xfc] sm:%s705] %v840
                  %v842 = vld [vmem:[%s712 + $0x200] sm:%s705]
                  %843 = vst [vmem:[%s713 + $0x100] sm:%s705] %v842
                  %v844 = vld [vmem:[%s712 + $0x208] sm:%s705]
                  %845 = vst [vmem:[%s713 + $0x104] sm:%s705] %v844
                  %v846 = vld [vmem:[%s712 + $0x210] sm:%s705]
                  %847 = vst [vmem:[%s713 + $0x108] sm:%s705] %v846
                  %v848 = vld [vmem:[%s712 + $0x218] sm:%s705]
                  %849 = vst [vmem:[%s713 + $0x10c] sm:%s705] %v848
                  %v850 = vld [vmem:[%s712 + $0x220] sm:%s705]
                  %851 = vst [vmem:[%s713 + $0x110] sm:%s705] %v850
                  %v852 = vld [vmem:[%s712 + $0x228] sm:%s705]
                  %853 = vst [vmem:[%s713 + $0x114] sm:%s705] %v852
                  %v854 = vld [vmem:[%s712 + $0x230] sm:%s705]
                  %855 = vst [vmem:[%s713 + $0x118] sm:%s705] %v854
                  %v856 = vld [vmem:[%s712 + $0x238] sm:%s705]
                  %857 = vst [vmem:[%s713 + $0x11c] sm:%s705] %v856
                  %v858 = vld [vmem:[%s712 + $0x240] sm:%s705]
                  %859 = vst [vmem:[%s713 + $0x120] sm:%s705] %v858
                  %v860 = vld [vmem:[%s712 + $0x248] sm:%s705]
                  %861 = vst [vmem:[%s713 + $0x124] sm:%s705] %v860
                  %v862 = vld [vmem:[%s712 + $0x250] sm:%s705]
                  %863 = vst [vmem:[%s713 + $0x128] sm:%s705] %v862
                  %v864 = vld [vmem:[%s712 + $0x258] sm:%s705]
                  %865 = vst [vmem:[%s713 + $0x12c] sm:%s705] %v864
                  %v866 = vld [vmem:[%s712 + $0x260] sm:%s705]
                  %867 = vst [vmem:[%s713 + $0x130] sm:%s705] %v866
                  %v868 = vld [vmem:[%s712 + $0x268] sm:%s705]
                  %869 = vst [vmem:[%s713 + $0x134] sm:%s705] %v868
                  %v870 = vld [vmem:[%s712 + $0x270] sm:%s705]
                  %871 = vst [vmem:[%s713 + $0x138] sm:%s705] %v870
                  %v872 = vld [vmem:[%s712 + $0x278] sm:%s705]
                  %873 = vst [vmem:[%s713 + $0x13c] sm:%s705] %v872
                  %v874 = vld [vmem:[%s712 + $0x280] sm:%s705]
                  %875 = vst [vmem:[%s713 + $0x140] sm:%s705] %v874
                  %v876 = vld [vmem:[%s712 + $0x288] sm:%s705]
                  %877 = vst [vmem:[%s713 + $0x144] sm:%s705] %v876
                  %v878 = vld [vmem:[%s712 + $0x290] sm:%s705]
                  %879 = vst [vmem:[%s713 + $0x148] sm:%s705] %v878
                  %v880 = vld [vmem:[%s712 + $0x298] sm:%s705]
                  %881 = vst [vmem:[%s713 + $0x14c] sm:%s705] %v880
                  %v882 = vld [vmem:[%s712 + $0x2a0] sm:%s705]
                  %883 = vst [vmem:[%s713 + $0x150] sm:%s705] %v882
                  %v884 = vld [vmem:[%s712 + $0x2a8] sm:%s705]
                  %885 = vst [vmem:[%s713 + $0x154] sm:%s705] %v884
                  %v886 = vld [vmem:[%s712 + $0x2b0] sm:%s705]
                  %887 = vst [vmem:[%s713 + $0x158] sm:%s705] %v886
                  %v888 = vld [vmem:[%s712 + $0x2b8] sm:%s705]
                  %889 = vst [vmem:[%s713 + $0x15c] sm:%s705] %v888
                  %v890 = vld [vmem:[%s712 + $0x2c0] sm:%s705]
                  %891 = vst [vmem:[%s713 + $0x160] sm:%s705] %v890
                  %v892 = vld [vmem:[%s712 + $0x2c8] sm:%s705]
                  %893 = vst [vmem:[%s713 + $0x164] sm:%s705] %v892
                  %v894 = vld [vmem:[%s712 + $0x2d0] sm:%s705]
                  %895 = vst [vmem:[%s713 + $0x168] sm:%s705] %v894
                  %v896 = vld [vmem:[%s712 + $0x2d8] sm:%s705]
                  %897 = vst [vmem:[%s713 + $0x16c] sm:%s705] %v896
                  %v898 = vld [vmem:[%s712 + $0x2e0] sm:%s705]
                  %899 = vst [vmem:[%s713 + $0x170] sm:%s705] %v898
                  %v900 = vld [vmem:[%s712 + $0x2e8] sm:%s705]
                  %901 = vst [vmem:[%s713 + $0x174] sm:%s705] %v900
                  %v902 = vld [vmem:[%s712 + $0x2f0] sm:%s705]
                  %903 = vst [vmem:[%s713 + $0x178] sm:%s705] %v902
                  %v904 = vld [vmem:[%s712 + $0x2f8] sm:%s705]
                  %905 = vst [vmem:[%s713 + $0x17c] sm:%s705] %v904
                  %v906 = vld [vmem:[%s712 + $0x300] sm:%s705]
                  %907 = vst [vmem:[%s713 + $0x180] sm:%s705] %v906
                  %v908 = vld [vmem:[%s712 + $0x308] sm:%s705]
                  %909 = vst [vmem:[%s713 + $0x184] sm:%s705] %v908
                  %v910 = vld [vmem:[%s712 + $0x310] sm:%s705]
                  %911 = vst [vmem:[%s713 + $0x188] sm:%s705] %v910
                  %v912 = vld [vmem:[%s712 + $0x318] sm:%s705]
                  %913 = vst [vmem:[%s713 + $0x18c] sm:%s705] %v912
                  %v914 = vld [vmem:[%s712 + $0x320] sm:%s705]
                  %915 = vst [vmem:[%s713 + $0x190] sm:%s705] %v914
                  %v916 = vld [vmem:[%s712 + $0x328] sm:%s705]
                  %917 = vst [vmem:[%s713 + $0x194] sm:%s705] %v916
                  %v918 = vld [vmem:[%s712 + $0x330] sm:%s705]
                  %919 = vst [vmem:[%s713 + $0x198] sm:%s705] %v918
                  %v920 = vld [vmem:[%s712 + $0x338] sm:%s705]
                  %921 = vst [vmem:[%s713 + $0x19c] sm:%s705] %v920
                  %v922 = vld [vmem:[%s712 + $0x340] sm:%s705]
                  %923 = vst [vmem:[%s713 + $0x1a0] sm:%s705] %v922
                  %v924 = vld [vmem:[%s712 + $0x348] sm:%s705]
                  %925 = vst [vmem:[%s713 + $0x1a4] sm:%s705] %v924
                  %v926 = vld [vmem:[%s712 + $0x350] sm:%s705]
                  %927 = vst [vmem:[%s713 + $0x1a8] sm:%s705] %v926
                  %v928 = vld [vmem:[%s712 + $0x358] sm:%s705]
                  %929 = vst [vmem:[%s713 + $0x1ac] sm:%s705] %v928
                  %v930 = vld [vmem:[%s712 + $0x360] sm:%s705]
                  %931 = vst [vmem:[%s713 + $0x1b0] sm:%s705] %v930
                  %v932 = vld [vmem:[%s712 + $0x368] sm:%s705]
                  %933 = vst [vmem:[%s713 + $0x1b4] sm:%s705] %v932
                  %v934 = vld [vmem:[%s712 + $0x370] sm:%s705]
                  %935 = vst [vmem:[%s713 + $0x1b8] sm:%s705] %v934
                  %v936 = vld [vmem:[%s712 + $0x378] sm:%s705]
                  %937 = vst [vmem:[%s713 + $0x1bc] sm:%s705] %v936
                  %v938 = vld [vmem:[%s712 + $0x380] sm:%s705]
                  %939 = vst [vmem:[%s713 + $0x1c0] sm:%s705] %v938
                  %v940 = vld [vmem:[%s712 + $0x388] sm:%s705]
                  %941 = vst [vmem:[%s713 + $0x1c4] sm:%s705] %v940
                  %v942 = vld [vmem:[%s712 + $0x390] sm:%s705]
                  %943 = vst [vmem:[%s713 + $0x1c8] sm:%s705] %v942
                  %v944 = vld [vmem:[%s712 + $0x398] sm:%s705]
                  %945 = vst [vmem:[%s713 + $0x1cc] sm:%s705] %v944
                  %v946 = vld [vmem:[%s712 + $0x3a0] sm:%s705]
                  %947 = vst [vmem:[%s713 + $0x1d0] sm:%s705] %v946
                  %v948 = vld [vmem:[%s712 + $0x3a8] sm:%s705]
                  %949 = vst [vmem:[%s713 + $0x1d4] sm:%s705] %v948
                  %v950 = vld [vmem:[%s712 + $0x3b0] sm:%s705]
                  %951 = vst [vmem:[%s713 + $0x1d8] sm:%s705] %v950
                  %v952 = vld [vmem:[%s712 + $0x3b8] sm:%s705]
                  %953 = vst [vmem:[%s713 + $0x1dc] sm:%s705] %v952
                  %v954 = vld [vmem:[%s712 + $0x3c0] sm:%s705]
                  %955 = vst [vmem:[%s713 + $0x1e0] sm:%s705] %v954
                  %v956 = vld [vmem:[%s712 + $0x3c8] sm:%s705]
                  %957 = vst [vmem:[%s713 + $0x1e4] sm:%s705] %v956
                  %v958 = vld [vmem:[%s712 + $0x3d0] sm:%s705]
                  %959 = vst [vmem:[%s713 + $0x1e8] sm:%s705] %v958
                  %v960 = vld [vmem:[%s712 + $0x3d8] sm:%s705]
                  %961 = vst [vmem:[%s713 + $0x1ec] sm:%s705] %v960
                  %v962 = vld [vmem:[%s712 + $0x3e0] sm:%s705]
                  %963 = vst [vmem:[%s713 + $0x1f0] sm:%s705] %v962
                  %v964 = vld [vmem:[%s712 + $0x3e8] sm:%s705]
                  %965 = vst [vmem:[%s713 + $0x1f4] sm:%s705] %v964
                  %v966 = vld [vmem:[%s712 + $0x3f0] sm:%s705]
                  %967 = vst [vmem:[%s713 + $0x1f8] sm:%s705] %v966
                  %v968 = vld [vmem:[%s712 + $0x3f8] sm:%s705]
                  %969 = vst [vmem:[%s713 + $0x1fc] sm:%s705] %v968
                  %v970 = vld [vmem:[%s712 + $0x400] sm:%s705]
                  %971 = vst [vmem:[%s713 + $0x200] sm:%s705] %v970
                  %v972 = vld [vmem:[%s712 + $0x408] sm:%s705]
                  %973 = vst [vmem:[%s713 + $0x204] sm:%s705] %v972
                  %v974 = vld [vmem:[%s712 + $0x410] sm:%s705]
                  %975 = vst [vmem:[%s713 + $0x208] sm:%s705] %v974
                  %v976 = vld [vmem:[%s712 + $0x418] sm:%s705]
                  %977 = vst [vmem:[%s713 + $0x20c] sm:%s705] %v976
                  %v978 = vld [vmem:[%s712 + $0x420] sm:%s705]
                  %979 = vst [vmem:[%s713 + $0x210] sm:%s705] %v978
                  %v980 = vld [vmem:[%s712 + $0x428] sm:%s705]
                  %981 = vst [vmem:[%s713 + $0x214] sm:%s705] %v980
                  %v982 = vld [vmem:[%s712 + $0x430] sm:%s705]
                  %983 = vst [vmem:[%s713 + $0x218] sm:%s705] %v982
                  %v984 = vld [vmem:[%s712 + $0x438] sm:%s705]
                  %985 = vst [vmem:[%s713 + $0x21c] sm:%s705] %v984
                  %v986 = vld [vmem:[%s712 + $0x440] sm:%s705]
                  %987 = vst [vmem:[%s713 + $0x220] sm:%s705] %v986
                  %v988 = vld [vmem:[%s712 + $0x448] sm:%s705]
                  %989 = vst [vmem:[%s713 + $0x224] sm:%s705] %v988
                  %v990 = vld [vmem:[%s712 + $0x450] sm:%s705]
                  %991 = vst [vmem:[%s713 + $0x228] sm:%s705] %v990
                  %v992 = vld [vmem:[%s712 + $0x458] sm:%s705]
                  %993 = vst [vmem:[%s713 + $0x22c] sm:%s705] %v992
                  %v994 = vld [vmem:[%s712 + $0x460] sm:%s705]
                  %995 = vst [vmem:[%s713 + $0x230] sm:%s705] %v994
                  %v996 = vld [vmem:[%s712 + $0x468] sm:%s705]
                  %997 = vst [vmem:[%s713 + $0x234] sm:%s705] %v996
                  %v998 = vld [vmem:[%s712 + $0x470] sm:%s705]
                  %999 = vst [vmem:[%s713 + $0x238] sm:%s705] %v998
                  %v1000 = vld [vmem:[%s712 + $0x478] sm:%s705]
                  %1001 = vst [vmem:[%s713 + $0x23c] sm:%s705] %v1000
                  %v1002 = vld [vmem:[%s712 + $0x480] sm:%s705]
                  %1003 = vst [vmem:[%s713 + $0x240] sm:%s705] %v1002
                  %v1004 = vld [vmem:[%s712 + $0x488] sm:%s705]
                  %1005 = vst [vmem:[%s713 + $0x244] sm:%s705] %v1004
                  %v1006 = vld [vmem:[%s712 + $0x490] sm:%s705]
                  %1007 = vst [vmem:[%s713 + $0x248] sm:%s705] %v1006
                  %v1008 = vld [vmem:[%s712 + $0x498] sm:%s705]
                  %1009 = vst [vmem:[%s713 + $0x24c] sm:%s705] %v1008
                  %v1010 = vld [vmem:[%s712 + $0x4a0] sm:%s705]
                  %1011 = vst [vmem:[%s713 + $0x250] sm:%s705] %v1010
                  %v1012 = vld [vmem:[%s712 + $0x4a8] sm:%s705]
                  %1013 = vst [vmem:[%s713 + $0x254] sm:%s705] %v1012
                  %v1014 = vld [vmem:[%s712 + $0x4b0] sm:%s705]
                  %1015 = vst [vmem:[%s713 + $0x258] sm:%s705] %v1014
                  %v1016 = vld [vmem:[%s712 + $0x4b8] sm:%s705]
                  %1017 = vst [vmem:[%s713 + $0x25c] sm:%s705] %v1016
                  %v1018 = vld [vmem:[%s712 + $0x4c0] sm:%s705]
                  %1019 = vst [vmem:[%s713 + $0x260] sm:%s705] %v1018
                  %v1020 = vld [vmem:[%s712 + $0x4c8] sm:%s705]
                  %1021 = vst [vmem:[%s713 + $0x264] sm:%s705] %v1020
                  %v1022 = vld [vmem:[%s712 + $0x4d0] sm:%s705]
                  %1023 = vst [vmem:[%s713 + $0x268] sm:%s705] %v1022
                  %v1024 = vld [vmem:[%s712 + $0x4d8] sm:%s705]
                  %1025 = vst [vmem:[%s713 + $0x26c] sm:%s705] %v1024
                  %v1026 = vld [vmem:[%s712 + $0x4e0] sm:%s705]
                  %1027 = vst [vmem:[%s713 + $0x270] sm:%s705] %v1026
                  %v1028 = vld [vmem:[%s712 + $0x4e8] sm:%s705]
                  %1029 = vst [vmem:[%s713 + $0x274] sm:%s705] %v1028
                  %v1030 = vld [vmem:[%s712 + $0x4f0] sm:%s705]
                  %1031 = vst [vmem:[%s713 + $0x278] sm:%s705] %v1030
                  %v1032 = vld [vmem:[%s712 + $0x4f8] sm:%s705]
                  %1033 = vst [vmem:[%s713 + $0x27c] sm:%s705] %v1032
                  %v1034 = vld [vmem:[%s712 + $0x500] sm:%s705]
                  %1035 = vst [vmem:[%s713 + $0x280] sm:%s705] %v1034
                  %v1036 = vld [vmem:[%s712 + $0x508] sm:%s705]
                  %1037 = vst [vmem:[%s713 + $0x284] sm:%s705] %v1036
                  %v1038 = vld [vmem:[%s712 + $0x510] sm:%s705]
                  %1039 = vst [vmem:[%s713 + $0x288] sm:%s705] %v1038
                  %v1040 = vld [vmem:[%s712 + $0x518] sm:%s705]
                  %1041 = vst [vmem:[%s713 + $0x28c] sm:%s705] %v1040
                  %v1042 = vld [vmem:[%s712 + $0x520] sm:%s705]
                  %1043 = vst [vmem:[%s713 + $0x290] sm:%s705] %v1042
                  %v1044 = vld [vmem:[%s712 + $0x528] sm:%s705]
                  %1045 = vst [vmem:[%s713 + $0x294] sm:%s705] %v1044
                  %v1046 = vld [vmem:[%s712 + $0x530] sm:%s705]
                  %1047 = vst [vmem:[%s713 + $0x298] sm:%s705] %v1046
                  %v1048 = vld [vmem:[%s712 + $0x538] sm:%s705]
                  %1049 = vst [vmem:[%s713 + $0x29c] sm:%s705] %v1048
                  %v1050 = vld [vmem:[%s712 + $0x540] sm:%s705]
                  %1051 = vst [vmem:[%s713 + $0x2a0] sm:%s705] %v1050
                  %v1052 = vld [vmem:[%s712 + $0x548] sm:%s705]
                  %1053 = vst [vmem:[%s713 + $0x2a4] sm:%s705] %v1052
                  %v1054 = vld [vmem:[%s712 + $0x550] sm:%s705]
                  %1055 = vst [vmem:[%s713 + $0x2a8] sm:%s705] %v1054
                  %v1056 = vld [vmem:[%s712 + $0x558] sm:%s705]
                  %1057 = vst [vmem:[%s713 + $0x2ac] sm:%s705] %v1056
                  %v1058 = vld [vmem:[%s712 + $0x560] sm:%s705]
                  %1059 = vst [vmem:[%s713 + $0x2b0] sm:%s705] %v1058
                  %v1060 = vld [vmem:[%s712 + $0x568] sm:%s705]
                  %1061 = vst [vmem:[%s713 + $0x2b4] sm:%s705] %v1060
                  %v1062 = vld [vmem:[%s712 + $0x570] sm:%s705]
                  %1063 = vst [vmem:[%s713 + $0x2b8] sm:%s705] %v1062
                  %v1064 = vld [vmem:[%s712 + $0x578] sm:%s705]
                  %1065 = vst [vmem:[%s713 + $0x2bc] sm:%s705] %v1064
                  %v1066 = vld [vmem:[%s712 + $0x580] sm:%s705]
                  %1067 = vst [vmem:[%s713 + $0x2c0] sm:%s705] %v1066
                  %v1068 = vld [vmem:[%s712 + $0x588] sm:%s705]
                  %1069 = vst [vmem:[%s713 + $0x2c4] sm:%s705] %v1068
                  %v1070 = vld [vmem:[%s712 + $0x590] sm:%s705]
                  %1071 = vst [vmem:[%s713 + $0x2c8] sm:%s705] %v1070
                  %v1072 = vld [vmem:[%s712 + $0x598] sm:%s705]
                  %1073 = vst [vmem:[%s713 + $0x2cc] sm:%s705] %v1072
                  %v1074 = vld [vmem:[%s712 + $0x5a0] sm:%s705]
                  %1075 = vst [vmem:[%s713 + $0x2d0] sm:%s705] %v1074
                  %v1076 = vld [vmem:[%s712 + $0x5a8] sm:%s705]
                  %1077 = vst [vmem:[%s713 + $0x2d4] sm:%s705] %v1076
                  %v1078 = vld [vmem:[%s712 + $0x5b0] sm:%s705]
                  %1079 = vst [vmem:[%s713 + $0x2d8] sm:%s705] %v1078
                  %v1080 = vld [vmem:[%s712 + $0x5b8] sm:%s705]
                  %1081 = vst [vmem:[%s713 + $0x2dc] sm:%s705] %v1080
                  %v1082 = vld [vmem:[%s712 + $0x5c0] sm:%s705]
                  %1083 = vst [vmem:[%s713 + $0x2e0] sm:%s705] %v1082
                  %v1084 = vld [vmem:[%s712 + $0x5c8] sm:%s705]
                  %1085 = vst [vmem:[%s713 + $0x2e4] sm:%s705] %v1084
                  %v1086 = vld [vmem:[%s712 + $0x5d0] sm:%s705]
                  %1087 = vst [vmem:[%s713 + $0x2e8] sm:%s705] %v1086
                  %v1088 = vld [vmem:[%s712 + $0x5d8] sm:%s705]
                  %1089 = vst [vmem:[%s713 + $0x2ec] sm:%s705] %v1088
                  %v1090 = vld [vmem:[%s712 + $0x5e0] sm:%s705]
                  %1091 = vst [vmem:[%s713 + $0x2f0] sm:%s705] %v1090
                  %v1092 = vld [vmem:[%s712 + $0x5e8] sm:%s705]
                  %1093 = vst [vmem:[%s713 + $0x2f4] sm:%s705] %v1092
                  %v1094 = vld [vmem:[%s712 + $0x5f0] sm:%s705]
                  %1095 = vst [vmem:[%s713 + $0x2f8] sm:%s705] %v1094
                  %v1096 = vld [vmem:[%s712 + $0x5f8] sm:%s705]
                  %1097 = vst [vmem:[%s713 + $0x2fc] sm:%s705] %v1096
                  %v1098 = vld [vmem:[%s712 + $0x600] sm:%s705]
                  %1099 = vst [vmem:[%s713 + $0x300] sm:%s705] %v1098
                  %v1100 = vld [vmem:[%s712 + $0x608] sm:%s705]
                  %1101 = vst [vmem:[%s713 + $0x304] sm:%s705] %v1100
                  %v1102 = vld [vmem:[%s712 + $0x610] sm:%s705]
                  %1103 = vst [vmem:[%s713 + $0x308] sm:%s705] %v1102
                  %v1104 = vld [vmem:[%s712 + $0x618] sm:%s705]
                  %1105 = vst [vmem:[%s713 + $0x30c] sm:%s705] %v1104
                  %v1106 = vld [vmem:[%s712 + $0x620] sm:%s705]
                  %1107 = vst [vmem:[%s713 + $0x310] sm:%s705] %v1106
                  %v1108 = vld [vmem:[%s712 + $0x628] sm:%s705]
                  %1109 = vst [vmem:[%s713 + $0x314] sm:%s705] %v1108
                  %v1110 = vld [vmem:[%s712 + $0x630] sm:%s705]
                  %1111 = vst [vmem:[%s713 + $0x318] sm:%s705] %v1110
                  %v1112 = vld [vmem:[%s712 + $0x638] sm:%s705]
                  %1113 = vst [vmem:[%s713 + $0x31c] sm:%s705] %v1112
                  %v1114 = vld [vmem:[%s712 + $0x640] sm:%s705]
                  %1115 = vst [vmem:[%s713 + $0x320] sm:%s705] %v1114
                  %v1116 = vld [vmem:[%s712 + $0x648] sm:%s705]
                  %1117 = vst [vmem:[%s713 + $0x324] sm:%s705] %v1116
                  %v1118 = vld [vmem:[%s712 + $0x650] sm:%s705]
                  %1119 = vst [vmem:[%s713 + $0x328] sm:%s705] %v1118
                  %v1120 = vld [vmem:[%s712 + $0x658] sm:%s705]
                  %1121 = vst [vmem:[%s713 + $0x32c] sm:%s705] %v1120
                  %v1122 = vld [vmem:[%s712 + $0x660] sm:%s705]
                  %1123 = vst [vmem:[%s713 + $0x330] sm:%s705] %v1122
                  %v1124 = vld [vmem:[%s712 + $0x668] sm:%s705]
                  %1125 = vst [vmem:[%s713 + $0x334] sm:%s705] %v1124
                  %v1126 = vld [vmem:[%s712 + $0x670] sm:%s705]
                  %1127 = vst [vmem:[%s713 + $0x338] sm:%s705] %v1126
                  %v1128 = vld [vmem:[%s712 + $0x678] sm:%s705]
                  %1129 = vst [vmem:[%s713 + $0x33c] sm:%s705] %v1128
                  %v1130 = vld [vmem:[%s712 + $0x680] sm:%s705]
                  %1131 = vst [vmem:[%s713 + $0x340] sm:%s705] %v1130
                  %v1132 = vld [vmem:[%s712 + $0x688] sm:%s705]
                  %1133 = vst [vmem:[%s713 + $0x344] sm:%s705] %v1132
                  %v1134 = vld [vmem:[%s712 + $0x690] sm:%s705]
                  %1135 = vst [vmem:[%s713 + $0x348] sm:%s705] %v1134
                  %v1136 = vld [vmem:[%s712 + $0x698] sm:%s705]
                  %1137 = vst [vmem:[%s713 + $0x34c] sm:%s705] %v1136
                  %v1138 = vld [vmem:[%s712 + $0x6a0] sm:%s705]
                  %1139 = vst [vmem:[%s713 + $0x350] sm:%s705] %v1138
                  %v1140 = vld [vmem:[%s712 + $0x6a8] sm:%s705]
                  %1141 = vst [vmem:[%s713 + $0x354] sm:%s705] %v1140
                  %v1142 = vld [vmem:[%s712 + $0x6b0] sm:%s705]
                  %1143 = vst [vmem:[%s713 + $0x358] sm:%s705] %v1142
                  %v1144 = vld [vmem:[%s712 + $0x6b8] sm:%s705]
                  %1145 = vst [vmem:[%s713 + $0x35c] sm:%s705] %v1144
                  %v1146 = vld [vmem:[%s712 + $0x6c0] sm:%s705]
                  %1147 = vst [vmem:[%s713 + $0x360] sm:%s705] %v1146
                  %v1148 = vld [vmem:[%s712 + $0x6c8] sm:%s705]
                  %1149 = vst [vmem:[%s713 + $0x364] sm:%s705] %v1148
                  %v1150 = vld [vmem:[%s712 + $0x6d0] sm:%s705]
                  %1151 = vst [vmem:[%s713 + $0x368] sm:%s705] %v1150
                  %v1152 = vld [vmem:[%s712 + $0x6d8] sm:%s705]
                  %1153 = vst [vmem:[%s713 + $0x36c] sm:%s705] %v1152
                  %v1154 = vld [vmem:[%s712 + $0x6e0] sm:%s705]
                  %1155 = vst [vmem:[%s713 + $0x370] sm:%s705] %v1154
                  %v1156 = vld [vmem:[%s712 + $0x6e8] sm:%s705]
                  %1157 = vst [vmem:[%s713 + $0x374] sm:%s705] %v1156
                  %v1158 = vld [vmem:[%s712 + $0x6f0] sm:%s705]
                  %1159 = vst [vmem:[%s713 + $0x378] sm:%s705] %v1158
                  %v1160 = vld [vmem:[%s712 + $0x6f8] sm:%s705]
                  %1161 = vst [vmem:[%s713 + $0x37c] sm:%s705] %v1160
                  %v1162 = vld [vmem:[%s712 + $0x700] sm:%s705]
                  %1163 = vst [vmem:[%s713 + $0x380] sm:%s705] %v1162
                  %v1164 = vld [vmem:[%s712 + $0x708] sm:%s705]
                  %1165 = vst [vmem:[%s713 + $0x384] sm:%s705] %v1164
                  %v1166 = vld [vmem:[%s712 + $0x710] sm:%s705]
                  %1167 = vst [vmem:[%s713 + $0x388] sm:%s705] %v1166
                  %v1168 = vld [vmem:[%s712 + $0x718] sm:%s705]
                  %1169 = vst [vmem:[%s713 + $0x38c] sm:%s705] %v1168
                  %v1170 = vld [vmem:[%s712 + $0x720] sm:%s705]
                  %1171 = vst [vmem:[%s713 + $0x390] sm:%s705] %v1170
                  %v1172 = vld [vmem:[%s712 + $0x728] sm:%s705]
                  %1173 = vst [vmem:[%s713 + $0x394] sm:%s705] %v1172
                  %v1174 = vld [vmem:[%s712 + $0x730] sm:%s705]
                  %1175 = vst [vmem:[%s713 + $0x398] sm:%s705] %v1174
                  %v1176 = vld [vmem:[%s712 + $0x738] sm:%s705]
                  %1177 = vst [vmem:[%s713 + $0x39c] sm:%s705] %v1176
                  %v1178 = vld [vmem:[%s712 + $0x740] sm:%s705]
                  %1179 = vst [vmem:[%s713 + $0x3a0] sm:%s705] %v1178
                  %v1180 = vld [vmem:[%s712 + $0x748] sm:%s705]
                  %1181 = vst [vmem:[%s713 + $0x3a4] sm:%s705] %v1180
                  %v1182 = vld [vmem:[%s712 + $0x750] sm:%s705]
                  %1183 = vst [vmem:[%s713 + $0x3a8] sm:%s705] %v1182
                  %v1184 = vld [vmem:[%s712 + $0x758] sm:%s705]
                  %1185 = vst [vmem:[%s713 + $0x3ac] sm:%s705] %v1184
                  %v1186 = vld [vmem:[%s712 + $0x760] sm:%s705]
                  %1187 = vst [vmem:[%s713 + $0x3b0] sm:%s705] %v1186
                  %v1188 = vld [vmem:[%s712 + $0x768] sm:%s705]
                  %1189 = vst [vmem:[%s713 + $0x3b4] sm:%s705] %v1188
                  %v1190 = vld [vmem:[%s712 + $0x770] sm:%s705]
                  %1191 = vst [vmem:[%s713 + $0x3b8] sm:%s705] %v1190
                  %v1192 = vld [vmem:[%s712 + $0x778] sm:%s705]
                  %1193 = vst [vmem:[%s713 + $0x3bc] sm:%s705] %v1192
                  %v1194 = vld [vmem:[%s712 + $0x780] sm:%s705]
                  %1195 = vst [vmem:[%s713 + $0x3c0] sm:%s705] %v1194
                  %v1196 = vld [vmem:[%s712 + $0x788] sm:%s705]
                  %1197 = vst [vmem:[%s713 + $0x3c4] sm:%s705] %v1196
                  %v1198 = vld [vmem:[%s712 + $0x790] sm:%s705]
                  %1199 = vst [vmem:[%s713 + $0x3c8] sm:%s705] %v1198
                  %v1200 = vld [vmem:[%s712 + $0x798] sm:%s705]
                  %1201 = vst [vmem:[%s713 + $0x3cc] sm:%s705] %v1200
                  %v1202 = vld [vmem:[%s712 + $0x7a0] sm:%s705]
                  %1203 = vst [vmem:[%s713 + $0x3d0] sm:%s705] %v1202
                  %v1204 = vld [vmem:[%s712 + $0x7a8] sm:%s705]
                  %1205 = vst [vmem:[%s713 + $0x3d4] sm:%s705] %v1204
                  %v1206 = vld [vmem:[%s712 + $0x7b0] sm:%s705]
                  %1207 = vst [vmem:[%s713 + $0x3d8] sm:%s705] %v1206
                  %v1208 = vld [vmem:[%s712 + $0x7b8] sm:%s705]
                  %1209 = vst [vmem:[%s713 + $0x3dc] sm:%s705] %v1208
                  %v1210 = vld [vmem:[%s712 + $0x7c0] sm:%s705]
                  %1211 = vst [vmem:[%s713 + $0x3e0] sm:%s705] %v1210
                  %v1212 = vld [vmem:[%s712 + $0x7c8] sm:%s705]
                  %1213 = vst [vmem:[%s713 + $0x3e4] sm:%s705] %v1212
                  %v1214 = vld [vmem:[%s712 + $0x7d0] sm:%s705]
                  %1215 = vst [vmem:[%s713 + $0x3e8] sm:%s705] %v1214
                  %v1216 = vld [vmem:[%s712 + $0x7d8] sm:%s705]
                  %1217 = vst [vmem:[%s713 + $0x3ec] sm:%s705] %v1216
                  %v1218 = vld [vmem:[%s712 + $0x7e0] sm:%s705]
                  %1219 = vst [vmem:[%s713 + $0x3f0] sm:%s705] %v1218
                  %v1220 = vld [vmem:[%s712 + $0x7e8] sm:%s705]
                  %1221 = vst [vmem:[%s713 + $0x3f4] sm:%s705] %v1220
                  %v1222 = vld [vmem:[%s712 + $0x7f0] sm:%s705]
                  %1223 = vst [vmem:[%s713 + $0x3f8] sm:%s705] %v1222
                  %v1224 = vld [vmem:[%s712 + $0x7f8] sm:%s705]
                  %1225 = vst [vmem:[%s713 + $0x3fc] sm:%s705] %v1224
                $region59: #{cnn_score_forward.6} parent=46 // loop_footer
                  %s711 = sadd.s32 1, %s707
                $region60: #{cnn_score_forward.6} parent=46 // loop_footer_branch
                  %706 = sbr.rel target = $region56
                $region61: #{cnn_score_forward.6} parent=46 // loop_exit
                  _
              $region47: #{cnn_score_forward.6} parent=31 // pred_fallthru
                _
            $region32: #{cnn_score_forward.6} parent=27 // pred_fallthru
              _
            // Predicated region
            $region33: #{cnn_score_forward.6} parent=27 // pred_check
              _
            $region34: #{cnn_score_forward.6} parent=27 // pred_check_branch
              %171 = sbr.rel (0) target = $region36
            $region35: #{cnn_score_forward.6} parent=27 // pred_region
              %s173 = ssub.s32 16, 1
              loop: start=0, step=1, limit=1
              $region37: #{cnn_score_forward.6} parent=35 // loop_pre_header
                _
              $region38: #{cnn_score_forward.6} parent=35 // loop_header
                %s175 = sphi 0, %s179
                %p176 = scmp.ge.s32.totalorder %s175, 1
                %s180 = sphi %s165, %s165
                %s181 = sphi %s160, %s160
              $region39: #{cnn_score_forward.6} parent=35 // loop_header_branch
                %178 = sbr.rel (%p176) target = $region43
              $region40: #{cnn_score_forward.6} parent=35 // loop_body
                %v182 = vld [vmem:[%s180] sm:%s173]
                %183 = vst [vmem:[%s181] sm:%s173] %v182
                %v184 = vld [vmem:[%s180 + $0x8] sm:%s173]
                %185 = vst [vmem:[%s181 + $0x4] sm:%s173] %v184
                %v186 = vld [vmem:[%s180 + $0x10] sm:%s173]
                %187 = vst [vmem:[%s181 + $0x8] sm:%s173] %v186
                %v188 = vld [vmem:[%s180 + $0x18] sm:%s173]
                %189 = vst [vmem:[%s181 + $0xc] sm:%s173] %v188
                %v190 = vld [vmem:[%s180 + $0x20] sm:%s173]
                %191 = vst [vmem:[%s181 + $0x10] sm:%s173] %v190
                %v192 = vld [vmem:[%s180 + $0x28] sm:%s173]
                %193 = vst [vmem:[%s181 + $0x14] sm:%s173] %v192
                %v194 = vld [vmem:[%s180 + $0x30] sm:%s173]
                %195 = vst [vmem:[%s181 + $0x18] sm:%s173] %v194
                %v196 = vld [vmem:[%s180 + $0x38] sm:%s173]
                %197 = vst [vmem:[%s181 + $0x1c] sm:%s173] %v196
                %v198 = vld [vmem:[%s180 + $0x40] sm:%s173]
                %199 = vst [vmem:[%s181 + $0x20] sm:%s173] %v198
                %v200 = vld [vmem:[%s180 + $0x48] sm:%s173]
                %201 = vst [vmem:[%s181 + $0x24] sm:%s173] %v200
                %v202 = vld [vmem:[%s180 + $0x50] sm:%s173]
                %203 = vst [vmem:[%s181 + $0x28] sm:%s173] %v202
                %v204 = vld [vmem:[%s180 + $0x58] sm:%s173]
                %205 = vst [vmem:[%s181 + $0x2c] sm:%s173] %v204
                %v206 = vld [vmem:[%s180 + $0x60] sm:%s173]
                %207 = vst [vmem:[%s181 + $0x30] sm:%s173] %v206
                %v208 = vld [vmem:[%s180 + $0x68] sm:%s173]
                %209 = vst [vmem:[%s181 + $0x34] sm:%s173] %v208
                %v210 = vld [vmem:[%s180 + $0x70] sm:%s173]
                %211 = vst [vmem:[%s181 + $0x38] sm:%s173] %v210
                %v212 = vld [vmem:[%s180 + $0x78] sm:%s173]
                %213 = vst [vmem:[%s181 + $0x3c] sm:%s173] %v212
                %v214 = vld [vmem:[%s180 + $0x80] sm:%s173]
                %215 = vst [vmem:[%s181 + $0x40] sm:%s173] %v214
                %v216 = vld [vmem:[%s180 + $0x88] sm:%s173]
                %217 = vst [vmem:[%s181 + $0x44] sm:%s173] %v216
                %v218 = vld [vmem:[%s180 + $0x90] sm:%s173]
                %219 = vst [vmem:[%s181 + $0x48] sm:%s173] %v218
                %v220 = vld [vmem:[%s180 + $0x98] sm:%s173]
                %221 = vst [vmem:[%s181 + $0x4c] sm:%s173] %v220
                %v222 = vld [vmem:[%s180 + $0xa0] sm:%s173]
                %223 = vst [vmem:[%s181 + $0x50] sm:%s173] %v222
                %v224 = vld [vmem:[%s180 + $0xa8] sm:%s173]
                %225 = vst [vmem:[%s181 + $0x54] sm:%s173] %v224
                %v226 = vld [vmem:[%s180 + $0xb0] sm:%s173]
                %227 = vst [vmem:[%s181 + $0x58] sm:%s173] %v226
                %v228 = vld [vmem:[%s180 + $0xb8] sm:%s173]
                %229 = vst [vmem:[%s181 + $0x5c] sm:%s173] %v228
                %v230 = vld [vmem:[%s180 + $0xc0] sm:%s173]
                %231 = vst [vmem:[%s181 + $0x60] sm:%s173] %v230
                %v232 = vld [vmem:[%s180 + $0xc8] sm:%s173]
                %233 = vst [vmem:[%s181 + $0x64] sm:%s173] %v232
                %v234 = vld [vmem:[%s180 + $0xd0] sm:%s173]
                %235 = vst [vmem:[%s181 + $0x68] sm:%s173] %v234
                %v236 = vld [vmem:[%s180 + $0xd8] sm:%s173]
                %237 = vst [vmem:[%s181 + $0x6c] sm:%s173] %v236
                %v238 = vld [vmem:[%s180 + $0xe0] sm:%s173]
                %239 = vst [vmem:[%s181 + $0x70] sm:%s173] %v238
                %v240 = vld [vmem:[%s180 + $0xe8] sm:%s173]
                %241 = vst [vmem:[%s181 + $0x74] sm:%s173] %v240
                %v242 = vld [vmem:[%s180 + $0xf0] sm:%s173]
                %243 = vst [vmem:[%s181 + $0x78] sm:%s173] %v242
                %v244 = vld [vmem:[%s180 + $0xf8] sm:%s173]
                %245 = vst [vmem:[%s181 + $0x7c] sm:%s173] %v244
                %v246 = vld [vmem:[%s180 + $0x100] sm:%s173]
                %247 = vst [vmem:[%s181 + $0x80] sm:%s173] %v246
                %v248 = vld [vmem:[%s180 + $0x108] sm:%s173]
                %249 = vst [vmem:[%s181 + $0x84] sm:%s173] %v248
                %v250 = vld [vmem:[%s180 + $0x110] sm:%s173]
                %251 = vst [vmem:[%s181 + $0x88] sm:%s173] %v250
                %v252 = vld [vmem:[%s180 + $0x118] sm:%s173]
                %253 = vst [vmem:[%s181 + $0x8c] sm:%s173] %v252
                %v254 = vld [vmem:[%s180 + $0x120] sm:%s173]
                %255 = vst [vmem:[%s181 + $0x90] sm:%s173] %v254
                %v256 = vld [vmem:[%s180 + $0x128] sm:%s173]
                %257 = vst [vmem:[%s181 + $0x94] sm:%s173] %v256
                %v258 = vld [vmem:[%s180 + $0x130] sm:%s173]
                %259 = vst [vmem:[%s181 + $0x98] sm:%s173] %v258
                %v260 = vld [vmem:[%s180 + $0x138] sm:%s173]
                %261 = vst [vmem:[%s181 + $0x9c] sm:%s173] %v260
                %v262 = vld [vmem:[%s180 + $0x140] sm:%s173]
                %263 = vst [vmem:[%s181 + $0xa0] sm:%s173] %v262
                %v264 = vld [vmem:[%s180 + $0x148] sm:%s173]
                %265 = vst [vmem:[%s181 + $0xa4] sm:%s173] %v264
                %v266 = vld [vmem:[%s180 + $0x150] sm:%s173]
                %267 = vst [vmem:[%s181 + $0xa8] sm:%s173] %v266
                %v268 = vld [vmem:[%s180 + $0x158] sm:%s173]
                %269 = vst [vmem:[%s181 + $0xac] sm:%s173] %v268
                %v270 = vld [vmem:[%s180 + $0x160] sm:%s173]
                %271 = vst [vmem:[%s181 + $0xb0] sm:%s173] %v270
                %v272 = vld [vmem:[%s180 + $0x168] sm:%s173]
                %273 = vst [vmem:[%s181 + $0xb4] sm:%s173] %v272
                %v274 = vld [vmem:[%s180 + $0x170] sm:%s173]
                %275 = vst [vmem:[%s181 + $0xb8] sm:%s173] %v274
                %v276 = vld [vmem:[%s180 + $0x178] sm:%s173]
                %277 = vst [vmem:[%s181 + $0xbc] sm:%s173] %v276
                %v278 = vld [vmem:[%s180 + $0x180] sm:%s173]
                %279 = vst [vmem:[%s181 + $0xc0] sm:%s173] %v278
                %v280 = vld [vmem:[%s180 + $0x188] sm:%s173]
                %281 = vst [vmem:[%s181 + $0xc4] sm:%s173] %v280
                %v282 = vld [vmem:[%s180 + $0x190] sm:%s173]
                %283 = vst [vmem:[%s181 + $0xc8] sm:%s173] %v282
                %v284 = vld [vmem:[%s180 + $0x198] sm:%s173]
                %285 = vst [vmem:[%s181 + $0xcc] sm:%s173] %v284
                %v286 = vld [vmem:[%s180 + $0x1a0] sm:%s173]
                %287 = vst [vmem:[%s181 + $0xd0] sm:%s173] %v286
                %v288 = vld [vmem:[%s180 + $0x1a8] sm:%s173]
                %289 = vst [vmem:[%s181 + $0xd4] sm:%s173] %v288
                %v290 = vld [vmem:[%s180 + $0x1b0] sm:%s173]
                %291 = vst [vmem:[%s181 + $0xd8] sm:%s173] %v290
                %v292 = vld [vmem:[%s180 + $0x1b8] sm:%s173]
                %293 = vst [vmem:[%s181 + $0xdc] sm:%s173] %v292
                %v294 = vld [vmem:[%s180 + $0x1c0] sm:%s173]
                %295 = vst [vmem:[%s181 + $0xe0] sm:%s173] %v294
                %v296 = vld [vmem:[%s180 + $0x1c8] sm:%s173]
                %297 = vst [vmem:[%s181 + $0xe4] sm:%s173] %v296
                %v298 = vld [vmem:[%s180 + $0x1d0] sm:%s173]
                %299 = vst [vmem:[%s181 + $0xe8] sm:%s173] %v298
                %v300 = vld [vmem:[%s180 + $0x1d8] sm:%s173]
                %301 = vst [vmem:[%s181 + $0xec] sm:%s173] %v300
                %v302 = vld [vmem:[%s180 + $0x1e0] sm:%s173]
                %303 = vst [vmem:[%s181 + $0xf0] sm:%s173] %v302
                %v304 = vld [vmem:[%s180 + $0x1e8] sm:%s173]
                %305 = vst [vmem:[%s181 + $0xf4] sm:%s173] %v304
                %v306 = vld [vmem:[%s180 + $0x1f0] sm:%s173]
                %307 = vst [vmem:[%s181 + $0xf8] sm:%s173] %v306
                %v308 = vld [vmem:[%s180 + $0x1f8] sm:%s173]
                %309 = vst [vmem:[%s181 + $0xfc] sm:%s173] %v308
                %v310 = vld [vmem:[%s180 + $0x200] sm:%s173]
                %311 = vst [vmem:[%s181 + $0x100] sm:%s173] %v310
                %v312 = vld [vmem:[%s180 + $0x208] sm:%s173]
                %313 = vst [vmem:[%s181 + $0x104] sm:%s173] %v312
                %v314 = vld [vmem:[%s180 + $0x210] sm:%s173]
                %315 = vst [vmem:[%s181 + $0x108] sm:%s173] %v314
                %v316 = vld [vmem:[%s180 + $0x218] sm:%s173]
                %317 = vst [vmem:[%s181 + $0x10c] sm:%s173] %v316
                %v318 = vld [vmem:[%s180 + $0x220] sm:%s173]
                %319 = vst [vmem:[%s181 + $0x110] sm:%s173] %v318
                %v320 = vld [vmem:[%s180 + $0x228] sm:%s173]
                %321 = vst [vmem:[%s181 + $0x114] sm:%s173] %v320
                %v322 = vld [vmem:[%s180 + $0x230] sm:%s173]
                %323 = vst [vmem:[%s181 + $0x118] sm:%s173] %v322
                %v324 = vld [vmem:[%s180 + $0x238] sm:%s173]
                %325 = vst [vmem:[%s181 + $0x11c] sm:%s173] %v324
                %v326 = vld [vmem:[%s180 + $0x240] sm:%s173]
                %327 = vst [vmem:[%s181 + $0x120] sm:%s173] %v326
                %v328 = vld [vmem:[%s180 + $0x248] sm:%s173]
                %329 = vst [vmem:[%s181 + $0x124] sm:%s173] %v328
                %v330 = vld [vmem:[%s180 + $0x250] sm:%s173]
                %331 = vst [vmem:[%s181 + $0x128] sm:%s173] %v330
                %v332 = vld [vmem:[%s180 + $0x258] sm:%s173]
                %333 = vst [vmem:[%s181 + $0x12c] sm:%s173] %v332
                %v334 = vld [vmem:[%s180 + $0x260] sm:%s173]
                %335 = vst [vmem:[%s181 + $0x130] sm:%s173] %v334
                %v336 = vld [vmem:[%s180 + $0x268] sm:%s173]
                %337 = vst [vmem:[%s181 + $0x134] sm:%s173] %v336
                %v338 = vld [vmem:[%s180 + $0x270] sm:%s173]
                %339 = vst [vmem:[%s181 + $0x138] sm:%s173] %v338
                %v340 = vld [vmem:[%s180 + $0x278] sm:%s173]
                %341 = vst [vmem:[%s181 + $0x13c] sm:%s173] %v340
                %v342 = vld [vmem:[%s180 + $0x280] sm:%s173]
                %343 = vst [vmem:[%s181 + $0x140] sm:%s173] %v342
                %v344 = vld [vmem:[%s180 + $0x288] sm:%s173]
                %345 = vst [vmem:[%s181 + $0x144] sm:%s173] %v344
                %v346 = vld [vmem:[%s180 + $0x290] sm:%s173]
                %347 = vst [vmem:[%s181 + $0x148] sm:%s173] %v346
                %v348 = vld [vmem:[%s180 + $0x298] sm:%s173]
                %349 = vst [vmem:[%s181 + $0x14c] sm:%s173] %v348
                %v350 = vld [vmem:[%s180 + $0x2a0] sm:%s173]
                %351 = vst [vmem:[%s181 + $0x150] sm:%s173] %v350
                %v352 = vld [vmem:[%s180 + $0x2a8] sm:%s173]
                %353 = vst [vmem:[%s181 + $0x154] sm:%s173] %v352
                %v354 = vld [vmem:[%s180 + $0x2b0] sm:%s173]
                %355 = vst [vmem:[%s181 + $0x158] sm:%s173] %v354
                %v356 = vld [vmem:[%s180 + $0x2b8] sm:%s173]
                %357 = vst [vmem:[%s181 + $0x15c] sm:%s173] %v356
                %v358 = vld [vmem:[%s180 + $0x2c0] sm:%s173]
                %359 = vst [vmem:[%s181 + $0x160] sm:%s173] %v358
                %v360 = vld [vmem:[%s180 + $0x2c8] sm:%s173]
                %361 = vst [vmem:[%s181 + $0x164] sm:%s173] %v360
                %v362 = vld [vmem:[%s180 + $0x2d0] sm:%s173]
                %363 = vst [vmem:[%s181 + $0x168] sm:%s173] %v362
                %v364 = vld [vmem:[%s180 + $0x2d8] sm:%s173]
                %365 = vst [vmem:[%s181 + $0x16c] sm:%s173] %v364
                %v366 = vld [vmem:[%s180 + $0x2e0] sm:%s173]
                %367 = vst [vmem:[%s181 + $0x170] sm:%s173] %v366
                %v368 = vld [vmem:[%s180 + $0x2e8] sm:%s173]
                %369 = vst [vmem:[%s181 + $0x174] sm:%s173] %v368
                %v370 = vld [vmem:[%s180 + $0x2f0] sm:%s173]
                %371 = vst [vmem:[%s181 + $0x178] sm:%s173] %v370
                %v372 = vld [vmem:[%s180 + $0x2f8] sm:%s173]
                %373 = vst [vmem:[%s181 + $0x17c] sm:%s173] %v372
                %v374 = vld [vmem:[%s180 + $0x300] sm:%s173]
                %375 = vst [vmem:[%s181 + $0x180] sm:%s173] %v374
                %v376 = vld [vmem:[%s180 + $0x308] sm:%s173]
                %377 = vst [vmem:[%s181 + $0x184] sm:%s173] %v376
                %v378 = vld [vmem:[%s180 + $0x310] sm:%s173]
                %379 = vst [vmem:[%s181 + $0x188] sm:%s173] %v378
                %v380 = vld [vmem:[%s180 + $0x318] sm:%s173]
                %381 = vst [vmem:[%s181 + $0x18c] sm:%s173] %v380
                %v382 = vld [vmem:[%s180 + $0x320] sm:%s173]
                %383 = vst [vmem:[%s181 + $0x190] sm:%s173] %v382
                %v384 = vld [vmem:[%s180 + $0x328] sm:%s173]
                %385 = vst [vmem:[%s181 + $0x194] sm:%s173] %v384
                %v386 = vld [vmem:[%s180 + $0x330] sm:%s173]
                %387 = vst [vmem:[%s181 + $0x198] sm:%s173] %v386
                %v388 = vld [vmem:[%s180 + $0x338] sm:%s173]
                %389 = vst [vmem:[%s181 + $0x19c] sm:%s173] %v388
                %v390 = vld [vmem:[%s180 + $0x340] sm:%s173]
                %391 = vst [vmem:[%s181 + $0x1a0] sm:%s173] %v390
                %v392 = vld [vmem:[%s180 + $0x348] sm:%s173]
                %393 = vst [vmem:[%s181 + $0x1a4] sm:%s173] %v392
                %v394 = vld [vmem:[%s180 + $0x350] sm:%s173]
                %395 = vst [vmem:[%s181 + $0x1a8] sm:%s173] %v394
                %v396 = vld [vmem:[%s180 + $0x358] sm:%s173]
                %397 = vst [vmem:[%s181 + $0x1ac] sm:%s173] %v396
                %v398 = vld [vmem:[%s180 + $0x360] sm:%s173]
                %399 = vst [vmem:[%s181 + $0x1b0] sm:%s173] %v398
                %v400 = vld [vmem:[%s180 + $0x368] sm:%s173]
                %401 = vst [vmem:[%s181 + $0x1b4] sm:%s173] %v400
                %v402 = vld [vmem:[%s180 + $0x370] sm:%s173]
                %403 = vst [vmem:[%s181 + $0x1b8] sm:%s173] %v402
                %v404 = vld [vmem:[%s180 + $0x378] sm:%s173]
                %405 = vst [vmem:[%s181 + $0x1bc] sm:%s173] %v404
                %v406 = vld [vmem:[%s180 + $0x380] sm:%s173]
                %407 = vst [vmem:[%s181 + $0x1c0] sm:%s173] %v406
                %v408 = vld [vmem:[%s180 + $0x388] sm:%s173]
                %409 = vst [vmem:[%s181 + $0x1c4] sm:%s173] %v408
                %v410 = vld [vmem:[%s180 + $0x390] sm:%s173]
                %411 = vst [vmem:[%s181 + $0x1c8] sm:%s173] %v410
                %v412 = vld [vmem:[%s180 + $0x398] sm:%s173]
                %413 = vst [vmem:[%s181 + $0x1cc] sm:%s173] %v412
                %v414 = vld [vmem:[%s180 + $0x3a0] sm:%s173]
                %415 = vst [vmem:[%s181 + $0x1d0] sm:%s173] %v414
                %v416 = vld [vmem:[%s180 + $0x3a8] sm:%s173]
                %417 = vst [vmem:[%s181 + $0x1d4] sm:%s173] %v416
                %v418 = vld [vmem:[%s180 + $0x3b0] sm:%s173]
                %419 = vst [vmem:[%s181 + $0x1d8] sm:%s173] %v418
                %v420 = vld [vmem:[%s180 + $0x3b8] sm:%s173]
                %421 = vst [vmem:[%s181 + $0x1dc] sm:%s173] %v420
                %v422 = vld [vmem:[%s180 + $0x3c0] sm:%s173]
                %423 = vst [vmem:[%s181 + $0x1e0] sm:%s173] %v422
                %v424 = vld [vmem:[%s180 + $0x3c8] sm:%s173]
                %425 = vst [vmem:[%s181 + $0x1e4] sm:%s173] %v424
                %v426 = vld [vmem:[%s180 + $0x3d0] sm:%s173]
                %427 = vst [vmem:[%s181 + $0x1e8] sm:%s173] %v426
                %v428 = vld [vmem:[%s180 + $0x3d8] sm:%s173]
                %429 = vst [vmem:[%s181 + $0x1ec] sm:%s173] %v428
                %v430 = vld [vmem:[%s180 + $0x3e0] sm:%s173]
                %431 = vst [vmem:[%s181 + $0x1f0] sm:%s173] %v430
                %v432 = vld [vmem:[%s180 + $0x3e8] sm:%s173]
                %433 = vst [vmem:[%s181 + $0x1f4] sm:%s173] %v432
                %v434 = vld [vmem:[%s180 + $0x3f0] sm:%s173]
                %435 = vst [vmem:[%s181 + $0x1f8] sm:%s173] %v434
                %v436 = vld [vmem:[%s180 + $0x3f8] sm:%s173]
                %437 = vst [vmem:[%s181 + $0x1fc] sm:%s173] %v436
                %v438 = vld [vmem:[%s180 + $0x400] sm:%s173]
                %439 = vst [vmem:[%s181 + $0x200] sm:%s173] %v438
                %v440 = vld [vmem:[%s180 + $0x408] sm:%s173]
                %441 = vst [vmem:[%s181 + $0x204] sm:%s173] %v440
                %v442 = vld [vmem:[%s180 + $0x410] sm:%s173]
                %443 = vst [vmem:[%s181 + $0x208] sm:%s173] %v442
                %v444 = vld [vmem:[%s180 + $0x418] sm:%s173]
                %445 = vst [vmem:[%s181 + $0x20c] sm:%s173] %v444
                %v446 = vld [vmem:[%s180 + $0x420] sm:%s173]
                %447 = vst [vmem:[%s181 + $0x210] sm:%s173] %v446
                %v448 = vld [vmem:[%s180 + $0x428] sm:%s173]
                %449 = vst [vmem:[%s181 + $0x214] sm:%s173] %v448
                %v450 = vld [vmem:[%s180 + $0x430] sm:%s173]
                %451 = vst [vmem:[%s181 + $0x218] sm:%s173] %v450
                %v452 = vld [vmem:[%s180 + $0x438] sm:%s173]
                %453 = vst [vmem:[%s181 + $0x21c] sm:%s173] %v452
                %v454 = vld [vmem:[%s180 + $0x440] sm:%s173]
                %455 = vst [vmem:[%s181 + $0x220] sm:%s173] %v454
                %v456 = vld [vmem:[%s180 + $0x448] sm:%s173]
                %457 = vst [vmem:[%s181 + $0x224] sm:%s173] %v456
                %v458 = vld [vmem:[%s180 + $0x450] sm:%s173]
                %459 = vst [vmem:[%s181 + $0x228] sm:%s173] %v458
                %v460 = vld [vmem:[%s180 + $0x458] sm:%s173]
                %461 = vst [vmem:[%s181 + $0x22c] sm:%s173] %v460
                %v462 = vld [vmem:[%s180 + $0x460] sm:%s173]
                %463 = vst [vmem:[%s181 + $0x230] sm:%s173] %v462
                %v464 = vld [vmem:[%s180 + $0x468] sm:%s173]
                %465 = vst [vmem:[%s181 + $0x234] sm:%s173] %v464
                %v466 = vld [vmem:[%s180 + $0x470] sm:%s173]
                %467 = vst [vmem:[%s181 + $0x238] sm:%s173] %v466
                %v468 = vld [vmem:[%s180 + $0x478] sm:%s173]
                %469 = vst [vmem:[%s181 + $0x23c] sm:%s173] %v468
                %v470 = vld [vmem:[%s180 + $0x480] sm:%s173]
                %471 = vst [vmem:[%s181 + $0x240] sm:%s173] %v470
                %v472 = vld [vmem:[%s180 + $0x488] sm:%s173]
                %473 = vst [vmem:[%s181 + $0x244] sm:%s173] %v472
                %v474 = vld [vmem:[%s180 + $0x490] sm:%s173]
                %475 = vst [vmem:[%s181 + $0x248] sm:%s173] %v474
                %v476 = vld [vmem:[%s180 + $0x498] sm:%s173]
                %477 = vst [vmem:[%s181 + $0x24c] sm:%s173] %v476
                %v478 = vld [vmem:[%s180 + $0x4a0] sm:%s173]
                %479 = vst [vmem:[%s181 + $0x250] sm:%s173] %v478
                %v480 = vld [vmem:[%s180 + $0x4a8] sm:%s173]
                %481 = vst [vmem:[%s181 + $0x254] sm:%s173] %v480
                %v482 = vld [vmem:[%s180 + $0x4b0] sm:%s173]
                %483 = vst [vmem:[%s181 + $0x258] sm:%s173] %v482
                %v484 = vld [vmem:[%s180 + $0x4b8] sm:%s173]
                %485 = vst [vmem:[%s181 + $0x25c] sm:%s173] %v484
                %v486 = vld [vmem:[%s180 + $0x4c0] sm:%s173]
                %487 = vst [vmem:[%s181 + $0x260] sm:%s173] %v486
                %v488 = vld [vmem:[%s180 + $0x4c8] sm:%s173]
                %489 = vst [vmem:[%s181 + $0x264] sm:%s173] %v488
                %v490 = vld [vmem:[%s180 + $0x4d0] sm:%s173]
                %491 = vst [vmem:[%s181 + $0x268] sm:%s173] %v490
                %v492 = vld [vmem:[%s180 + $0x4d8] sm:%s173]
                %493 = vst [vmem:[%s181 + $0x26c] sm:%s173] %v492
                %v494 = vld [vmem:[%s180 + $0x4e0] sm:%s173]
                %495 = vst [vmem:[%s181 + $0x270] sm:%s173] %v494
                %v496 = vld [vmem:[%s180 + $0x4e8] sm:%s173]
                %497 = vst [vmem:[%s181 + $0x274] sm:%s173] %v496
                %v498 = vld [vmem:[%s180 + $0x4f0] sm:%s173]
                %499 = vst [vmem:[%s181 + $0x278] sm:%s173] %v498
                %v500 = vld [vmem:[%s180 + $0x4f8] sm:%s173]
                %501 = vst [vmem:[%s181 + $0x27c] sm:%s173] %v500
                %v502 = vld [vmem:[%s180 + $0x500] sm:%s173]
                %503 = vst [vmem:[%s181 + $0x280] sm:%s173] %v502
                %v504 = vld [vmem:[%s180 + $0x508] sm:%s173]
                %505 = vst [vmem:[%s181 + $0x284] sm:%s173] %v504
                %v506 = vld [vmem:[%s180 + $0x510] sm:%s173]
                %507 = vst [vmem:[%s181 + $0x288] sm:%s173] %v506
                %v508 = vld [vmem:[%s180 + $0x518] sm:%s173]
                %509 = vst [vmem:[%s181 + $0x28c] sm:%s173] %v508
                %v510 = vld [vmem:[%s180 + $0x520] sm:%s173]
                %511 = vst [vmem:[%s181 + $0x290] sm:%s173] %v510
                %v512 = vld [vmem:[%s180 + $0x528] sm:%s173]
                %513 = vst [vmem:[%s181 + $0x294] sm:%s173] %v512
                %v514 = vld [vmem:[%s180 + $0x530] sm:%s173]
                %515 = vst [vmem:[%s181 + $0x298] sm:%s173] %v514
                %v516 = vld [vmem:[%s180 + $0x538] sm:%s173]
                %517 = vst [vmem:[%s181 + $0x29c] sm:%s173] %v516
                %v518 = vld [vmem:[%s180 + $0x540] sm:%s173]
                %519 = vst [vmem:[%s181 + $0x2a0] sm:%s173] %v518
                %v520 = vld [vmem:[%s180 + $0x548] sm:%s173]
                %521 = vst [vmem:[%s181 + $0x2a4] sm:%s173] %v520
                %v522 = vld [vmem:[%s180 + $0x550] sm:%s173]
                %523 = vst [vmem:[%s181 + $0x2a8] sm:%s173] %v522
                %v524 = vld [vmem:[%s180 + $0x558] sm:%s173]
                %525 = vst [vmem:[%s181 + $0x2ac] sm:%s173] %v524
                %v526 = vld [vmem:[%s180 + $0x560] sm:%s173]
                %527 = vst [vmem:[%s181 + $0x2b0] sm:%s173] %v526
                %v528 = vld [vmem:[%s180 + $0x568] sm:%s173]
                %529 = vst [vmem:[%s181 + $0x2b4] sm:%s173] %v528
                %v530 = vld [vmem:[%s180 + $0x570] sm:%s173]
                %531 = vst [vmem:[%s181 + $0x2b8] sm:%s173] %v530
                %v532 = vld [vmem:[%s180 + $0x578] sm:%s173]
                %533 = vst [vmem:[%s181 + $0x2bc] sm:%s173] %v532
                %v534 = vld [vmem:[%s180 + $0x580] sm:%s173]
                %535 = vst [vmem:[%s181 + $0x2c0] sm:%s173] %v534
                %v536 = vld [vmem:[%s180 + $0x588] sm:%s173]
                %537 = vst [vmem:[%s181 + $0x2c4] sm:%s173] %v536
                %v538 = vld [vmem:[%s180 + $0x590] sm:%s173]
                %539 = vst [vmem:[%s181 + $0x2c8] sm:%s173] %v538
                %v540 = vld [vmem:[%s180 + $0x598] sm:%s173]
                %541 = vst [vmem:[%s181 + $0x2cc] sm:%s173] %v540
                %v542 = vld [vmem:[%s180 + $0x5a0] sm:%s173]
                %543 = vst [vmem:[%s181 + $0x2d0] sm:%s173] %v542
                %v544 = vld [vmem:[%s180 + $0x5a8] sm:%s173]
                %545 = vst [vmem:[%s181 + $0x2d4] sm:%s173] %v544
                %v546 = vld [vmem:[%s180 + $0x5b0] sm:%s173]
                %547 = vst [vmem:[%s181 + $0x2d8] sm:%s173] %v546
                %v548 = vld [vmem:[%s180 + $0x5b8] sm:%s173]
                %549 = vst [vmem:[%s181 + $0x2dc] sm:%s173] %v548
                %v550 = vld [vmem:[%s180 + $0x5c0] sm:%s173]
                %551 = vst [vmem:[%s181 + $0x2e0] sm:%s173] %v550
                %v552 = vld [vmem:[%s180 + $0x5c8] sm:%s173]
                %553 = vst [vmem:[%s181 + $0x2e4] sm:%s173] %v552
                %v554 = vld [vmem:[%s180 + $0x5d0] sm:%s173]
                %555 = vst [vmem:[%s181 + $0x2e8] sm:%s173] %v554
                %v556 = vld [vmem:[%s180 + $0x5d8] sm:%s173]
                %557 = vst [vmem:[%s181 + $0x2ec] sm:%s173] %v556
                %v558 = vld [vmem:[%s180 + $0x5e0] sm:%s173]
                %559 = vst [vmem:[%s181 + $0x2f0] sm:%s173] %v558
                %v560 = vld [vmem:[%s180 + $0x5e8] sm:%s173]
                %561 = vst [vmem:[%s181 + $0x2f4] sm:%s173] %v560
                %v562 = vld [vmem:[%s180 + $0x5f0] sm:%s173]
                %563 = vst [vmem:[%s181 + $0x2f8] sm:%s173] %v562
                %v564 = vld [vmem:[%s180 + $0x5f8] sm:%s173]
                %565 = vst [vmem:[%s181 + $0x2fc] sm:%s173] %v564
                %v566 = vld [vmem:[%s180 + $0x600] sm:%s173]
                %567 = vst [vmem:[%s181 + $0x300] sm:%s173] %v566
                %v568 = vld [vmem:[%s180 + $0x608] sm:%s173]
                %569 = vst [vmem:[%s181 + $0x304] sm:%s173] %v568
                %v570 = vld [vmem:[%s180 + $0x610] sm:%s173]
                %571 = vst [vmem:[%s181 + $0x308] sm:%s173] %v570
                %v572 = vld [vmem:[%s180 + $0x618] sm:%s173]
                %573 = vst [vmem:[%s181 + $0x30c] sm:%s173] %v572
                %v574 = vld [vmem:[%s180 + $0x620] sm:%s173]
                %575 = vst [vmem:[%s181 + $0x310] sm:%s173] %v574
                %v576 = vld [vmem:[%s180 + $0x628] sm:%s173]
                %577 = vst [vmem:[%s181 + $0x314] sm:%s173] %v576
                %v578 = vld [vmem:[%s180 + $0x630] sm:%s173]
                %579 = vst [vmem:[%s181 + $0x318] sm:%s173] %v578
                %v580 = vld [vmem:[%s180 + $0x638] sm:%s173]
                %581 = vst [vmem:[%s181 + $0x31c] sm:%s173] %v580
                %v582 = vld [vmem:[%s180 + $0x640] sm:%s173]
                %583 = vst [vmem:[%s181 + $0x320] sm:%s173] %v582
                %v584 = vld [vmem:[%s180 + $0x648] sm:%s173]
                %585 = vst [vmem:[%s181 + $0x324] sm:%s173] %v584
                %v586 = vld [vmem:[%s180 + $0x650] sm:%s173]
                %587 = vst [vmem:[%s181 + $0x328] sm:%s173] %v586
                %v588 = vld [vmem:[%s180 + $0x658] sm:%s173]
                %589 = vst [vmem:[%s181 + $0x32c] sm:%s173] %v588
                %v590 = vld [vmem:[%s180 + $0x660] sm:%s173]
                %591 = vst [vmem:[%s181 + $0x330] sm:%s173] %v590
                %v592 = vld [vmem:[%s180 + $0x668] sm:%s173]
                %593 = vst [vmem:[%s181 + $0x334] sm:%s173] %v592
                %v594 = vld [vmem:[%s180 + $0x670] sm:%s173]
                %595 = vst [vmem:[%s181 + $0x338] sm:%s173] %v594
                %v596 = vld [vmem:[%s180 + $0x678] sm:%s173]
                %597 = vst [vmem:[%s181 + $0x33c] sm:%s173] %v596
                %v598 = vld [vmem:[%s180 + $0x680] sm:%s173]
                %599 = vst [vmem:[%s181 + $0x340] sm:%s173] %v598
                %v600 = vld [vmem:[%s180 + $0x688] sm:%s173]
                %601 = vst [vmem:[%s181 + $0x344] sm:%s173] %v600
                %v602 = vld [vmem:[%s180 + $0x690] sm:%s173]
                %603 = vst [vmem:[%s181 + $0x348] sm:%s173] %v602
                %v604 = vld [vmem:[%s180 + $0x698] sm:%s173]
                %605 = vst [vmem:[%s181 + $0x34c] sm:%s173] %v604
                %v606 = vld [vmem:[%s180 + $0x6a0] sm:%s173]
                %607 = vst [vmem:[%s181 + $0x350] sm:%s173] %v606
                %v608 = vld [vmem:[%s180 + $0x6a8] sm:%s173]
                %609 = vst [vmem:[%s181 + $0x354] sm:%s173] %v608
                %v610 = vld [vmem:[%s180 + $0x6b0] sm:%s173]
                %611 = vst [vmem:[%s181 + $0x358] sm:%s173] %v610
                %v612 = vld [vmem:[%s180 + $0x6b8] sm:%s173]
                %613 = vst [vmem:[%s181 + $0x35c] sm:%s173] %v612
                %v614 = vld [vmem:[%s180 + $0x6c0] sm:%s173]
                %615 = vst [vmem:[%s181 + $0x360] sm:%s173] %v614
                %v616 = vld [vmem:[%s180 + $0x6c8] sm:%s173]
                %617 = vst [vmem:[%s181 + $0x364] sm:%s173] %v616
                %v618 = vld [vmem:[%s180 + $0x6d0] sm:%s173]
                %619 = vst [vmem:[%s181 + $0x368] sm:%s173] %v618
                %v620 = vld [vmem:[%s180 + $0x6d8] sm:%s173]
                %621 = vst [vmem:[%s181 + $0x36c] sm:%s173] %v620
                %v622 = vld [vmem:[%s180 + $0x6e0] sm:%s173]
                %623 = vst [vmem:[%s181 + $0x370] sm:%s173] %v622
                %v624 = vld [vmem:[%s180 + $0x6e8] sm:%s173]
                %625 = vst [vmem:[%s181 + $0x374] sm:%s173] %v624
                %v626 = vld [vmem:[%s180 + $0x6f0] sm:%s173]
                %627 = vst [vmem:[%s181 + $0x378] sm:%s173] %v626
                %v628 = vld [vmem:[%s180 + $0x6f8] sm:%s173]
                %629 = vst [vmem:[%s181 + $0x37c] sm:%s173] %v628
                %v630 = vld [vmem:[%s180 + $0x700] sm:%s173]
                %631 = vst [vmem:[%s181 + $0x380] sm:%s173] %v630
                %v632 = vld [vmem:[%s180 + $0x708] sm:%s173]
                %633 = vst [vmem:[%s181 + $0x384] sm:%s173] %v632
                %v634 = vld [vmem:[%s180 + $0x710] sm:%s173]
                %635 = vst [vmem:[%s181 + $0x388] sm:%s173] %v634
                %v636 = vld [vmem:[%s180 + $0x718] sm:%s173]
                %637 = vst [vmem:[%s181 + $0x38c] sm:%s173] %v636
                %v638 = vld [vmem:[%s180 + $0x720] sm:%s173]
                %639 = vst [vmem:[%s181 + $0x390] sm:%s173] %v638
                %v640 = vld [vmem:[%s180 + $0x728] sm:%s173]
                %641 = vst [vmem:[%s181 + $0x394] sm:%s173] %v640
                %v642 = vld [vmem:[%s180 + $0x730] sm:%s173]
                %643 = vst [vmem:[%s181 + $0x398] sm:%s173] %v642
                %v644 = vld [vmem:[%s180 + $0x738] sm:%s173]
                %645 = vst [vmem:[%s181 + $0x39c] sm:%s173] %v644
                %v646 = vld [vmem:[%s180 + $0x740] sm:%s173]
                %647 = vst [vmem:[%s181 + $0x3a0] sm:%s173] %v646
                %v648 = vld [vmem:[%s180 + $0x748] sm:%s173]
                %649 = vst [vmem:[%s181 + $0x3a4] sm:%s173] %v648
                %v650 = vld [vmem:[%s180 + $0x750] sm:%s173]
                %651 = vst [vmem:[%s181 + $0x3a8] sm:%s173] %v650
                %v652 = vld [vmem:[%s180 + $0x758] sm:%s173]
                %653 = vst [vmem:[%s181 + $0x3ac] sm:%s173] %v652
                %v654 = vld [vmem:[%s180 + $0x760] sm:%s173]
                %655 = vst [vmem:[%s181 + $0x3b0] sm:%s173] %v654
                %v656 = vld [vmem:[%s180 + $0x768] sm:%s173]
                %657 = vst [vmem:[%s181 + $0x3b4] sm:%s173] %v656
                %v658 = vld [vmem:[%s180 + $0x770] sm:%s173]
                %659 = vst [vmem:[%s181 + $0x3b8] sm:%s173] %v658
                %v660 = vld [vmem:[%s180 + $0x778] sm:%s173]
                %661 = vst [vmem:[%s181 + $0x3bc] sm:%s173] %v660
                %v662 = vld [vmem:[%s180 + $0x780] sm:%s173]
                %663 = vst [vmem:[%s181 + $0x3c0] sm:%s173] %v662
                %v664 = vld [vmem:[%s180 + $0x788] sm:%s173]
                %665 = vst [vmem:[%s181 + $0x3c4] sm:%s173] %v664
                %v666 = vld [vmem:[%s180 + $0x790] sm:%s173]
                %667 = vst [vmem:[%s181 + $0x3c8] sm:%s173] %v666
                %v668 = vld [vmem:[%s180 + $0x798] sm:%s173]
                %669 = vst [vmem:[%s181 + $0x3cc] sm:%s173] %v668
                %v670 = vld [vmem:[%s180 + $0x7a0] sm:%s173]
                %671 = vst [vmem:[%s181 + $0x3d0] sm:%s173] %v670
                %v672 = vld [vmem:[%s180 + $0x7a8] sm:%s173]
                %673 = vst [vmem:[%s181 + $0x3d4] sm:%s173] %v672
                %v674 = vld [vmem:[%s180 + $0x7b0] sm:%s173]
                %675 = vst [vmem:[%s181 + $0x3d8] sm:%s173] %v674
                %v676 = vld [vmem:[%s180 + $0x7b8] sm:%s173]
                %677 = vst [vmem:[%s181 + $0x3dc] sm:%s173] %v676
                %v678 = vld [vmem:[%s180 + $0x7c0] sm:%s173]
                %679 = vst [vmem:[%s181 + $0x3e0] sm:%s173] %v678
                %v680 = vld [vmem:[%s180 + $0x7c8] sm:%s173]
                %681 = vst [vmem:[%s181 + $0x3e4] sm:%s173] %v680
                %v682 = vld [vmem:[%s180 + $0x7d0] sm:%s173]
                %683 = vst [vmem:[%s181 + $0x3e8] sm:%s173] %v682
                %v684 = vld [vmem:[%s180 + $0x7d8] sm:%s173]
                %685 = vst [vmem:[%s181 + $0x3ec] sm:%s173] %v684
                %v686 = vld [vmem:[%s180 + $0x7e0] sm:%s173]
                %687 = vst [vmem:[%s181 + $0x3f0] sm:%s173] %v686
                %v688 = vld [vmem:[%s180 + $0x7e8] sm:%s173]
                %689 = vst [vmem:[%s181 + $0x3f4] sm:%s173] %v688
                %v690 = vld [vmem:[%s180 + $0x7f0] sm:%s173]
                %691 = vst [vmem:[%s181 + $0x3f8] sm:%s173] %v690
                %v692 = vld [vmem:[%s180 + $0x7f8] sm:%s173]
                %693 = vst [vmem:[%s181 + $0x3fc] sm:%s173] %v692
              $region41: #{cnn_score_forward.6} parent=35 // loop_footer
                %s179 = sadd.s32 1, %s175
              $region42: #{cnn_score_forward.6} parent=35 // loop_footer_branch
                %174 = sbr.rel target = $region38
              $region43: #{cnn_score_forward.6} parent=35 // loop_exit
                _
            $region36: #{cnn_score_forward.6} parent=27 // pred_fallthru
              _
          $region28: #{cnn_score_forward.6} parent=23 // pred_fallthru
            _
          %1226 = vnop
        $region24: #{cnn_score_forward.6} parent=15 // pred_fallthru
          _
        // Predicated region
        $region62: #{cnn_score_forward.6} parent=15 // pred_check
          %p1227 = pneg %p95
        $region63: #{cnn_score_forward.6} parent=15 // pred_check_branch
          %1229 = sbr.rel (%p1227) target = $region65
        $region64: #{cnn_score_forward.6} parent=15 // pred_region
          %p1230 = scmp.lt.s32.totalorder %s16, 1
          %s1231 = scalar_select %p1230, %s16, 1
          %s1232 = scalar_lea.vmem %s2, %s1231
        $region65: #{cnn_score_forward.6} parent=15 // pred_fallthru
          _
      $region16: #{cnn_score_forward.6} parent=5 // pred_fallthru
        _
      %p1233 = scmp.le.s32.totalorder 1, %s9
      %p1234 = scmp.lt.s32.totalorder %s9, 9
      %p1235 = pnand %p1233, %p1234
      %p1236 = pneg %p1235
      // Predicated region
      $region66: #{cnn_score_forward.6} parent=5 // pred_check
        _
      $region67: #{cnn_score_forward.6} parent=5 // pred_check_branch
        %1238 = sbr.rel (%p1235) target = $region69
      $region68: #{cnn_score_forward.6} parent=5 // pred_region
        %s1239 = ssub.s32 %s9, 1
        %s1240 = sand.u32 %s62, 1
        %s1241 = sand.u32 %s62, 1
        %s1242 = smul.addr %s1241, 1024
        %s1243 = scalar_lea.vmem [#allocation3], %s1242
        // Predicated region
        $region70: #{cnn_score_forward.6} parent=68 // pred_check
          %p1244 = pneg %p75
        $region71: #{cnn_score_forward.6} parent=68 // pred_check_branch
          %1246 = sbr.rel (%p1244) target = $region73
        $region72: #{cnn_score_forward.6} parent=68 // pred_region
          _
        $region73: #{cnn_score_forward.6} parent=68 // pred_fallthru
          _
        %s1247 = smul.u32 16, %s19
        %p1248 = scmp.lt.s32.totalorder %s1247, 63
        %s1249 = scalar_select %p1248, %s1247, 63
        %s1250 = scalar_lea.vmem %s0, %s1249
        %p1251 = pneg %p47
        %p1252 = pneg %p44
        %s1253 = sand.u32 %s62, 1
        %s1254 = sand.u32 %s62, 1
        %s1255 = smul.addr %s1254, 1024
        %s1256 = scalar_lea.vmem [#allocation3], %s1255
        %p1257 = pneg %p75
        %p1258 = pneg %p72
        %p1259 = scmp.lt.s32.totalorder %s18, 1
        %s1260 = scalar_select %p1259, %s18, 1
        %s1261 = scalar_lea.vmem %s2, %s1260
        %p1262 = pneg %p101
        %p1263 = pneg %p98
        %p1264 = pneg %p127
        %p1265 = pneg %p124
        %p1266 = scmp.lt.s32.totalorder %s18, 1
        %s1267 = scalar_select %p1266, %s18, 1
        %s1268 = smul.addr %s1267, 2
        %s1269 = scalar_lea.vmem %s3, %s1268
        %s1270 = smul.u32 16, %s19
        %p1271 = scmp.lt.s32.totalorder %s1270, 63
        %s1272 = scalar_select %p1271, %s1270, 63
        %s1273 = scalar_lea.vmem %s0, %s1272
        %s1274 = smul.u32 16, %s19
        %s1275 = smul.u32 256, %s19
        %p1276 = scmp.lt.s32.totalorder %s18, 1
        %s1277 = scalar_select %p1276, %s18, 1
        %s1278 = scalar_lea.vmem %s2, %s1277
        %p1279 = scmp.lt.s32.totalorder %s18, 1
        %s1280 = scalar_select %p1279, %s18, 1
        %s1281 = smul.addr %s1280, 2
        %s1282 = scalar_lea.vmem %s3, %s1281
        %p1284 = scmp.eq.s32.totalorder %s19, 0
        // Predicated region
        $region74: #{cnn_score_forward.6} parent=68 // pred_check
          %p1285 = pneg %p1284
        $region75: #{cnn_score_forward.6} parent=68 // pred_check_branch
          %1287 = sbr.rel (%p1285) target = $region77
        $region76: #{cnn_score_forward.6} parent=68 // pred_region
          %1288 = vst [vmem:[#allocation2] sm:$0x3] 0.0
        $region77: #{cnn_score_forward.6} parent=68 // pred_fallthru
          _
        %v1289 = vld [vmem:[#allocation2] sm:$0x3]
        %v1290 = vld [vmem:[%s1273] sm:$0xff]
        %v1291 = vld [vmem:[%s1273 + $0x8] sm:$0xff]
        %v1292 = vld [vmem:[%s1243] sm:$0xf]
        %v1293 = vld [vmem:[%s1243 + $0x4] sm:$0xf]
        %v1294 = vld [vmem:[%s1243 + $0x8] sm:$0xf]
        %v1295 = vld [vmem:[%s1243 + $0xc] sm:$0xf]
        %v1296 = vld [vmem:[%s1243 + $0x10] sm:$0xf]
        %v1297 = vld [vmem:[%s1243 + $0x14] sm:$0xf]
        %v1298 = vld [vmem:[%s1243 + $0x18] sm:$0xf]
        %v1299 = vld [vmem:[%s1243 + $0x1c] sm:$0xf]
        %v1300 = vld [vmem:[%s1243 + $0x20] sm:$0xf]
        %v1301 = vld [vmem:[%s1243 + $0x24] sm:$0xf]
        %v1302 = vld [vmem:[%s1243 + $0x28] sm:$0xf]
        %v1303 = vld [vmem:[%s1243 + $0x2c] sm:$0xf]
        %v1304 = vld [vmem:[%s1243 + $0x30] sm:$0xf]
        %v1305 = vld [vmem:[%s1243 + $0x34] sm:$0xf]
        %v1306 = vld [vmem:[%s1243 + $0x38] sm:$0xf]
        %v1307 = vld [vmem:[%s1243 + $0x3c] sm:$0xf]
        %v1308 = vld [vmem:[%s1243 + $0x40] sm:$0xf]
        %v1309 = vld [vmem:[%s1243 + $0x44] sm:$0xf]
        %v1310 = vld [vmem:[%s1243 + $0x48] sm:$0xf]
        %v1311 = vld [vmem:[%s1243 + $0x4c] sm:$0xf]
        %v1312 = vld [vmem:[%s1243 + $0x50] sm:$0xf]
        %v1313 = vld [vmem:[%s1243 + $0x54] sm:$0xf]
        %v1314 = vld [vmem:[%s1243 + $0x58] sm:$0xf]
        %v1315 = vld [vmem:[%s1243 + $0x5c] sm:$0xf]
        %v1316 = vld [vmem:[%s1243 + $0x60] sm:$0xf]
        %v1317 = vld [vmem:[%s1243 + $0x64] sm:$0xf]
        %v1318 = vld [vmem:[%s1243 + $0x68] sm:$0xf]
        %v1319 = vld [vmem:[%s1243 + $0x6c] sm:$0xf]
        %v1320 = vld [vmem:[%s1243 + $0x70] sm:$0xf]
        %v1321 = vld [vmem:[%s1243 + $0x74] sm:$0xf]
        %v1322 = vld [vmem:[%s1243 + $0x78] sm:$0xf]
        %v1323 = vld [vmem:[%s1243 + $0x7c] sm:$0xf]
        %v1324 = vld [vmem:[%s1243 + $0x80] sm:$0xf]
        %v1325 = vld [vmem:[%s1243 + $0x84] sm:$0xf]
        %v1326 = vld [vmem:[%s1243 + $0x88] sm:$0xf]
        %v1327 = vld [vmem:[%s1243 + $0x8c] sm:$0xf]
        %v1328 = vld [vmem:[%s1243 + $0x90] sm:$0xf]
        %v1329 = vld [vmem:[%s1243 + $0x94] sm:$0xf]
        %v1330 = vld [vmem:[%s1243 + $0x98] sm:$0xf]
        %v1331 = vld [vmem:[%s1243 + $0x9c] sm:$0xf]
        %v1332 = vld [vmem:[%s1243 + $0xa0] sm:$0xf]
        %v1333 = vld [vmem:[%s1243 + $0xa4] sm:$0xf]
        %v1334 = vld [vmem:[%s1243 + $0xa8] sm:$0xf]
        %v1335 = vld [vmem:[%s1243 + $0xac] sm:$0xf]
        %v1336 = vld [vmem:[%s1243 + $0xb0] sm:$0xf]
        %v1337 = vld [vmem:[%s1243 + $0xb4] sm:$0xf]
        %v1338 = vld [vmem:[%s1243 + $0xb8] sm:$0xf]
        %v1339 = vld [vmem:[%s1243 + $0xbc] sm:$0xf]
        %v1340 = vld [vmem:[%s1243 + $0xc0] sm:$0xf]
        %v1341 = vld [vmem:[%s1243 + $0xc4] sm:$0xf]
        %v1342 = vld [vmem:[%s1243 + $0xc8] sm:$0xf]
        %v1343 = vld [vmem:[%s1243 + $0xcc] sm:$0xf]
        %v1344 = vld [vmem:[%s1243 + $0xd0] sm:$0xf]
        %v1345 = vld [vmem:[%s1243 + $0xd4] sm:$0xf]
        %v1346 = vld [vmem:[%s1243 + $0xd8] sm:$0xf]
        %v1347 = vld [vmem:[%s1243 + $0xdc] sm:$0xf]
        %v1348 = vld [vmem:[%s1243 + $0xe0] sm:$0xf]
        %v1349 = vld [vmem:[%s1243 + $0xe4] sm:$0xf]
        %v1350 = vld [vmem:[%s1243 + $0xe8] sm:$0xf]
        %v1351 = vld [vmem:[%s1243 + $0xec] sm:$0xf]
        %v1352 = vld [vmem:[%s1243 + $0xf0] sm:$0xf]
        %v1353 = vld [vmem:[%s1243 + $0xf4] sm:$0xf]
        %v1354 = vld [vmem:[%s1243 + $0xf8] sm:$0xf]
        %v1355 = vld [vmem:[%s1243 + $0xfc] sm:$0xf]
        %v1356 = vld [vmem:[%s1243 + $0x100] sm:$0xf]
        %v1357 = vld [vmem:[%s1243 + $0x104] sm:$0xf]
        %v1358 = vld [vmem:[%s1243 + $0x108] sm:$0xf]
        %v1359 = vld [vmem:[%s1243 + $0x10c] sm:$0xf]
        %v1360 = vld [vmem:[%s1243 + $0x110] sm:$0xf]
        %v1361 = vld [vmem:[%s1243 + $0x114] sm:$0xf]
        %v1362 = vld [vmem:[%s1243 + $0x118] sm:$0xf]
        %v1363 = vld [vmem:[%s1243 + $0x11c] sm:$0xf]
        %v1364 = vld [vmem:[%s1243 + $0x120] sm:$0xf]
        %v1365 = vld [vmem:[%s1243 + $0x124] sm:$0xf]
        %v1366 = vld [vmem:[%s1243 + $0x128] sm:$0xf]
        %v1367 = vld [vmem:[%s1243 + $0x12c] sm:$0xf]
        %v1368 = vld [vmem:[%s1243 + $0x130] sm:$0xf]
        %v1369 = vld [vmem:[%s1243 + $0x134] sm:$0xf]
        %v1370 = vld [vmem:[%s1243 + $0x138] sm:$0xf]
        %v1371 = vld [vmem:[%s1243 + $0x13c] sm:$0xf]
        %v1372 = vld [vmem:[%s1243 + $0x140] sm:$0xf]
        %v1373 = vld [vmem:[%s1243 + $0x144] sm:$0xf]
        %v1374 = vld [vmem:[%s1243 + $0x148] sm:$0xf]
        %v1375 = vld [vmem:[%s1243 + $0x14c] sm:$0xf]
        %v1376 = vld [vmem:[%s1243 + $0x150] sm:$0xf]
        %v1377 = vld [vmem:[%s1243 + $0x154] sm:$0xf]
        %v1378 = vld [vmem:[%s1243 + $0x158] sm:$0xf]
        %v1379 = vld [vmem:[%s1243 + $0x15c] sm:$0xf]
        %v1380 = vld [vmem:[%s1243 + $0x160] sm:$0xf]
        %v1381 = vld [vmem:[%s1243 + $0x164] sm:$0xf]
        %v1382 = vld [vmem:[%s1243 + $0x168] sm:$0xf]
        %v1383 = vld [vmem:[%s1243 + $0x16c] sm:$0xf]
        %v1384 = vld [vmem:[%s1243 + $0x170] sm:$0xf]
        %v1385 = vld [vmem:[%s1243 + $0x174] sm:$0xf]
        %v1386 = vld [vmem:[%s1243 + $0x178] sm:$0xf]
        %v1387 = vld [vmem:[%s1243 + $0x17c] sm:$0xf]
        %v1388 = vld [vmem:[%s1243 + $0x180] sm:$0xf]
        %v1389 = vld [vmem:[%s1243 + $0x184] sm:$0xf]
        %v1390 = vld [vmem:[%s1243 + $0x188] sm:$0xf]
        %v1391 = vld [vmem:[%s1243 + $0x18c] sm:$0xf]
        %v1392 = vld [vmem:[%s1243 + $0x190] sm:$0xf]
        %v1393 = vld [vmem:[%s1243 + $0x194] sm:$0xf]
        %v1394 = vld [vmem:[%s1243 + $0x198] sm:$0xf]
        %v1395 = vld [vmem:[%s1243 + $0x19c] sm:$0xf]
        %v1396 = vld [vmem:[%s1243 + $0x1a0] sm:$0xf]
        %v1397 = vld [vmem:[%s1243 + $0x1a4] sm:$0xf]
        %v1398 = vld [vmem:[%s1243 + $0x1a8] sm:$0xf]
        %v1399 = vld [vmem:[%s1243 + $0x1ac] sm:$0xf]
        %v1400 = vld [vmem:[%s1243 + $0x1b0] sm:$0xf]
        %v1401 = vld [vmem:[%s1243 + $0x1b4] sm:$0xf]
        %v1402 = vld [vmem:[%s1243 + $0x1b8] sm:$0xf]
        %v1403 = vld [vmem:[%s1243 + $0x1bc] sm:$0xf]
        %v1404 = vld [vmem:[%s1243 + $0x1c0] sm:$0xf]
        %v1405 = vld [vmem:[%s1243 + $0x1c4] sm:$0xf]
        %v1406 = vld [vmem:[%s1243 + $0x1c8] sm:$0xf]
        %v1407 = vld [vmem:[%s1243 + $0x1cc] sm:$0xf]
        %v1408 = vld [vmem:[%s1243 + $0x1d0] sm:$0xf]
        %v1409 = vld [vmem:[%s1243 + $0x1d4] sm:$0xf]
        %v1410 = vld [vmem:[%s1243 + $0x1d8] sm:$0xf]
        %v1411 = vld [vmem:[%s1243 + $0x1dc] sm:$0xf]
        %v1412 = vld [vmem:[%s1243 + $0x1e0] sm:$0xf]
        %v1413 = vld [vmem:[%s1243 + $0x1e4] sm:$0xf]
        %v1414 = vld [vmem:[%s1243 + $0x1e8] sm:$0xf]
        %v1415 = vld [vmem:[%s1243 + $0x1ec] sm:$0xf]
        %v1416 = vld [vmem:[%s1243 + $0x1f0] sm:$0xf]
        %v1417 = vld [vmem:[%s1243 + $0x1f4] sm:$0xf]
        %v1418 = vld [vmem:[%s1243 + $0x1f8] sm:$0xf]
        %v1419 = vld [vmem:[%s1243 + $0x1fc] sm:$0xf]
        %v1420 = vld [vmem:[%s1243 + $0x200] sm:$0xf]
        %v1421 = vld [vmem:[%s1243 + $0x204] sm:$0xf]
        %v1422 = vld [vmem:[%s1243 + $0x208] sm:$0xf]
        %v1423 = vld [vmem:[%s1243 + $0x20c] sm:$0xf]
        %v1424 = vld [vmem:[%s1243 + $0x210] sm:$0xf]
        %v1425 = vld [vmem:[%s1243 + $0x214] sm:$0xf]
        %v1426 = vld [vmem:[%s1243 + $0x218] sm:$0xf]
        %v1427 = vld [vmem:[%s1243 + $0x21c] sm:$0xf]
        %v1428 = vld [vmem:[%s1243 + $0x220] sm:$0xf]
        %v1429 = vld [vmem:[%s1243 + $0x224] sm:$0xf]
        %v1430 = vld [vmem:[%s1243 + $0x228] sm:$0xf]
        %v1431 = vld [vmem:[%s1243 + $0x22c] sm:$0xf]
        %v1432 = vld [vmem:[%s1243 + $0x230] sm:$0xf]
        %v1433 = vld [vmem:[%s1243 + $0x234] sm:$0xf]
        %v1434 = vld [vmem:[%s1243 + $0x238] sm:$0xf]
        %v1435 = vld [vmem:[%s1243 + $0x23c] sm:$0xf]
        %v1436 = vld [vmem:[%s1243 + $0x240] sm:$0xf]
        %v1437 = vld [vmem:[%s1243 + $0x244] sm:$0xf]
        %v1438 = vld [vmem:[%s1243 + $0x248] sm:$0xf]
        %v1439 = vld [vmem:[%s1243 + $0x24c] sm:$0xf]
        %v1440 = vld [vmem:[%s1243 + $0x250] sm:$0xf]
        %v1441 = vld [vmem:[%s1243 + $0x254] sm:$0xf]
        %v1442 = vld [vmem:[%s1243 + $0x258] sm:$0xf]
        %v1443 = vld [vmem:[%s1243 + $0x25c] sm:$0xf]
        %v1444 = vld [vmem:[%s1243 + $0x260] sm:$0xf]
        %v1445 = vld [vmem:[%s1243 + $0x264] sm:$0xf]
        %v1446 = vld [vmem:[%s1243 + $0x268] sm:$0xf]
        %v1447 = vld [vmem:[%s1243 + $0x26c] sm:$0xf]
        %v1448 = vld [vmem:[%s1243 + $0x270] sm:$0xf]
        %v1449 = vld [vmem:[%s1243 + $0x274] sm:$0xf]
        %v1450 = vld [vmem:[%s1243 + $0x278] sm:$0xf]
        %v1451 = vld [vmem:[%s1243 + $0x27c] sm:$0xf]
        %v1452 = vld [vmem:[%s1243 + $0x280] sm:$0xf]
        %v1453 = vld [vmem:[%s1243 + $0x284] sm:$0xf]
        %v1454 = vld [vmem:[%s1243 + $0x288] sm:$0xf]
        %v1455 = vld [vmem:[%s1243 + $0x28c] sm:$0xf]
        %v1456 = vld [vmem:[%s1243 + $0x290] sm:$0xf]
        %v1457 = vld [vmem:[%s1243 + $0x294] sm:$0xf]
        %v1458 = vld [vmem:[%s1243 + $0x298] sm:$0xf]
        %v1459 = vld [vmem:[%s1243 + $0x29c] sm:$0xf]
        %v1460 = vld [vmem:[%s1243 + $0x2a0] sm:$0xf]
        %v1461 = vld [vmem:[%s1243 + $0x2a4] sm:$0xf]
        %v1462 = vld [vmem:[%s1243 + $0x2a8] sm:$0xf]
        %v1463 = vld [vmem:[%s1243 + $0x2ac] sm:$0xf]
        %v1464 = vld [vmem:[%s1243 + $0x2b0] sm:$0xf]
        %v1465 = vld [vmem:[%s1243 + $0x2b4] sm:$0xf]
        %v1466 = vld [vmem:[%s1243 + $0x2b8] sm:$0xf]
        %v1467 = vld [vmem:[%s1243 + $0x2bc] sm:$0xf]
        %v1468 = vld [vmem:[%s1243 + $0x2c0] sm:$0xf]
        %v1469 = vld [vmem:[%s1243 + $0x2c4] sm:$0xf]
        %v1470 = vld [vmem:[%s1243 + $0x2c8] sm:$0xf]
        %v1471 = vld [vmem:[%s1243 + $0x2cc] sm:$0xf]
        %v1472 = vld [vmem:[%s1243 + $0x2d0] sm:$0xf]
        %v1473 = vld [vmem:[%s1243 + $0x2d4] sm:$0xf]
        %v1474 = vld [vmem:[%s1243 + $0x2d8] sm:$0xf]
        %v1475 = vld [vmem:[%s1243 + $0x2dc] sm:$0xf]
        %v1476 = vld [vmem:[%s1243 + $0x2e0] sm:$0xf]
        %v1477 = vld [vmem:[%s1243 + $0x2e4] sm:$0xf]
        %v1478 = vld [vmem:[%s1243 + $0x2e8] sm:$0xf]
        %v1479 = vld [vmem:[%s1243 + $0x2ec] sm:$0xf]
        %v1480 = vld [vmem:[%s1243 + $0x2f0] sm:$0xf]
        %v1481 = vld [vmem:[%s1243 + $0x2f4] sm:$0xf]
        %v1482 = vld [vmem:[%s1243 + $0x2f8] sm:$0xf]
        %v1483 = vld [vmem:[%s1243 + $0x2fc] sm:$0xf]
        %v1484 = vld [vmem:[%s1243 + $0x300] sm:$0xf]
        %v1485 = vld [vmem:[%s1243 + $0x304] sm:$0xf]
        %v1486 = vld [vmem:[%s1243 + $0x308] sm:$0xf]
        %v1487 = vld [vmem:[%s1243 + $0x30c] sm:$0xf]
        %v1488 = vld [vmem:[%s1243 + $0x310] sm:$0xf]
        %v1489 = vld [vmem:[%s1243 + $0x314] sm:$0xf]
        %v1490 = vld [vmem:[%s1243 + $0x318] sm:$0xf]
        %v1491 = vld [vmem:[%s1243 + $0x31c] sm:$0xf]
        %v1492 = vld [vmem:[%s1243 + $0x320] sm:$0xf]
        %v1493 = vld [vmem:[%s1243 + $0x324] sm:$0xf]
        %v1494 = vld [vmem:[%s1243 + $0x328] sm:$0xf]
        %v1495 = vld [vmem:[%s1243 + $0x32c] sm:$0xf]
        %v1496 = vld [vmem:[%s1243 + $0x330] sm:$0xf]
        %v1497 = vld [vmem:[%s1243 + $0x334] sm:$0xf]
        %v1498 = vld [vmem:[%s1243 + $0x338] sm:$0xf]
        %v1499 = vld [vmem:[%s1243 + $0x33c] sm:$0xf]
        %v1500 = vld [vmem:[%s1243 + $0x340] sm:$0xf]
        %v1501 = vld [vmem:[%s1243 + $0x344] sm:$0xf]
        %v1502 = vld [vmem:[%s1243 + $0x348] sm:$0xf]
        %v1503 = vld [vmem:[%s1243 + $0x34c] sm:$0xf]
        %v1504 = vld [vmem:[%s1243 + $0x350] sm:$0xf]
        %v1505 = vld [vmem:[%s1243 + $0x354] sm:$0xf]
        %v1506 = vld [vmem:[%s1243 + $0x358] sm:$0xf]
        %v1507 = vld [vmem:[%s1243 + $0x35c] sm:$0xf]
        %v1508 = vld [vmem:[%s1243 + $0x360] sm:$0xf]
        %v1509 = vld [vmem:[%s1243 + $0x364] sm:$0xf]
        %v1510 = vld [vmem:[%s1243 + $0x368] sm:$0xf]
        %v1511 = vld [vmem:[%s1243 + $0x36c] sm:$0xf]
        %v1512 = vld [vmem:[%s1243 + $0x370] sm:$0xf]
        %v1513 = vld [vmem:[%s1243 + $0x374] sm:$0xf]
        %v1514 = vld [vmem:[%s1243 + $0x378] sm:$0xf]
        %v1515 = vld [vmem:[%s1243 + $0x37c] sm:$0xf]
        %v1516 = vld [vmem:[%s1243 + $0x380] sm:$0xf]
        %v1517 = vld [vmem:[%s1243 + $0x384] sm:$0xf]
        %v1518 = vld [vmem:[%s1243 + $0x388] sm:$0xf]
        %v1519 = vld [vmem:[%s1243 + $0x38c] sm:$0xf]
        %v1520 = vld [vmem:[%s1243 + $0x390] sm:$0xf]
        %v1521 = vld [vmem:[%s1243 + $0x394] sm:$0xf]
        %v1522 = vld [vmem:[%s1243 + $0x398] sm:$0xf]
        %v1523 = vld [vmem:[%s1243 + $0x39c] sm:$0xf]
        %v1524 = vld [vmem:[%s1243 + $0x3a0] sm:$0xf]
        %v1525 = vld [vmem:[%s1243 + $0x3a4] sm:$0xf]
        %v1526 = vld [vmem:[%s1243 + $0x3a8] sm:$0xf]
        %v1527 = vld [vmem:[%s1243 + $0x3ac] sm:$0xf]
        %v1528 = vld [vmem:[%s1243 + $0x3b0] sm:$0xf]
        %v1529 = vld [vmem:[%s1243 + $0x3b4] sm:$0xf]
        %v1530 = vld [vmem:[%s1243 + $0x3b8] sm:$0xf]
        %v1531 = vld [vmem:[%s1243 + $0x3bc] sm:$0xf]
        %v1532 = vld [vmem:[%s1243 + $0x3c0] sm:$0xf]
        %v1533 = vld [vmem:[%s1243 + $0x3c4] sm:$0xf]
        %v1534 = vld [vmem:[%s1243 + $0x3c8] sm:$0xf]
        %v1535 = vld [vmem:[%s1243 + $0x3cc] sm:$0xf]
        %v1536 = vld [vmem:[%s1243 + $0x3d0] sm:$0xf]
        %v1537 = vld [vmem:[%s1243 + $0x3d4] sm:$0xf]
        %v1538 = vld [vmem:[%s1243 + $0x3d8] sm:$0xf]
        %v1539 = vld [vmem:[%s1243 + $0x3dc] sm:$0xf]
        %v1540 = vld [vmem:[%s1243 + $0x3e0] sm:$0xf]
        %v1541 = vld [vmem:[%s1243 + $0x3e4] sm:$0xf]
        %v1542 = vld [vmem:[%s1243 + $0x3e8] sm:$0xf]
        %v1543 = vld [vmem:[%s1243 + $0x3ec] sm:$0xf]
        %v1544 = vld [vmem:[%s1243 + $0x3f0] sm:$0xf]
        %v1545 = vld [vmem:[%s1243 + $0x3f4] sm:$0xf]
        %v1546 = vld [vmem:[%s1243 + $0x3f8] sm:$0xf]
        %v1547 = vld [vmem:[%s1243 + $0x3fc] sm:$0xf]
        %v1550 = vcombine.high %v1290, %v1290
        %v1552 = vunpack.c.l.s4 1966171168
        %v1553 = vunpack.c.0.s8 %v1552
        %v1554 = vlaneseq
        %v1555 = vshrl.u32 %v1554, 7
        %v1556 = vsub.s32 %v1553, %v1555
        %v1557 = vrot.slane %v1290, %v1556
        %v1559 = vunpack.c.l.s4 1966171168
        %v1560 = vunpack.c.0.s8 %v1559
        %v1561 = vlaneseq
        %v1562 = vshrl.u32 %v1561, 7
        %v1563 = vsub.s32 %v1560, %v1562
        %v1564 = vrot.slane %v1550, %v1563
        %v1565 = vcombine.high %v1557, %v1557
        %v1566 = vcombine.high %v1564, %v1564
        %v1568 = vunpack.c.l.s4 1966171168
        %v1569 = vunpack.c.0.s8 %v1568
        %v1570 = vlaneseq
        %v1571 = vshrl.u32 %v1570, 7
        %v1572 = vsub.s32 %v1569, %v1571
        %v1573 = vrot.slane %v1557, %v1572
        %v1575 = vunpack.c.l.s4 1966171168
        %v1576 = vunpack.c.0.s8 %v1575
        %v1577 = vlaneseq
        %v1578 = vshrl.u32 %v1577, 7
        %v1579 = vsub.s32 %v1576, %v1578
        %v1580 = vrot.slane %v1564, %v1579
        %v1582 = vunpack.c.l.s4 1966171168
        %v1583 = vunpack.c.0.s8 %v1582
        %v1584 = vlaneseq
        %v1585 = vshrl.u32 %v1584, 7
        %v1586 = vsub.s32 %v1583, %v1585
        %v1587 = vrot.slane %v1565, %v1586
        %v1589 = vunpack.c.l.s4 1966171168
        %v1590 = vunpack.c.0.s8 %v1589
        %v1591 = vlaneseq
        %v1592 = vshrl.u32 %v1591, 7
        %v1593 = vsub.s32 %v1590, %v1592
        %v1594 = vrot.slane %v1566, %v1593
        %v1595 = vcombine.high %v1573, %v1573
        %v1596 = vcombine.high %v1580, %v1580
        %v1597 = vcombine.high %v1587, %v1587
        %v1598 = vcombine.high %v1594, %v1594
        %v1599 = vcombine.high %v1291, %v1291
        %v1601 = vunpack.c.l.s4 1966171168
        %v1602 = vunpack.c.0.s8 %v1601
        %v1603 = vlaneseq
        %v1604 = vshrl.u32 %v1603, 7
        %v1605 = vsub.s32 %v1602, %v1604
        %v1606 = vrot.slane %v1291, %v1605
        %v1608 = vunpack.c.l.s4 1966171168
        %v1609 = vunpack.c.0.s8 %v1608
        %v1610 = vlaneseq
        %v1611 = vshrl.u32 %v1610, 7
        %v1612 = vsub.s32 %v1609, %v1611
        %v1613 = vrot.slane %v1599, %v1612
        %v1614 = vcombine.high %v1606, %v1606
        %v1615 = vcombine.high %v1613, %v1613
        %v1617 = vunpack.c.l.s4 1966171168
        %v1618 = vunpack.c.0.s8 %v1617
        %v1619 = vlaneseq
        %v1620 = vshrl.u32 %v1619, 7
        %v1621 = vsub.s32 %v1618, %v1620
        %v1622 = vrot.slane %v1606, %v1621
        %v1624 = vunpack.c.l.s4 1966171168
        %v1625 = vunpack.c.0.s8 %v1624
        %v1626 = vlaneseq
        %v1627 = vshrl.u32 %v1626, 7
        %v1628 = vsub.s32 %v1625, %v1627
        %v1629 = vrot.slane %v1613, %v1628
        %v1631 = vunpack.c.l.s4 1966171168
        %v1632 = vunpack.c.0.s8 %v1631
        %v1633 = vlaneseq
        %v1634 = vshrl.u32 %v1633, 7
        %v1635 = vsub.s32 %v1632, %v1634
        %v1636 = vrot.slane %v1614, %v1635
        %v1638 = vunpack.c.l.s4 1966171168
        %v1639 = vunpack.c.0.s8 %v1638
        %v1640 = vlaneseq
        %v1641 = vshrl.u32 %v1640, 7
        %v1642 = vsub.s32 %v1639, %v1641
        %v1643 = vrot.slane %v1615, %v1642
        %v1644 = vcombine.high %v1622, %v1622
        %v1645 = vcombine.high %v1629, %v1629
        %v1646 = vcombine.high %v1636, %v1636
        %v1647 = vcombine.high %v1643, %v1643
        %v1920 = vunpack.c.l.b16 %v1292
        %v1921 = vunpack.c.l.b16 %v1293
        %v1922 = vunpack.c.l.b16 %v1294
        %v1923 = vunpack.c.l.b16 %v1295
        %v1924 = vunpack.c.l.b16 %v1296
        %v1925 = vunpack.c.l.b16 %v1297
        %v1926 = vunpack.c.l.b16 %v1298
        %v1927 = vunpack.c.l.b16 %v1299
        %v1928 = vunpack.c.l.b16 %v1300
        %v1929 = vunpack.c.l.b16 %v1301
        %v1930 = vunpack.c.l.b16 %v1302
        %v1931 = vunpack.c.l.b16 %v1303
        %v1932 = vunpack.c.l.b16 %v1304
        %v1933 = vunpack.c.l.b16 %v1305
        %v1934 = vunpack.c.l.b16 %v1306
        %v1935 = vunpack.c.l.b16 %v1307
        %v1936 = vunpack.c.l.b16 %v1308
        %v1937 = vunpack.c.l.b16 %v1309
        %v1938 = vunpack.c.l.b16 %v1310
        %v1939 = vunpack.c.l.b16 %v1311
        %v1940 = vunpack.c.l.b16 %v1312
        %v1941 = vunpack.c.l.b16 %v1313
        %v1942 = vunpack.c.l.b16 %v1314
        %v1943 = vunpack.c.l.b16 %v1315
        %v1944 = vunpack.c.l.b16 %v1316
        %v1945 = vunpack.c.l.b16 %v1317
        %v1946 = vunpack.c.l.b16 %v1318
        %v1947 = vunpack.c.l.b16 %v1319
        %v1948 = vunpack.c.l.b16 %v1320
        %v1949 = vunpack.c.l.b16 %v1321
        %v1950 = vunpack.c.l.b16 %v1322
        %v1951 = vunpack.c.l.b16 %v1323
        %v1952 = vunpack.c.l.b16 %v1324
        %v1953 = vunpack.c.l.b16 %v1325
        %v1954 = vunpack.c.l.b16 %v1326
        %v1955 = vunpack.c.l.b16 %v1327
        %v1956 = vunpack.c.l.b16 %v1328
        %v1957 = vunpack.c.l.b16 %v1329
        %v1958 = vunpack.c.l.b16 %v1330
        %v1959 = vunpack.c.l.b16 %v1331
        %v1960 = vunpack.c.l.b16 %v1332
        %v1961 = vunpack.c.l.b16 %v1333
        %v1962 = vunpack.c.l.b16 %v1334
        %v1963 = vunpack.c.l.b16 %v1335
        %v1964 = vunpack.c.l.b16 %v1336
        %v1965 = vunpack.c.l.b16 %v1337
        %v1966 = vunpack.c.l.b16 %v1338
        %v1967 = vunpack.c.l.b16 %v1339
        %v1968 = vunpack.c.l.b16 %v1340
        %v1969 = vunpack.c.l.b16 %v1341
        %v1970 = vunpack.c.l.b16 %v1342
        %v1971 = vunpack.c.l.b16 %v1343
        %v1972 = vunpack.c.l.b16 %v1344
        %v1973 = vunpack.c.l.b16 %v1345
        %v1974 = vunpack.c.l.b16 %v1346
        %v1975 = vunpack.c.l.b16 %v1347
        %v1976 = vunpack.c.l.b16 %v1348
        %v1977 = vunpack.c.l.b16 %v1349
        %v1978 = vunpack.c.l.b16 %v1350
        %v1979 = vunpack.c.l.b16 %v1351
        %v1980 = vunpack.c.l.b16 %v1352
        %v1981 = vunpack.c.l.b16 %v1353
        %v1982 = vunpack.c.l.b16 %v1354
        %v1983 = vunpack.c.l.b16 %v1355
        %v1984 = vunpack.c.l.b16 %v1356
        %v1985 = vunpack.c.l.b16 %v1357
        %v1986 = vunpack.c.l.b16 %v1358
        %v1987 = vunpack.c.l.b16 %v1359
        %v1988 = vunpack.c.l.b16 %v1360
        %v1989 = vunpack.c.l.b16 %v1361
        %v1990 = vunpack.c.l.b16 %v1362
        %v1991 = vunpack.c.l.b16 %v1363
        %v1992 = vunpack.c.l.b16 %v1364
        %v1993 = vunpack.c.l.b16 %v1365
        %v1994 = vunpack.c.l.b16 %v1366
        %v1995 = vunpack.c.l.b16 %v1367
        %v1996 = vunpack.c.l.b16 %v1368
        %v1997 = vunpack.c.l.b16 %v1369
        %v1998 = vunpack.c.l.b16 %v1370
        %v1999 = vunpack.c.l.b16 %v1371
        %v2000 = vunpack.c.l.b16 %v1372
        %v2001 = vunpack.c.l.b16 %v1373
        %v2002 = vunpack.c.l.b16 %v1374
        %v2003 = vunpack.c.l.b16 %v1375
        %v2004 = vunpack.c.l.b16 %v1376
        %v2005 = vunpack.c.l.b16 %v1377
        %v2006 = vunpack.c.l.b16 %v1378
        %v2007 = vunpack.c.l.b16 %v1379
        %v2008 = vunpack.c.l.b16 %v1380
        %v2009 = vunpack.c.l.b16 %v1381
        %v2010 = vunpack.c.l.b16 %v1382
        %v2011 = vunpack.c.l.b16 %v1383
        %v2012 = vunpack.c.l.b16 %v1384
        %v2013 = vunpack.c.l.b16 %v1385
        %v2014 = vunpack.c.l.b16 %v1386
        %v2015 = vunpack.c.l.b16 %v1387
        %v2016 = vunpack.c.l.b16 %v1388
        %v2017 = vunpack.c.l.b16 %v1389
        %v2018 = vunpack.c.l.b16 %v1390
        %v2019 = vunpack.c.l.b16 %v1391
        %v2020 = vunpack.c.l.b16 %v1392
        %v2021 = vunpack.c.l.b16 %v1393
        %v2022 = vunpack.c.l.b16 %v1394
        %v2023 = vunpack.c.l.b16 %v1395
        %v2024 = vunpack.c.l.b16 %v1396
        %v2025 = vunpack.c.l.b16 %v1397
        %v2026 = vunpack.c.l.b16 %v1398
        %v2027 = vunpack.c.l.b16 %v1399
        %v2028 = vunpack.c.l.b16 %v1400
        %v2029 = vunpack.c.l.b16 %v1401
        %v2030 = vunpack.c.l.b16 %v1402
        %v2031 = vunpack.c.l.b16 %v1403
        %v2032 = vunpack.c.l.b16 %v1404
        %v2033 = vunpack.c.l.b16 %v1405
        %v2034 = vunpack.c.l.b16 %v1406
        %v2035 = vunpack.c.l.b16 %v1407
        %v2036 = vunpack.c.l.b16 %v1408
        %v2037 = vunpack.c.l.b16 %v1409
        %v2038 = vunpack.c.l.b16 %v1410
        %v2039 = vunpack.c.l.b16 %v1411
        %v2040 = vunpack.c.l.b16 %v1412
        %v2041 = vunpack.c.l.b16 %v1413
        %v2042 = vunpack.c.l.b16 %v1414
        %v2043 = vunpack.c.l.b16 %v1415
        %v2044 = vunpack.c.l.b16 %v1416
        %v2045 = vunpack.c.l.b16 %v1417
        %v2046 = vunpack.c.l.b16 %v1418
        %v2047 = vunpack.c.l.b16 %v1419
        %v2048 = vunpack.c.l.b16 %v1420
        %v2049 = vunpack.c.l.b16 %v1421
        %v2050 = vunpack.c.l.b16 %v1422
        %v2051 = vunpack.c.l.b16 %v1423
        %v2052 = vunpack.c.l.b16 %v1424
        %v2053 = vunpack.c.l.b16 %v1425
        %v2054 = vunpack.c.l.b16 %v1426
        %v2055 = vunpack.c.l.b16 %v1427
        %v2056 = vunpack.c.l.b16 %v1428
        %v2057 = vunpack.c.l.b16 %v1429
        %v2058 = vunpack.c.l.b16 %v1430
        %v2059 = vunpack.c.l.b16 %v1431
        %v2060 = vunpack.c.l.b16 %v1432
        %v2061 = vunpack.c.l.b16 %v1433
        %v2062 = vunpack.c.l.b16 %v1434
        %v2063 = vunpack.c.l.b16 %v1435
        %v2064 = vunpack.c.l.b16 %v1436
        %v2065 = vunpack.c.l.b16 %v1437
        %v2066 = vunpack.c.l.b16 %v1438
        %v2067 = vunpack.c.l.b16 %v1439
        %v2068 = vunpack.c.l.b16 %v1440
        %v2069 = vunpack.c.l.b16 %v1441
        %v2070 = vunpack.c.l.b16 %v1442
        %v2071 = vunpack.c.l.b16 %v1443
        %v2072 = vunpack.c.l.b16 %v1444
        %v2073 = vunpack.c.l.b16 %v1445
        %v2074 = vunpack.c.l.b16 %v1446
        %v2075 = vunpack.c.l.b16 %v1447
        %v2076 = vunpack.c.l.b16 %v1448
        %v2077 = vunpack.c.l.b16 %v1449
        %v2078 = vunpack.c.l.b16 %v1450
        %v2079 = vunpack.c.l.b16 %v1451
        %v2080 = vunpack.c.l.b16 %v1452
        %v2081 = vunpack.c.l.b16 %v1453
        %v2082 = vunpack.c.l.b16 %v1454
        %v2083 = vunpack.c.l.b16 %v1455
        %v2084 = vunpack.c.l.b16 %v1456
        %v2085 = vunpack.c.l.b16 %v1457
        %v2086 = vunpack.c.l.b16 %v1458
        %v2087 = vunpack.c.l.b16 %v1459
        %v2088 = vunpack.c.l.b16 %v1460
        %v2089 = vunpack.c.l.b16 %v1461
        %v2090 = vunpack.c.l.b16 %v1462
        %v2091 = vunpack.c.l.b16 %v1463
        %v2092 = vunpack.c.l.b16 %v1464
        %v2093 = vunpack.c.l.b16 %v1465
        %v2094 = vunpack.c.l.b16 %v1466
        %v2095 = vunpack.c.l.b16 %v1467
        %v2096 = vunpack.c.l.b16 %v1468
        %v2097 = vunpack.c.l.b16 %v1469
        %v2098 = vunpack.c.l.b16 %v1470
        %v2099 = vunpack.c.l.b16 %v1471
        %v2100 = vunpack.c.l.b16 %v1472
        %v2101 = vunpack.c.l.b16 %v1473
        %v2102 = vunpack.c.l.b16 %v1474
        %v2103 = vunpack.c.l.b16 %v1475
        %v2104 = vunpack.c.l.b16 %v1476
        %v2105 = vunpack.c.l.b16 %v1477
        %v2106 = vunpack.c.l.b16 %v1478
        %v2107 = vunpack.c.l.b16 %v1479
        %v2108 = vunpack.c.l.b16 %v1480
        %v2109 = vunpack.c.l.b16 %v1481
        %v2110 = vunpack.c.l.b16 %v1482
        %v2111 = vunpack.c.l.b16 %v1483
        %v2112 = vunpack.c.l.b16 %v1484
        %v2113 = vunpack.c.l.b16 %v1485
        %v2114 = vunpack.c.l.b16 %v1486
        %v2115 = vunpack.c.l.b16 %v1487
        %v2116 = vunpack.c.l.b16 %v1488
        %v2117 = vunpack.c.l.b16 %v1489
        %v2118 = vunpack.c.l.b16 %v1490
        %v2119 = vunpack.c.l.b16 %v1491
        %v2120 = vunpack.c.l.b16 %v1492
        %v2121 = vunpack.c.l.b16 %v1493
        %v2122 = vunpack.c.l.b16 %v1494
        %v2123 = vunpack.c.l.b16 %v1495
        %v2124 = vunpack.c.l.b16 %v1496
        %v2125 = vunpack.c.l.b16 %v1497
        %v2126 = vunpack.c.l.b16 %v1498
        %v2127 = vunpack.c.l.b16 %v1499
        %v2128 = vunpack.c.l.b16 %v1500
        %v2129 = vunpack.c.l.b16 %v1501
        %v2130 = vunpack.c.l.b16 %v1502
        %v2131 = vunpack.c.l.b16 %v1503
        %v2132 = vunpack.c.l.b16 %v1504
        %v2133 = vunpack.c.l.b16 %v1505
        %v2134 = vunpack.c.l.b16 %v1506
        %v2135 = vunpack.c.l.b16 %v1507
        %v2136 = vunpack.c.l.b16 %v1508
        %v2137 = vunpack.c.l.b16 %v1509
        %v2138 = vunpack.c.l.b16 %v1510
        %v2139 = vunpack.c.l.b16 %v1511
        %v2140 = vunpack.c.l.b16 %v1512
        %v2141 = vunpack.c.l.b16 %v1513
        %v2142 = vunpack.c.l.b16 %v1514
        %v2143 = vunpack.c.l.b16 %v1515
        %v2144 = vunpack.c.l.b16 %v1516
        %v2145 = vunpack.c.l.b16 %v1517
        %v2146 = vunpack.c.l.b16 %v1518
        %v2147 = vunpack.c.l.b16 %v1519
        %v2148 = vunpack.c.l.b16 %v1520
        %v2149 = vunpack.c.l.b16 %v1521
        %v2150 = vunpack.c.l.b16 %v1522
        %v2151 = vunpack.c.l.b16 %v1523
        %v2152 = vunpack.c.l.b16 %v1524
        %v2153 = vunpack.c.l.b16 %v1525
        %v2154 = vunpack.c.l.b16 %v1526
        %v2155 = vunpack.c.l.b16 %v1527
        %v2156 = vunpack.c.l.b16 %v1528
        %v2157 = vunpack.c.l.b16 %v1529
        %v2158 = vunpack.c.l.b16 %v1530
        %v2159 = vunpack.c.l.b16 %v1531
        %v2160 = vunpack.c.l.b16 %v1532
        %v2161 = vunpack.c.l.b16 %v1533
        %v2162 = vunpack.c.l.b16 %v1534
        %v2163 = vunpack.c.l.b16 %v1535
        %v2164 = vunpack.c.l.b16 %v1536
        %v2165 = vunpack.c.l.b16 %v1537
        %v2166 = vunpack.c.l.b16 %v1538
        %v2167 = vunpack.c.l.b16 %v1539
        %v2168 = vunpack.c.l.b16 %v1540
        %v2169 = vunpack.c.l.b16 %v1541
        %v2170 = vunpack.c.l.b16 %v1542
        %v2171 = vunpack.c.l.b16 %v1543
        %v2172 = vunpack.c.l.b16 %v1544
        %v2173 = vunpack.c.l.b16 %v1545
        %v2174 = vunpack.c.l.b16 %v1546
        %v2175 = vunpack.c.l.b16 %v1547
        %v2176 = vpack.c.b16 %v1921, %v1920
        %v2177 = vpack.c.b16 %v1923, %v1922
        %v2178 = vpack.c.b16 %v1925, %v1924
        %v2179 = vpack.c.b16 %v1927, %v1926
        %v2180 = vpack.c.b16 %v1929, %v1928
        %v2181 = vpack.c.b16 %v1931, %v1930
        %v2182 = vpack.c.b16 %v1933, %v1932
        %v2183 = vpack.c.b16 %v1935, %v1934
        %v2184 = vpack.c.b16 %v1937, %v1936
        %v2185 = vpack.c.b16 %v1939, %v1938
        %v2186 = vpack.c.b16 %v1941, %v1940
        %v2187 = vpack.c.b16 %v1943, %v1942
        %v2188 = vpack.c.b16 %v1945, %v1944
        %v2189 = vpack.c.b16 %v1947, %v1946
        %v2190 = vpack.c.b16 %v1949, %v1948
        %v2191 = vpack.c.b16 %v1951, %v1950
        %v2192 = vpack.c.b16 %v1953, %v1952
        %v2193 = vpack.c.b16 %v1955, %v1954
        %v2194 = vpack.c.b16 %v1957, %v1956
        %v2195 = vpack.c.b16 %v1959, %v1958
        %v2196 = vpack.c.b16 %v1961, %v1960
        %v2197 = vpack.c.b16 %v1963, %v1962
        %v2198 = vpack.c.b16 %v1965, %v1964
        %v2199 = vpack.c.b16 %v1967, %v1966
        %v2200 = vpack.c.b16 %v1969, %v1968
        %v2201 = vpack.c.b16 %v1971, %v1970
        %v2202 = vpack.c.b16 %v1973, %v1972
        %v2203 = vpack.c.b16 %v1975, %v1974
        %v2204 = vpack.c.b16 %v1977, %v1976
        %v2205 = vpack.c.b16 %v1979, %v1978
        %v2206 = vpack.c.b16 %v1981, %v1980
        %v2207 = vpack.c.b16 %v1983, %v1982
        %v2208 = vpack.c.b16 %v1985, %v1984
        %v2209 = vpack.c.b16 %v1987, %v1986
        %v2210 = vpack.c.b16 %v1989, %v1988
        %v2211 = vpack.c.b16 %v1991, %v1990
        %v2212 = vpack.c.b16 %v1993, %v1992
        %v2213 = vpack.c.b16 %v1995, %v1994
        %v2214 = vpack.c.b16 %v1997, %v1996
        %v2215 = vpack.c.b16 %v1999, %v1998
        %v2216 = vpack.c.b16 %v2001, %v2000
        %v2217 = vpack.c.b16 %v2003, %v2002
        %v2218 = vpack.c.b16 %v2005, %v2004
        %v2219 = vpack.c.b16 %v2007, %v2006
        %v2220 = vpack.c.b16 %v2009, %v2008
        %v2221 = vpack.c.b16 %v2011, %v2010
        %v2222 = vpack.c.b16 %v2013, %v2012
        %v2223 = vpack.c.b16 %v2015, %v2014
        %v2224 = vpack.c.b16 %v2017, %v2016
        %v2225 = vpack.c.b16 %v2019, %v2018
        %v2226 = vpack.c.b16 %v2021, %v2020
        %v2227 = vpack.c.b16 %v2023, %v2022
        %v2228 = vpack.c.b16 %v2025, %v2024
        %v2229 = vpack.c.b16 %v2027, %v2026
        %v2230 = vpack.c.b16 %v2029, %v2028
        %v2231 = vpack.c.b16 %v2031, %v2030
        %v2232 = vpack.c.b16 %v2033, %v2032
        %v2233 = vpack.c.b16 %v2035, %v2034
        %v2234 = vpack.c.b16 %v2037, %v2036
        %v2235 = vpack.c.b16 %v2039, %v2038
        %v2236 = vpack.c.b16 %v2041, %v2040
        %v2237 = vpack.c.b16 %v2043, %v2042
        %v2238 = vpack.c.b16 %v2045, %v2044
        %v2239 = vpack.c.b16 %v2047, %v2046
        %v2240 = vpack.c.b16 %v2049, %v2048
        %v2241 = vpack.c.b16 %v2051, %v2050
        %v2242 = vpack.c.b16 %v2053, %v2052
        %v2243 = vpack.c.b16 %v2055, %v2054
        %v2244 = vpack.c.b16 %v2057, %v2056
        %v2245 = vpack.c.b16 %v2059, %v2058
        %v2246 = vpack.c.b16 %v2061, %v2060
        %v2247 = vpack.c.b16 %v2063, %v2062
        %v2248 = vpack.c.b16 %v2065, %v2064
        %v2249 = vpack.c.b16 %v2067, %v2066
        %v2250 = vpack.c.b16 %v2069, %v2068
        %v2251 = vpack.c.b16 %v2071, %v2070
        %v2252 = vpack.c.b16 %v2073, %v2072
        %v2253 = vpack.c.b16 %v2075, %v2074
        %v2254 = vpack.c.b16 %v2077, %v2076
        %v2255 = vpack.c.b16 %v2079, %v2078
        %v2256 = vpack.c.b16 %v2081, %v2080
        %v2257 = vpack.c.b16 %v2083, %v2082
        %v2258 = vpack.c.b16 %v2085, %v2084
        %v2259 = vpack.c.b16 %v2087, %v2086
        %v2260 = vpack.c.b16 %v2089, %v2088
        %v2261 = vpack.c.b16 %v2091, %v2090
        %v2262 = vpack.c.b16 %v2093, %v2092
        %v2263 = vpack.c.b16 %v2095, %v2094
        %v2264 = vpack.c.b16 %v2097, %v2096
        %v2265 = vpack.c.b16 %v2099, %v2098
        %v2266 = vpack.c.b16 %v2101, %v2100
        %v2267 = vpack.c.b16 %v2103, %v2102
        %v2268 = vpack.c.b16 %v2105, %v2104
        %v2269 = vpack.c.b16 %v2107, %v2106
        %v2270 = vpack.c.b16 %v2109, %v2108
        %v2271 = vpack.c.b16 %v2111, %v2110
        %v2272 = vpack.c.b16 %v2113, %v2112
        %v2273 = vpack.c.b16 %v2115, %v2114
        %v2274 = vpack.c.b16 %v2117, %v2116
        %v2275 = vpack.c.b16 %v2119, %v2118
        %v2276 = vpack.c.b16 %v2121, %v2120
        %v2277 = vpack.c.b16 %v2123, %v2122
        %v2278 = vpack.c.b16 %v2125, %v2124
        %v2279 = vpack.c.b16 %v2127, %v2126
        %v2280 = vpack.c.b16 %v2129, %v2128
        %v2281 = vpack.c.b16 %v2131, %v2130
        %v2282 = vpack.c.b16 %v2133, %v2132
        %v2283 = vpack.c.b16 %v2135, %v2134
        %v2284 = vpack.c.b16 %v2137, %v2136
        %v2285 = vpack.c.b16 %v2139, %v2138
        %v2286 = vpack.c.b16 %v2141, %v2140
        %v2287 = vpack.c.b16 %v2143, %v2142
        %v2288 = vpack.c.b16 %v2145, %v2144
        %v2289 = vpack.c.b16 %v2147, %v2146
        %v2290 = vpack.c.b16 %v2149, %v2148
        %v2291 = vpack.c.b16 %v2151, %v2150
        %v2292 = vpack.c.b16 %v2153, %v2152
        %v2293 = vpack.c.b16 %v2155, %v2154
        %v2294 = vpack.c.b16 %v2157, %v2156
        %v2295 = vpack.c.b16 %v2159, %v2158
        %v2296 = vpack.c.b16 %v2161, %v2160
        %v2297 = vpack.c.b16 %v2163, %v2162
        %v2298 = vpack.c.b16 %v2165, %v2164
        %v2299 = vpack.c.b16 %v2167, %v2166
        %v2300 = vpack.c.b16 %v2169, %v2168
        %v2301 = vpack.c.b16 %v2171, %v2170
        %v2302 = vpack.c.b16 %v2173, %v2172
        %v2303 = vpack.c.b16 %v2175, %v2174
        %2432 = vmatprep.subr.bf16.mxu0 0
        %2433 = vmatpush1.bf16.msra.mxu0 %v2183
        %2434 = vmatprep.subr.bf16.mxu0 0
        %2435 = vmatpush1.bf16.msra.mxu0 %v2182
        %2436 = vmatprep.subr.bf16.mxu0 0
        %2437 = vmatpush1.bf16.msra.mxu0 %v2181
        %2438 = vmatprep.subr.bf16.mxu0 0
        %2439 = vmatpush1.bf16.msra.mxu0 %v2180
        %2440 = vmatprep.subr.bf16.mxu0 0
        %2441 = vmatpush1.bf16.msra.mxu0 %v2179
        %2442 = vmatprep.subr.bf16.mxu0 0
        %2443 = vmatpush1.bf16.msra.mxu0 %v2178
        %2444 = vmatprep.subr.bf16.mxu0 0
        %2445 = vmatpush1.bf16.msra.mxu0 %v2177
        %2446 = vmatprep.subr.bf16.mxu0 0
        %2447 = vmatpush1.bf16.msra.mxu0 %v2176
        %2448 = vmatprep.subr.bf16.mxu0 0
        %2449 = vmatpush2.bf16.msra.mxu0 %v2191
        %2450 = vmatprep.subr.bf16.mxu0 0
        %2451 = vmatpush2.bf16.msra.mxu0 %v2190
        %2452 = vmatprep.subr.bf16.mxu0 0
        %2453 = vmatpush2.bf16.msra.mxu0 %v2189
        %2454 = vmatprep.subr.bf16.mxu0 0
        %2455 = vmatpush2.bf16.msra.mxu0 %v2188
        %2456 = vmatprep.subr.bf16.mxu0 0
        %2457 = vmatpush2.bf16.msra.mxu0 %v2187
        %2458 = vmatprep.subr.bf16.mxu0 0
        %2459 = vmatpush2.bf16.msra.mxu0 %v2186
        %2460 = vmatprep.subr.bf16.mxu0 0
        %2461 = vmatpush2.bf16.msra.mxu0 %v2185
        %2462 = vmatprep.subr.bf16.mxu0 0
        %2463 = vmatpush2.bf16.msra.mxu0 %v2184
        %2464 = vmatprep.mubr.bf16.mxu0 %v1587
        %2465 = vmatmul.mubr.bf16.gmra.mxu0 %v1573
        %v2466 = vpop.f32.mrf.mxu0
        %v2467 = vadd.f32 0.0, %v2466
        %v2468 = vpop.f32.mrf.mxu0
        %v2469 = vpop.f32.mrf.mxu0
        %v2470 = vpop.f32.mrf.mxu0
        %2471 = vdwg.mxu0
        %2472 = vmatprep.subr.bf16.mxu0 0
        %2473 = vmatpush1.bf16.msra.mxu0 %v2199
        %2474 = vmatprep.subr.bf16.mxu0 0
        %2475 = vmatpush1.bf16.msra.mxu0 %v2198
        %2476 = vmatprep.subr.bf16.mxu0 0
        %2477 = vmatpush1.bf16.msra.mxu0 %v2197
        %2478 = vmatprep.subr.bf16.mxu0 0
        %2479 = vmatpush1.bf16.msra.mxu0 %v2196
        %2480 = vmatprep.subr.bf16.mxu0 0
        %2481 = vmatpush1.bf16.msra.mxu0 %v2195
        %2482 = vmatprep.subr.bf16.mxu0 0
        %2483 = vmatpush1.bf16.msra.mxu0 %v2194
        %2484 = vmatprep.subr.bf16.mxu0 0
        %2485 = vmatpush1.bf16.msra.mxu0 %v2193
        %2486 = vmatprep.subr.bf16.mxu0 0
        %2487 = vmatpush1.bf16.msra.mxu0 %v2192
        %2488 = vmatprep.subr.bf16.mxu0 0
        %2489 = vmatpush2.bf16.msra.mxu0 %v2207
        %2490 = vmatprep.subr.bf16.mxu0 0
        %2491 = vmatpush2.bf16.msra.mxu0 %v2206
        %2492 = vmatprep.subr.bf16.mxu0 0
        %2493 = vmatpush2.bf16.msra.mxu0 %v2205
        %2494 = vmatprep.subr.bf16.mxu0 0
        %2495 = vmatpush2.bf16.msra.mxu0 %v2204
        %2496 = vmatprep.subr.bf16.mxu0 0
        %2497 = vmatpush2.bf16.msra.mxu0 %v2203
        %2498 = vmatprep.subr.bf16.mxu0 0
        %2499 = vmatpush2.bf16.msra.mxu0 %v2202
        %2500 = vmatprep.subr.bf16.mxu0 0
        %2501 = vmatpush2.bf16.msra.mxu0 %v2201
        %2502 = vmatprep.subr.bf16.mxu0 0
        %2503 = vmatpush2.bf16.msra.mxu0 %v2200
        %2504 = vmatprep.mubr.bf16.mxu0 %v1597
        %2505 = vmatmul.mubr.bf16.gmra.mxu0 %v1595
        %v2506 = vpop.f32.mrf.mxu0
        %v2507 = vadd.f32 %v2467, %v2506
        %v2508 = vpop.f32.mrf.mxu0
        %v2509 = vpop.f32.mrf.mxu0
        %v2510 = vpop.f32.mrf.mxu0
        %2511 = vdwg.mxu0
        %2512 = vmatprep.subr.bf16.mxu0 0
        %2513 = vmatpush1.bf16.msra.mxu0 %v2215
        %2514 = vmatprep.subr.bf16.mxu0 0
        %2515 = vmatpush1.bf16.msra.mxu0 %v2214
        %2516 = vmatprep.subr.bf16.mxu0 0
        %2517 = vmatpush1.bf16.msra.mxu0 %v2213
        %2518 = vmatprep.subr.bf16.mxu0 0
        %2519 = vmatpush1.bf16.msra.mxu0 %v2212
        %2520 = vmatprep.subr.bf16.mxu0 0
        %2521 = vmatpush1.bf16.msra.mxu0 %v2211
        %2522 = vmatprep.subr.bf16.mxu0 0
        %2523 = vmatpush1.bf16.msra.mxu0 %v2210
        %2524 = vmatprep.subr.bf16.mxu0 0
        %2525 = vmatpush1.bf16.msra.mxu0 %v2209
        %2526 = vmatprep.subr.bf16.mxu0 0
        %2527 = vmatpush1.bf16.msra.mxu0 %v2208
        %2528 = vmatprep.subr.bf16.mxu0 0
        %2529 = vmatpush2.bf16.msra.mxu0 %v2223
        %2530 = vmatprep.subr.bf16.mxu0 0
        %2531 = vmatpush2.bf16.msra.mxu0 %v2222
        %2532 = vmatprep.subr.bf16.mxu0 0
        %2533 = vmatpush2.bf16.msra.mxu0 %v2221
        %2534 = vmatprep.subr.bf16.mxu0 0
        %2535 = vmatpush2.bf16.msra.mxu0 %v2220
        %2536 = vmatprep.subr.bf16.mxu0 0
        %2537 = vmatpush2.bf16.msra.mxu0 %v2219
        %2538 = vmatprep.subr.bf16.mxu0 0
        %2539 = vmatpush2.bf16.msra.mxu0 %v2218
        %2540 = vmatprep.subr.bf16.mxu0 0
        %2541 = vmatpush2.bf16.msra.mxu0 %v2217
        %2542 = vmatprep.subr.bf16.mxu0 0
        %2543 = vmatpush2.bf16.msra.mxu0 %v2216
        %2544 = vmatprep.mubr.bf16.mxu0 %v1594
        %2545 = vmatmul.mubr.bf16.gmra.mxu0 %v1580
        %v2546 = vpop.f32.mrf.mxu0
        %v2547 = vadd.f32 %v2507, %v2546
        %v2548 = vpop.f32.mrf.mxu0
        %v2549 = vpop.f32.mrf.mxu0
        %v2550 = vpop.f32.mrf.mxu0
        %2551 = vdwg.mxu0
        %2552 = vmatprep.subr.bf16.mxu0 0
        %2553 = vmatpush1.bf16.msra.mxu0 %v2231
        %2554 = vmatprep.subr.bf16.mxu0 0
        %2555 = vmatpush1.bf16.msra.mxu0 %v2230
        %2556 = vmatprep.subr.bf16.mxu0 0
        %2557 = vmatpush1.bf16.msra.mxu0 %v2229
        %2558 = vmatprep.subr.bf16.mxu0 0
        %2559 = vmatpush1.bf16.msra.mxu0 %v2228
        %2560 = vmatprep.subr.bf16.mxu0 0
        %2561 = vmatpush1.bf16.msra.mxu0 %v2227
        %2562 = vmatprep.subr.bf16.mxu0 0
        %2563 = vmatpush1.bf16.msra.mxu0 %v2226
        %2564 = vmatprep.subr.bf16.mxu0 0
        %2565 = vmatpush1.bf16.msra.mxu0 %v2225
        %2566 = vmatprep.subr.bf16.mxu0 0
        %2567 = vmatpush1.bf16.msra.mxu0 %v2224
        %2568 = vmatprep.subr.bf16.mxu0 0
        %2569 = vmatpush2.bf16.msra.mxu0 %v2239
        %2570 = vmatprep.subr.bf16.mxu0 0
        %2571 = vmatpush2.bf16.msra.mxu0 %v2238
        %2572 = vmatprep.subr.bf16.mxu0 0
        %2573 = vmatpush2.bf16.msra.mxu0 %v2237
        %2574 = vmatprep.subr.bf16.mxu0 0
        %2575 = vmatpush2.bf16.msra.mxu0 %v2236
        %2576 = vmatprep.subr.bf16.mxu0 0
        %2577 = vmatpush2.bf16.msra.mxu0 %v2235
        %2578 = vmatprep.subr.bf16.mxu0 0
        %2579 = vmatpush2.bf16.msra.mxu0 %v2234
        %2580 = vmatprep.subr.bf16.mxu0 0
        %2581 = vmatpush2.bf16.msra.mxu0 %v2233
        %2582 = vmatprep.subr.bf16.mxu0 0
        %2583 = vmatpush2.bf16.msra.mxu0 %v2232
        %2584 = vmatprep.mubr.bf16.mxu0 %v1598
        %2585 = vmatmul.mubr.bf16.gmra.mxu0 %v1596
        %v2586 = vpop.f32.mrf.mxu0
        %v2587 = vadd.f32 %v2547, %v2586
        %v2588 = vpop.f32.mrf.mxu0
        %v2589 = vpop.f32.mrf.mxu0
        %v2590 = vpop.f32.mrf.mxu0
        %2591 = vdwg.mxu0
        %2592 = vmatprep.subr.bf16.mxu0 0
        %2593 = vmatpush1.bf16.msra.mxu0 %v2247
        %2594 = vmatprep.subr.bf16.mxu0 0
        %2595 = vmatpush1.bf16.msra.mxu0 %v2246
        %2596 = vmatprep.subr.bf16.mxu0 0
        %2597 = vmatpush1.bf16.msra.mxu0 %v2245
        %2598 = vmatprep.subr.bf16.mxu0 0
        %2599 = vmatpush1.bf16.msra.mxu0 %v2244
        %2600 = vmatprep.subr.bf16.mxu0 0
        %2601 = vmatpush1.bf16.msra.mxu0 %v2243
        %2602 = vmatprep.subr.bf16.mxu0 0
        %2603 = vmatpush1.bf16.msra.mxu0 %v2242
        %2604 = vmatprep.subr.bf16.mxu0 0
        %2605 = vmatpush1.bf16.msra.mxu0 %v2241
        %2606 = vmatprep.subr.bf16.mxu0 0
        %2607 = vmatpush1.bf16.msra.mxu0 %v2240
        %2608 = vmatprep.subr.bf16.mxu0 0
        %2609 = vmatpush2.bf16.msra.mxu0 %v2255
        %2610 = vmatprep.subr.bf16.mxu0 0
        %2611 = vmatpush2.bf16.msra.mxu0 %v2254
        %2612 = vmatprep.subr.bf16.mxu0 0
        %2613 = vmatpush2.bf16.msra.mxu0 %v2253
        %2614 = vmatprep.subr.bf16.mxu0 0
        %2615 = vmatpush2.bf16.msra.mxu0 %v2252
        %2616 = vmatprep.subr.bf16.mxu0 0
        %2617 = vmatpush2.bf16.msra.mxu0 %v2251
        %2618 = vmatprep.subr.bf16.mxu0 0
        %2619 = vmatpush2.bf16.msra.mxu0 %v2250
        %2620 = vmatprep.subr.bf16.mxu0 0
        %2621 = vmatpush2.bf16.msra.mxu0 %v2249
        %2622 = vmatprep.subr.bf16.mxu0 0
        %2623 = vmatpush2.bf16.msra.mxu0 %v2248
        %2624 = vmatprep.mubr.bf16.mxu0 %v1636
        %2625 = vmatmul.mubr.bf16.gmra.mxu0 %v1622
        %v2626 = vpop.f32.mrf.mxu0
        %v2627 = vadd.f32 %v2587, %v2626
        %v2628 = vpop.f32.mrf.mxu0
        %v2629 = vpop.f32.mrf.mxu0
        %v2630 = vpop.f32.mrf.mxu0
        %2631 = vdwg.mxu0
        %2632 = vmatprep.subr.bf16.mxu0 0
        %2633 = vmatpush1.bf16.msra.mxu0 %v2263
        %2634 = vmatprep.subr.bf16.mxu0 0
        %2635 = vmatpush1.bf16.msra.mxu0 %v2262
        %2636 = vmatprep.subr.bf16.mxu0 0
        %2637 = vmatpush1.bf16.msra.mxu0 %v2261
        %2638 = vmatprep.subr.bf16.mxu0 0
        %2639 = vmatpush1.bf16.msra.mxu0 %v2260
        %2640 = vmatprep.subr.bf16.mxu0 0
        %2641 = vmatpush1.bf16.msra.mxu0 %v2259
        %2642 = vmatprep.subr.bf16.mxu0 0
        %2643 = vmatpush1.bf16.msra.mxu0 %v2258
        %2644 = vmatprep.subr.bf16.mxu0 0
        %2645 = vmatpush1.bf16.msra.mxu0 %v2257
        %2646 = vmatprep.subr.bf16.mxu0 0
        %2647 = vmatpush1.bf16.msra.mxu0 %v2256
        %2648 = vmatprep.subr.bf16.mxu0 0
        %2649 = vmatpush2.bf16.msra.mxu0 %v2271
        %2650 = vmatprep.subr.bf16.mxu0 0
        %2651 = vmatpush2.bf16.msra.mxu0 %v2270
        %2652 = vmatprep.subr.bf16.mxu0 0
        %2653 = vmatpush2.bf16.msra.mxu0 %v2269
        %2654 = vmatprep.subr.bf16.mxu0 0
        %2655 = vmatpush2.bf16.msra.mxu0 %v2268
        %2656 = vmatprep.subr.bf16.mxu0 0
        %2657 = vmatpush2.bf16.msra.mxu0 %v2267
        %2658 = vmatprep.subr.bf16.mxu0 0
        %2659 = vmatpush2.bf16.msra.mxu0 %v2266
        %2660 = vmatprep.subr.bf16.mxu0 0
        %2661 = vmatpush2.bf16.msra.mxu0 %v2265
        %2662 = vmatprep.subr.bf16.mxu0 0
        %2663 = vmatpush2.bf16.msra.mxu0 %v2264
        %2664 = vmatprep.mubr.bf16.mxu0 %v1646
        %2665 = vmatmul.mubr.bf16.gmra.mxu0 %v1644
        %v2666 = vpop.f32.mrf.mxu0
        %v2667 = vadd.f32 %v2627, %v2666
        %v2668 = vpop.f32.mrf.mxu0
        %v2669 = vpop.f32.mrf.mxu0
        %v2670 = vpop.f32.mrf.mxu0
        %2671 = vdwg.mxu0
        %2672 = vmatprep.subr.bf16.mxu0 0
        %2673 = vmatpush1.bf16.msra.mxu0 %v2279
        %2674 = vmatprep.subr.bf16.mxu0 0
        %2675 = vmatpush1.bf16.msra.mxu0 %v2278
        %2676 = vmatprep.subr.bf16.mxu0 0
        %2677 = vmatpush1.bf16.msra.mxu0 %v2277
        %2678 = vmatprep.subr.bf16.mxu0 0
        %2679 = vmatpush1.bf16.msra.mxu0 %v2276
        %2680 = vmatprep.subr.bf16.mxu0 0
        %2681 = vmatpush1.bf16.msra.mxu0 %v2275
        %2682 = vmatprep.subr.bf16.mxu0 0
        %2683 = vmatpush1.bf16.msra.mxu0 %v2274
        %2684 = vmatprep.subr.bf16.mxu0 0
        %2685 = vmatpush1.bf16.msra.mxu0 %v2273
        %2686 = vmatprep.subr.bf16.mxu0 0
        %2687 = vmatpush1.bf16.msra.mxu0 %v2272
        %2688 = vmatprep.subr.bf16.mxu0 0
        %2689 = vmatpush2.bf16.msra.mxu0 %v2287
        %2690 = vmatprep.subr.bf16.mxu0 0
        %2691 = vmatpush2.bf16.msra.mxu0 %v2286
        %2692 = vmatprep.subr.bf16.mxu0 0
        %2693 = vmatpush2.bf16.msra.mxu0 %v2285
        %2694 = vmatprep.subr.bf16.mxu0 0
        %2695 = vmatpush2.bf16.msra.mxu0 %v2284
        %2696 = vmatprep.subr.bf16.mxu0 0
        %2697 = vmatpush2.bf16.msra.mxu0 %v2283
        %2698 = vmatprep.subr.bf16.mxu0 0
        %2699 = vmatpush2.bf16.msra.mxu0 %v2282
        %2700 = vmatprep.subr.bf16.mxu0 0
        %2701 = vmatpush2.bf16.msra.mxu0 %v2281
        %2702 = vmatprep.subr.bf16.mxu0 0
        %2703 = vmatpush2.bf16.msra.mxu0 %v2280
        %2704 = vmatprep.mubr.bf16.mxu0 %v1643
        %2705 = vmatmul.mubr.bf16.gmra.mxu0 %v1629
        %v2706 = vpop.f32.mrf.mxu0
        %v2707 = vadd.f32 %v2667, %v2706
        %v2708 = vpop.f32.mrf.mxu0
        %v2709 = vpop.f32.mrf.mxu0
        %v2710 = vpop.f32.mrf.mxu0
        %2711 = vdwg.mxu0
        %2712 = vmatprep.subr.bf16.mxu0 0
        %2713 = vmatpush1.bf16.msra.mxu0 %v2295
        %2714 = vmatprep.subr.bf16.mxu0 0
        %2715 = vmatpush1.bf16.msra.mxu0 %v2294
        %2716 = vmatprep.subr.bf16.mxu0 0
        %2717 = vmatpush1.bf16.msra.mxu0 %v2293
        %2718 = vmatprep.subr.bf16.mxu0 0
        %2719 = vmatpush1.bf16.msra.mxu0 %v2292
        %2720 = vmatprep.subr.bf16.mxu0 0
        %2721 = vmatpush1.bf16.msra.mxu0 %v2291
        %2722 = vmatprep.subr.bf16.mxu0 0
        %2723 = vmatpush1.bf16.msra.mxu0 %v2290
        %2724 = vmatprep.subr.bf16.mxu0 0
        %2725 = vmatpush1.bf16.msra.mxu0 %v2289
        %2726 = vmatprep.subr.bf16.mxu0 0
        %2727 = vmatpush1.bf16.msra.mxu0 %v2288
        %2728 = vmatprep.subr.bf16.mxu0 0
        %2729 = vmatpush2.bf16.msra.mxu0 %v2303
        %2730 = vmatprep.subr.bf16.mxu0 0
        %2731 = vmatpush2.bf16.msra.mxu0 %v2302
        %2732 = vmatprep.subr.bf16.mxu0 0
        %2733 = vmatpush2.bf16.msra.mxu0 %v2301
        %2734 = vmatprep.subr.bf16.mxu0 0
        %2735 = vmatpush2.bf16.msra.mxu0 %v2300
        %2736 = vmatprep.subr.bf16.mxu0 0
        %2737 = vmatpush2.bf16.msra.mxu0 %v2299
        %2738 = vmatprep.subr.bf16.mxu0 0
        %2739 = vmatpush2.bf16.msra.mxu0 %v2298
        %2740 = vmatprep.subr.bf16.mxu0 0
        %2741 = vmatpush2.bf16.msra.mxu0 %v2297
        %2742 = vmatprep.subr.bf16.mxu0 0
        %2743 = vmatpush2.bf16.msra.mxu0 %v2296
        %2744 = vmatprep.mubr.bf16.mxu0 %v1647
        %2745 = vmatmul.mubr.bf16.gmra.mxu0 %v1645
        %v2746 = vpop.f32.mrf.mxu0
        %v2747 = vadd.f32 %v2707, %v2746
        %v2748 = vpop.f32.mrf.mxu0
        %v2749 = vpop.f32.mrf.mxu0
        %v2750 = vpop.f32.mrf.mxu0
        %2751 = vdwg.mxu0
        %v2752 = vadd.f32 %v1289, %v2747
        %2753 = vst [vmem:[#allocation2] sm:$0x3] %v2752
        %p2754 = scmp.eq.s32.totalorder %s19, 3
        // Predicated region
        $region78: #{cnn_score_forward.6} parent=68 // pred_check
          %p2755 = pneg %p2754
        $region79: #{cnn_score_forward.6} parent=68 // pred_check_branch
          %2757 = sbr.rel (%p2755) target = $region81
        $region80: #{cnn_score_forward.6} parent=68 // pred_region
          %v2758 = vld [vmem:[#allocation2] sm:$0x3]
          %v2759 = vld [vmem:[%s1278] sm:$0x1]
          %v2761 = vlaneseq
          %v2762 = vshrl.u32 %v2761, 7
          %v2763 = vsub.s32 0, %v2762
          %v2764 = vrot.slane %v2759, %v2763
          %v2766 = vadd.f32 %v2758, %v2764
          %v2767 = vmul.f32 %v2766, 0.33
          %v2768 = vmax.f32 %v2766, %v2767
          %2769 = vst [vmem:[%s1282] sm:$0x3] %v2768
        $region81: #{cnn_score_forward.6} parent=68 // pred_fallthru
          _
        %p2770 = scmp.lt.s32.totalorder %s18, 1
        %s2771 = scalar_select %p2770, %s18, 1
        %s2772 = smul.addr %s2771, 2
        %s2773 = scalar_lea.vmem %s3, %s2772
        // Predicated region
        $region82: #{cnn_score_forward.6} parent=68 // pred_check
          %p2774 = pneg %p124
        $region83: #{cnn_score_forward.6} parent=68 // pred_check_branch
          %2776 = sbr.rel (%p2774) target = $region85
        $region84: #{cnn_score_forward.6} parent=68 // pred_region
          _
        $region85: #{cnn_score_forward.6} parent=68 // pred_fallthru
          _
      $region69: #{cnn_score_forward.6} parent=5 // pred_fallthru
        _
      %p2777 = scmp.le.s32.totalorder 2, %s9
      // Predicated region
      $region86: #{cnn_score_forward.6} parent=5 // pred_check
        %p2778 = pneg %p2777
      $region87: #{cnn_score_forward.6} parent=5 // pred_check_branch
        %2780 = sbr.rel (%p2778) target = $region89
      $region88: #{cnn_score_forward.6} parent=5 // pred_region
        %s2781 = ssub.s32 %s9, 2
        // Predicated region
        $region90: #{cnn_score_forward.6} parent=88 // pred_check
          %p2782 = pneg %p130
        $region91: #{cnn_score_forward.6} parent=88 // pred_check_branch
          %2784 = sbr.rel (%p2782) target = $region93
        $region92: #{cnn_score_forward.6} parent=88 // pred_region
          %p2785 = scmp.lt.s32.totalorder %s20, 1
          %s2786 = scalar_select %p2785, %s20, 1
          %s2787 = smul.addr %s2786, 2
          %s2788 = scalar_lea.vmem %s3, %s2787
        $region93: #{cnn_score_forward.6} parent=88 // pred_fallthru
          _
      $region89: #{cnn_score_forward.6} parent=5 // pred_fallthru
        _
    $region6: #{cnn_score_forward.6} parent=1 // loop_footer
      %s13 = sadd.s32 1, %s9
    $region7: #{cnn_score_forward.6} parent=1 // loop_footer_branch
      %8 = sbr.rel target = $region3
    $region8: #{cnn_score_forward.6} parent=1 // loop_exit
      _

// kernel: cnn_score_forward.7
$region0: #{cnn_score_forward.7}
  #allocation0 [shape = 'u32[]', space=smem, size = 0x4, offset = 0x4, fixed_abs, tag = 'smem constant byte address 0x4 - core index']
  #allocation1 [shape = 'u32[144,128]{1,0:T(1,128)}', space=vmem, size = 0x12000, scoped, tag = 'internal scratch']
  %s0 = inlined_call_operand.vmem [shape: f32[2,256], index: 0, kind: input, shape index: {}]
  %s1 = inlined_call_operand.vmem [shape: f32[256,2], index: 1, kind: input, shape index: {}]
  %s2 = inlined_call_operand.vmem [shape: f32[1,2], index: 2, kind: input, shape index: {}]
  %s3 = inlined_call_operand.hbm [shape: f32[2,2], index: 3, kind: output, shape index: {}]
  %s4 = sld [smem:[#allocation0]]
  $region22: #{cnn_score_forward.7} parent=0
    _
  %s6 = ssub.s32 1, %s4
  %s7 = scalar_select 0, %s6, %s4
  $region1: #{cnn_score_forward.7} parent=0
    #allocation2 [shape = 'u8[1024]{0}', space=vmem, size = 0x400, scoped, tag = 'output window, operand 0, single buffered']
    #allocation3 [shape = 's32[1]{0}', space=sflag, size = 0x4, scoped, tag = 'scoped memory for cnn_score_forward.7']
    %8 = vsyncpa [#allocation3], 0
    // Predicated region
    $region2: #{cnn_score_forward.7} parent=1 // pred_check
      _
    $region3: #{cnn_score_forward.7} parent=1 // pred_check_branch
      %10 = sbr.rel (0) target = $region5
    $region4: #{cnn_score_forward.7} parent=1 // pred_region
      _
    $region5: #{cnn_score_forward.7} parent=1 // pred_fallthru
      _
    // Predicated region
    $region6: #{cnn_score_forward.7} parent=1 // pred_check
      _
    $region7: #{cnn_score_forward.7} parent=1 // pred_check_branch
      %12 = sbr.rel (0) target = $region9
    $region8: #{cnn_score_forward.7} parent=1 // pred_region
      _
    $region9: #{cnn_score_forward.7} parent=1 // pred_fallthru
      _
    // Predicated region
    $region10: #{cnn_score_forward.7} parent=1 // pred_check
      _
    $region11: #{cnn_score_forward.7} parent=1 // pred_check_branch
      %14 = sbr.rel (0) target = $region13
    $region12: #{cnn_score_forward.7} parent=1 // pred_region
      _
    $region13: #{cnn_score_forward.7} parent=1 // pred_fallthru
      _
    %v15 = vld [vmem:[%s0] sm:$0xf]
    %v16 = vld [vmem:[%s1] sm:$0xff]
    %v17 = vld [vmem:[%s1 + $0x8] sm:$0xff]
    %v18 = vld [vmem:[%s1 + $0x10] sm:$0xff]
    %v19 = vld [vmem:[%s1 + $0x18] sm:$0xff]
    %v20 = vld [vmem:[%s1 + $0x20] sm:$0xff]
    %v21 = vld [vmem:[%s1 + $0x28] sm:$0xff]
    %v22 = vld [vmem:[%s1 + $0x30] sm:$0xff]
    %v23 = vld [vmem:[%s1 + $0x38] sm:$0xff]
    %v24 = vld [vmem:[%s1 + $0x40] sm:$0xff]
    %v25 = vld [vmem:[%s1 + $0x48] sm:$0xff]
    %v26 = vld [vmem:[%s1 + $0x50] sm:$0xff]
    %v27 = vld [vmem:[%s1 + $0x58] sm:$0xff]
    %v28 = vld [vmem:[%s1 + $0x60] sm:$0xff]
    %v29 = vld [vmem:[%s1 + $0x68] sm:$0xff]
    %v30 = vld [vmem:[%s1 + $0x70] sm:$0xff]
    %v31 = vld [vmem:[%s1 + $0x78] sm:$0xff]
    %v32 = vld [vmem:[%s1 + $0x80] sm:$0xff]
    %v33 = vld [vmem:[%s1 + $0x88] sm:$0xff]
    %v34 = vld [vmem:[%s1 + $0x90] sm:$0xff]
    %v35 = vld [vmem:[%s1 + $0x98] sm:$0xff]
    %v36 = vld [vmem:[%s1 + $0xa0] sm:$0xff]
    %v37 = vld [vmem:[%s1 + $0xa8] sm:$0xff]
    %v38 = vld [vmem:[%s1 + $0xb0] sm:$0xff]
    %v39 = vld [vmem:[%s1 + $0xb8] sm:$0xff]
    %v40 = vld [vmem:[%s1 + $0xc0] sm:$0xff]
    %v41 = vld [vmem:[%s1 + $0xc8] sm:$0xff]
    %v42 = vld [vmem:[%s1 + $0xd0] sm:$0xff]
    %v43 = vld [vmem:[%s1 + $0xd8] sm:$0xff]
    %v44 = vld [vmem:[%s1 + $0xe0] sm:$0xff]
    %v45 = vld [vmem:[%s1 + $0xe8] sm:$0xff]
    %v46 = vld [vmem:[%s1 + $0xf0] sm:$0xff]
    %v47 = vld [vmem:[%s1 + $0xf8] sm:$0xff]
    %v48 = vld [vmem:[%s2] sm:$0x1]
    %v50 = vlaneseq
    %v51 = vshrl.u32 %v50, 7
    %v52 = vsub.s32 0, %v51
    %v53 = vrot.slane %v48, %v52
    %v57 = vunpack.c.l.s4 1983009808
    %v58 = vunpack.c.0.s8 %v57
    %v59 = vlaneseq
    %v60 = vshrl.u32 %v59, 7
    %v61 = vsub.s32 %v58, %v60
    %v62 = vrot.slane %v15, %v61
    %v63 = vcombine.high %v62, %v62
    %66 = vmatprep.subr.mxu0 0.0
    %67 = vmatpush1.msra.mxu0 %v31
    %68 = vmatprep.subr.mxu0 0.0
    %69 = vmatpush1.msra.mxu0 %v30
    %70 = vmatprep.subr.mxu0 0.0
    %71 = vmatpush1.msra.mxu0 %v29
    %72 = vmatprep.subr.mxu0 0.0
    %73 = vmatpush1.msra.mxu0 %v28
    %74 = vmatprep.subr.mxu0 0.0
    %75 = vmatpush1.msra.mxu0 %v27
    %76 = vmatprep.subr.mxu0 0.0
    %77 = vmatpush1.msra.mxu0 %v26
    %78 = vmatprep.subr.mxu0 0.0
    %79 = vmatpush1.msra.mxu0 %v25
    %80 = vmatprep.subr.mxu0 0.0
    %81 = vmatpush1.msra.mxu0 %v24
    %82 = vmatprep.subr.mxu0 0.0
    %83 = vmatpush1.msra.mxu0 %v23
    %84 = vmatprep.subr.mxu0 0.0
    %85 = vmatpush1.msra.mxu0 %v22
    %86 = vmatprep.subr.mxu0 0.0
    %87 = vmatpush1.msra.mxu0 %v21
    %88 = vmatprep.subr.mxu0 0.0
    %89 = vmatpush1.msra.mxu0 %v20
    %90 = vmatprep.subr.mxu0 0.0
    %91 = vmatpush1.msra.mxu0 %v19
    %92 = vmatprep.subr.mxu0 0.0
    %93 = vmatpush1.msra.mxu0 %v18
    %94 = vmatprep.subr.mxu0 0.0
    %95 = vmatpush1.msra.mxu0 %v17
    %96 = vmatprep.subr.mxu0 0.0
    %97 = vmatpush1.msra.mxu0 %v16
    %98 = vmatprep.subr.mxu0 0.0
    %99 = vmatpush2.msra.mxu0 %v47
    %100 = vmatprep.subr.mxu0 0.0
    %101 = vmatpush2.msra.mxu0 %v46
    %102 = vmatprep.subr.mxu0 0.0
    %103 = vmatpush2.msra.mxu0 %v45
    %104 = vmatprep.subr.mxu0 0.0
    %105 = vmatpush2.msra.mxu0 %v44
    %106 = vmatprep.subr.mxu0 0.0
    %107 = vmatpush2.msra.mxu0 %v43
    %108 = vmatprep.subr.mxu0 0.0
    %109 = vmatpush2.msra.mxu0 %v42
    %110 = vmatprep.subr.mxu0 0.0
    %111 = vmatpush2.msra.mxu0 %v41
    %112 = vmatprep.subr.mxu0 0.0
    %113 = vmatpush2.msra.mxu0 %v40
    %114 = vmatprep.subr.mxu0 0.0
    %115 = vmatpush2.msra.mxu0 %v39
    %116 = vmatprep.subr.mxu0 0.0
    %117 = vmatpush2.msra.mxu0 %v38
    %118 = vmatprep.subr.mxu0 0.0
    %119 = vmatpush2.msra.mxu0 %v37
    %120 = vmatprep.subr.mxu0 0.0
    %121 = vmatpush2.msra.mxu0 %v36
    %122 = vmatprep.subr.mxu0 0.0
    %123 = vmatpush2.msra.mxu0 %v35
    %124 = vmatprep.subr.mxu0 0.0
    %125 = vmatpush2.msra.mxu0 %v34
    %126 = vmatprep.subr.mxu0 0.0
    %127 = vmatpush2.msra.mxu0 %v33
    %128 = vmatprep.subr.mxu0 0.0
    %129 = vmatpush2.msra.mxu0 %v32
    %130 = vmatprep.mubr.f32.mxu0 %v63
    %131 = vmatmul.mubr.f32.gmra.mxu0 %v62
    %v132 = vpop.f32.mrf.mxu0
    %v133 = vadd.f32 %v53, %v132
    %v134 = vpop.f32.mrf.mxu0
    %135 = vdwg.mxu0
    %vm136 = vcmask 9216
    %v137 = vsel %vm136, %v133, -inf
    %138 = vmax.xlane.f32.xlu0 %v137
    %v139 = vpop.xlane.xlu0 %138
    %v140 = vsub.f32 %v133, %v139
    %v141 = vmul.f32 %v140, 1.442695
    %v142 = vpow.pop %v141
    %v143 = vsel %vm136, %v142, 0.0
    %144 = vadd.xlane.f32.xlu0 %v143
    %v145 = vpop.xlane.xlu0 %144
    %v146 = vlog2.pop %v145
    %v147 = vmul.f32 %v146, 0.6931472
    %v148 = vadd.f32 %v139, %v147
    %v149 = vsub.f32 %v133, %v148
    %150 = vst.msk [vmem:[#allocation2] sm:$0x3] %vm136, %v149
    // Predicated region
    $region14: #{cnn_score_forward.7} parent=1 // pred_check
      _
    $region15: #{cnn_score_forward.7} parent=1 // pred_check_branch
      %152 = sbr.rel (0) target = $region17
    $region16: #{cnn_score_forward.7} parent=1 // pred_region
      %s154 = ssub.s32 32, 32
      %155 = vsyncadd [#allocation3], %s154
      %s157 = sshll.u32 [#allocation2], 4
      %s158 = int_to_ptr.vmem [resolvable:$true] %s157
      %160 = dma.vmem_to_hbm [thread:$0]  %s158, 32, %s3, [#allocation3]
    $region17: #{cnn_score_forward.7} parent=1 // pred_fallthru
      _
    // Predicated region
    $region18: #{cnn_score_forward.7} parent=1 // pred_check
      _
    $region19: #{cnn_score_forward.7} parent=1 // pred_check_branch
      %162 = sbr.rel (0) target = $region21
    $region20: #{cnn_score_forward.7} parent=1 // pred_region
      %163 = dma.done [#allocation3], 32
    $region21: #{cnn_score_forward.7} parent=1 // pred_fallthru
      _
    %164 = vsyncpa [#allocation3], 1

</llo_original>
